<compile_context>
chip_gen: v5e
topology: v5e:2x2
jax: 0.10.0
libtpu: 0.0.40
codegen_flags: <defaults>
</compile_context>

<pallas_src>
import jax
import jax.numpy as jnp
from jax import lax
from jax.experimental import pallas as pl
from jax.experimental.pallas import tpu as pltpu

_EPS = 1e-5                      # torch.nn.GroupNorm default eps
_INV_SQRT2 = 0.7071067811865476


def _gelu(x):
    # exact erf-based GELU, matching torch.nn.GELU() default
    return 0.5 * x * (1.0 + lax.erf(x * _INV_SQRT2))


def _gn_gelu(y, gamma, beta):
    # GroupNorm(num_groups == num_channels): per-channel stats over the spatial
    # (lane) axis; one-pass sum / sum-of-squares form.
    mean = jnp.mean(y, axis=-1, keepdims=True)
    mean_sq = jnp.mean(y * y, axis=-1, keepdims=True)
    var = mean_sq - mean * mean
    yn = (y - mean) * lax.rsqrt(var + _EPS) * gamma + beta
    return _gelu(yn)


# ------------------------------ fused PFM kernel ------------------------------

def _pfm_kernel(a_ref, b_ref, wpre_ref, gpre_ref, bpre_ref,
                wf_ref, gf_ref, bf_ref, o_ref):
    # a: (N, C0, P)  b: (N, C1, P)  o: (N, Cout, P)  -- whole batch, VMEM-resident.
    # wpre: (2C, 2C) block-diagonal [[w1^T, 0], [0, w2^T]];  wf: (Cout, 2C).
    wpre = wpre_ref[...]
    wf = wf_ref[...]
    gpre, bpre = gpre_ref[...], bpre_ref[...]
    gf, bf = gf_ref[...], bf_ref[...]

    # channel concat of the two inputs: sublane concat, both halves 8-aligned.
    xcat = jnp.concatenate([a_ref[...], b_ref[...]], axis=1)   # (N, C0+C1, P)

    n_batch = xcat.shape[0]
    for n in range(n_batch):        # small static batch -> fully unrolled, no grid
        # pre_conv1 + pre_conv2 fused: one (2C,2C)@(2C,P) MXU matmul
        # (conv bias omitted: cancelled exactly by the GN mean subtraction)
        y = jnp.dot(wpre, xcat[n], preferred_element_type=jnp.float32)
        x12 = _gn_gelu(y, gpre, bpre)                          # == cat([x1, x2], C)
        # forway: (Cout,2C)@(2C,P)
        z = jnp.dot(wf, x12, preferred_element_type=jnp.float32)
        o_ref[n] = _gn_gelu(z, gf, bf).astype(o_ref.dtype)


def pfm_apply(params, a, b):
    """PFM forward.  a: (N,C0,H,W), b: (N,C1,H,W) (NCHW)  ->  (N,C0,H,W)."""
    N, C0, H, W = a.shape
    C1 = b.shape[1]
    P = H * W
    C2 = C0 + C1
    w1 = params["pre1"]["w"]                   # (C0, C0)  (cin, cout)
    w2 = params["pre2"]["w"]                   # (C1, C1)
    wf = params["forway"]["w"]                 # (C0+C1, Cout)
    Cout = wf.shape[1]

    # Pack the two pre_conv weights as one block-diagonal, pre-transposed weight.
    wpreT = jnp.zeros((C2, C2), jnp.float32)
    wpreT = wpreT.at[:C0, :C0].set(w1.T).at[C0:, C0:].set(w2.T)
    wfT = wf.T                                                         # (Cout, 2C)
    gpre = jnp.concatenate([params["pre1"]["g"], params["pre2"]["g"]]).reshape(C2, 1)
    bpre = jnp.concatenate([params["pre1"]["beta"], params["pre2"]["beta"]]).reshape(C2, 1)
    gf = params["forway"]["g"].reshape(Cout, 1)
    bf = params["forway"]["beta"].reshape(Cout, 1)

    vmem = pl.BlockSpec(memory_space=pltpu.MemorySpace.VMEM)
    out = pl.pallas_call(
        _pfm_kernel,
        out_shape=jax.ShapeDtypeStruct((N, Cout, P), jnp.float32),
        in_specs=[vmem] * 8,
        out_specs=vmem,
    )(a.reshape(N, C0, P), b.reshape(N, C1, P),
      wpreT, gpre, bpre, wfT, gf, bf)
    return out.reshape(N, Cout, H, W)


# ------------------------- pure-JAX reference (checks) ------------------------

def _ref_clayer(x, p):
    # x: (N, Cin, H, W);  1x1 conv (with bias) -> GroupNorm(C,C) -> exact GELU
    y = jnp.einsum("cd,nchw->ndhw", p["w"], x) + p["bias"][None, :, None, None]
    mean = jnp.mean(y, axis=(2, 3), keepdims=True)
    var = jnp.mean(jnp.square(y - mean), axis=(2, 3), keepdims=True)
    yn = (y - mean) / jnp.sqrt(var + _EPS)
    yn = yn * p["g"][None, :, None, None] + p["beta"][None, :, None, None]
    return 0.5 * yn * (1.0 + lax.erf(yn * _INV_SQRT2))


def pfm_reference(params, a, b):
    x1 = _ref_clayer(a, params["pre1"])
    x2 = _ref_clayer(b, params["pre2"])
    return _ref_clayer(jnp.concatenate([x1, x2], axis=1), params["forway"])


# ------------------------------- parameter init -------------------------------

def _init_clayer(key, cin, cout):
    kw, kb, kg, kt = jax.random.split(key, 4)
    return {
        "w": 0.05 * jax.random.normal(kw, (cin, cout), jnp.float32),
        "bias": 0.05 * jax.random.normal(kb, (cout,), jnp.float32),  # ref only (no-op before GN)
        "g": 1.0 + 0.1 * jax.random.normal(kg, (cout,), jnp.float32),
        "beta": 0.1 * jax.random.normal(kt, (cout,), jnp.float32),
    }


def init_pfm(key, c0, c1):
    k1, k2, k3 = jax.random.split(key, 3)
    return {
        "pre1": _init_clayer(k1, c0, c0),
        "pre2": _init_clayer(k2, c1, c1),
        "forway": _init_clayer(k3, c0 + c1, c0),
    }


# ------------------------------------ main -------------------------------------

if __name__ == "__main__":
    key = jax.random.PRNGKey(0)
    kp, ka, kb = jax.random.split(key, 3)

    N, H, W = 2, 16, 16
    C0, C1 = 32, 32              # PFM(in_channel=[32, 32]); PyTorch inputs NCHW (2,32,16,16)
    params = init_pfm(kp, C0, C1)
    a = jax.random.normal(ka, (N, C0, H, W), jnp.float32)
    b = jax.random.normal(kb, (N, C1, H, W), jnp.float32)

    out = jax.block_until_ready(jax.jit(pfm_apply)(params, a, b))
    assert out.shape == (N, C0, H, W), out.shape
    assert bool(jnp.all(jnp.isfinite(out)))

    ref = pfm_reference(params, a, b)
    err = float(jnp.max(jnp.abs(out - ref)))
    assert jnp.allclose(out, ref, atol=1e-3, rtol=1e-3), f"max abs err {err}"
    print("KERNEL_OK")
</pallas_src>

<mosaic_0001>
module attributes {stable_mosaic.version = 11 : i64} {
  func.func @_pfm_kernel(%arg0: memref<2x32x256xf32, #tpu.memory_space<vmem>>, %arg1: memref<2x32x256xf32, #tpu.memory_space<vmem>>, %arg2: memref<64x64xf32, #tpu.memory_space<vmem>>, %arg3: memref<64x1xf32, #tpu.memory_space<vmem>>, %arg4: memref<64x1xf32, #tpu.memory_space<vmem>>, %arg5: memref<32x64xf32, #tpu.memory_space<vmem>>, %arg6: memref<32x1xf32, #tpu.memory_space<vmem>>, %arg7: memref<32x1xf32, #tpu.memory_space<vmem>>, %arg8: memref<2x32x256xf32, #tpu.memory_space<vmem>>) attributes {dimension_semantics = [], scalar_prefetch = 0 : i64, scratch_operands = 0 : i64, tpu.core_type = #tpu.core_type<tc>} {
    %c0 = arith.constant 0 : index
    %c0_0 = arith.constant 0 : index
    %0 = vector.load %arg2[%c0, %c0_0] : memref<64x64xf32, #tpu.memory_space<vmem>>, vector<64x64xf32>
    %c0_1 = arith.constant 0 : index
    %c0_2 = arith.constant 0 : index
    %1 = vector.load %arg5[%c0_1, %c0_2] : memref<32x64xf32, #tpu.memory_space<vmem>>, vector<32x64xf32>
    %c0_3 = arith.constant 0 : index
    %c0_4 = arith.constant 0 : index
    %2 = vector.load %arg3[%c0_3, %c0_4] : memref<64x1xf32, #tpu.memory_space<vmem>>, vector<64x1xf32>
    %c0_5 = arith.constant 0 : index
    %c0_6 = arith.constant 0 : index
    %3 = vector.load %arg4[%c0_5, %c0_6] : memref<64x1xf32, #tpu.memory_space<vmem>>, vector<64x1xf32>
    %c0_7 = arith.constant 0 : index
    %c0_8 = arith.constant 0 : index
    %4 = vector.load %arg6[%c0_7, %c0_8] : memref<32x1xf32, #tpu.memory_space<vmem>>, vector<32x1xf32>
    %c0_9 = arith.constant 0 : index
    %c0_10 = arith.constant 0 : index
    %5 = vector.load %arg7[%c0_9, %c0_10] : memref<32x1xf32, #tpu.memory_space<vmem>>, vector<32x1xf32>
    %c0_11 = arith.constant 0 : index
    %c0_12 = arith.constant 0 : index
    %c0_13 = arith.constant 0 : index
    %6 = vector.load %arg0[%c0_11, %c0_12, %c0_13] : memref<2x32x256xf32, #tpu.memory_space<vmem>>, vector<2x32x256xf32>
    %c0_14 = arith.constant 0 : index
    %c0_15 = arith.constant 0 : index
    %c0_16 = arith.constant 0 : index
    %7 = vector.load %arg1[%c0_14, %c0_15, %c0_16] : memref<2x32x256xf32, #tpu.memory_space<vmem>>, vector<2x32x256xf32>
    %8 = tpu.concatenate %6, %7 in 1 : vector<2x32x256xf32>, vector<2x32x256xf32> -> vector<2x64x256xf32>
    %9 = vector.extract_strided_slice %8 {offsets = [0, 0, 0], sizes = [1, 64, 256], strides = [1, 1, 1]} : vector<2x64x256xf32> to vector<1x64x256xf32>
    %10 = vector.shape_cast %9 : vector<1x64x256xf32> to vector<64x256xf32>
    %cst = arith.constant dense<0.000000e+00> : vector<64x256xf32>
    %11 = tpu.matmul %0, %10, %cst {dimension_numbers = #tpu.dot_dimension_numbers<[1], [0], [0], [1], [0, 0, 1, 1], [], []>} : vector<64x64xf32>, vector<64x256xf32>, vector<64x256xf32> -> vector<64x256xf32>
    %cst_17 = arith.constant dense<0.000000e+00> : vector<64xf32>
    %12 = vector.multi_reduction <add>, %11, %cst_17 [1] : vector<64x256xf32> to vector<64xf32>
    %13 = vector.shape_cast %12 : vector<64xf32> to vector<64x1xf32>
    %cst_18 = arith.constant 2.560000e+02 : f32
    %14 = vector.broadcast %cst_18 : f32 to vector<64x1xf32>
    %15 = arith.divf %13, %14 : vector<64x1xf32>
    %16 = arith.mulf %11, %11 : vector<64x256xf32>
    %cst_19 = arith.constant dense<0.000000e+00> : vector<64xf32>
    %17 = vector.multi_reduction <add>, %16, %cst_19 [1] : vector<64x256xf32> to vector<64xf32>
    %18 = vector.shape_cast %17 : vector<64xf32> to vector<64x1xf32>
    %cst_20 = arith.constant 2.560000e+02 : f32
    %19 = vector.broadcast %cst_20 : f32 to vector<64x1xf32>
    %20 = arith.divf %18, %19 : vector<64x1xf32>
    %21 = arith.mulf %15, %15 : vector<64x1xf32>
    %22 = arith.subf %20, %21 : vector<64x1xf32>
    %23 = vector.broadcast %15 : vector<64x1xf32> to vector<64x256xf32>
    %24 = arith.subf %11, %23 : vector<64x256xf32>
    %cst_21 = arith.constant 9.99999974E-6 : f32
    %25 = vector.broadcast %cst_21 : f32 to vector<64x1xf32>
    %26 = arith.addf %22, %25 : vector<64x1xf32>
    %27 = math.rsqrt %26 : vector<64x1xf32>
    %28 = vector.broadcast %27 : vector<64x1xf32> to vector<64x256xf32>
    %29 = arith.mulf %24, %28 : vector<64x256xf32>
    %30 = vector.broadcast %2 : vector<64x1xf32> to vector<64x256xf32>
    %31 = arith.mulf %29, %30 : vector<64x256xf32>
    %32 = vector.broadcast %3 : vector<64x1xf32> to vector<64x256xf32>
    %33 = arith.addf %31, %32 : vector<64x256xf32>
    %cst_22 = arith.constant 5.000000e-01 : f32
    %34 = vector.broadcast %cst_22 : f32 to vector<64x256xf32>
    %35 = arith.mulf %34, %33 : vector<64x256xf32>
    %cst_23 = arith.constant 0.707106769 : f32
    %36 = vector.broadcast %cst_23 : f32 to vector<64x256xf32>
    %37 = arith.mulf %33, %36 : vector<64x256xf32>
    %38 = math.erf %37 : vector<64x256xf32>
    %cst_24 = arith.constant 1.000000e+00 : f32
    %39 = vector.broadcast %cst_24 : f32 to vector<64x256xf32>
    %40 = arith.addf %39, %38 : vector<64x256xf32>
    %41 = arith.mulf %35, %40 : vector<64x256xf32>
    %cst_25 = arith.constant dense<0.000000e+00> : vector<32x256xf32>
    %42 = tpu.matmul %1, %41, %cst_25 {dimension_numbers = #tpu.dot_dimension_numbers<[1], [0], [0], [1], [0, 0, 1, 1], [], []>} : vector<32x64xf32>, vector<64x256xf32>, vector<32x256xf32> -> vector<32x256xf32>
    %cst_26 = arith.constant dense<0.000000e+00> : vector<32xf32>
    %43 = vector.multi_reduction <add>, %42, %cst_26 [1] : vector<32x256xf32> to vector<32xf32>
    %44 = vector.shape_cast %43 : vector<32xf32> to vector<32x1xf32>
    %cst_27 = arith.constant 2.560000e+02 : f32
    %45 = vector.broadcast %cst_27 : f32 to vector<32x1xf32>
    %46 = arith.divf %44, %45 : vector<32x1xf32>
    %47 = arith.mulf %42, %42 : vector<32x256xf32>
    %cst_28 = arith.constant dense<0.000000e+00> : vector<32xf32>
    %48 = vector.multi_reduction <add>, %47, %cst_28 [1] : vector<32x256xf32> to vector<32xf32>
    %49 = vector.shape_cast %48 : vector<32xf32> to vector<32x1xf32>
    %cst_29 = arith.constant 2.560000e+02 : f32
    %50 = vector.broadcast %cst_29 : f32 to vector<32x1xf32>
    %51 = arith.divf %49, %50 : vector<32x1xf32>
    %52 = arith.mulf %46, %46 : vector<32x1xf32>
    %53 = arith.subf %51, %52 : vector<32x1xf32>
    %54 = vector.broadcast %46 : vector<32x1xf32> to vector<32x256xf32>
    %55 = arith.subf %42, %54 : vector<32x256xf32>
    %cst_30 = arith.constant 9.99999974E-6 : f32
    %56 = vector.broadcast %cst_30 : f32 to vector<32x1xf32>
    %57 = arith.addf %53, %56 : vector<32x1xf32>
    %58 = math.rsqrt %57 : vector<32x1xf32>
    %59 = vector.broadcast %58 : vector<32x1xf32> to vector<32x256xf32>
    %60 = arith.mulf %55, %59 : vector<32x256xf32>
    %61 = vector.broadcast %4 : vector<32x1xf32> to vector<32x256xf32>
    %62 = arith.mulf %60, %61 : vector<32x256xf32>
    %63 = vector.broadcast %5 : vector<32x1xf32> to vector<32x256xf32>
    %64 = arith.addf %62, %63 : vector<32x256xf32>
    %cst_31 = arith.constant 5.000000e-01 : f32
    %65 = vector.broadcast %cst_31 : f32 to vector<32x256xf32>
    %66 = arith.mulf %65, %64 : vector<32x256xf32>
    %cst_32 = arith.constant 0.707106769 : f32
    %67 = vector.broadcast %cst_32 : f32 to vector<32x256xf32>
    %68 = arith.mulf %64, %67 : vector<32x256xf32>
    %69 = math.erf %68 : vector<32x256xf32>
    %cst_33 = arith.constant 1.000000e+00 : f32
    %70 = vector.broadcast %cst_33 : f32 to vector<32x256xf32>
    %71 = arith.addf %70, %69 : vector<32x256xf32>
    %72 = arith.mulf %66, %71 : vector<32x256xf32>
    %c0_34 = arith.constant 0 : index
    %c0_35 = arith.constant 0 : index
    %c0_36 = arith.constant 0 : index
    %73 = vector.load %arg8[%c0_34, %c0_35, %c0_36] : memref<2x32x256xf32, #tpu.memory_space<vmem>>, vector<1x32x256xf32>
    %74 = vector.shape_cast %73 : vector<1x32x256xf32> to vector<32x256xf32>
    %75 = vector.shape_cast %72 : vector<32x256xf32> to vector<1x32x256xf32>
    tpu.vector_store %arg8[%c0_34, %c0_35, %c0_36], %75 {strides = array<i32>} : memref<2x32x256xf32, #tpu.memory_space<vmem>>, vector<1x32x256xf32>,
    %76 = vector.extract_strided_slice %8 {offsets = [1, 0, 0], sizes = [1, 64, 256], strides = [1, 1, 1]} : vector<2x64x256xf32> to vector<1x64x256xf32>
    %77 = vector.shape_cast %76 : vector<1x64x256xf32> to vector<64x256xf32>
    %cst_37 = arith.constant dense<0.000000e+00> : vector<64x256xf32>
    %78 = tpu.matmul %0, %77, %cst_37 {dimension_numbers = #tpu.dot_dimension_numbers<[1], [0], [0], [1], [0, 0, 1, 1], [], []>} : vector<64x64xf32>, vector<64x256xf32>, vector<64x256xf32> -> vector<64x256xf32>
    %cst_38 = arith.constant dense<0.000000e+00> : vector<64xf32>
    %79 = vector.multi_reduction <add>, %78, %cst_38 [1] : vector<64x256xf32> to vector<64xf32>
    %80 = vector.shape_cast %79 : vector<64xf32> to vector<64x1xf32>
    %cst_39 = arith.constant 2.560000e+02 : f32
    %81 = vector.broadcast %cst_39 : f32 to vector<64x1xf32>
    %82 = arith.divf %80, %81 : vector<64x1xf32>
    %83 = arith.mulf %78, %78 : vector<64x256xf32>
    %cst_40 = arith.constant dense<0.000000e+00> : vector<64xf32>
    %84 = vector.multi_reduction <add>, %83, %cst_40 [1] : vector<64x256xf32> to vector<64xf32>
    %85 = vector.shape_cast %84 : vector<64xf32> to vector<64x1xf32>
    %cst_41 = arith.constant 2.560000e+02 : f32
    %86 = vector.broadcast %cst_41 : f32 to vector<64x1xf32>
    %87 = arith.divf %85, %86 : vector<64x1xf32>
    %88 = arith.mulf %82, %82 : vector<64x1xf32>
    %89 = arith.subf %87, %88 : vector<64x1xf32>
    %90 = vector.broadcast %82 : vector<64x1xf32> to vector<64x256xf32>
    %91 = arith.subf %78, %90 : vector<64x256xf32>
    %cst_42 = arith.constant 9.99999974E-6 : f32
    %92 = vector.broadcast %cst_42 : f32 to vector<64x1xf32>
    %93 = arith.addf %89, %92 : vector<64x1xf32>
    %94 = math.rsqrt %93 : vector<64x1xf32>
    %95 = vector.broadcast %94 : vector<64x1xf32> to vector<64x256xf32>
    %96 = arith.mulf %91, %95 : vector<64x256xf32>
    %97 = vector.broadcast %2 : vector<64x1xf32> to vector<64x256xf32>
    %98 = arith.mulf %96, %97 : vector<64x256xf32>
    %99 = vector.broadcast %3 : vector<64x1xf32> to vector<64x256xf32>
    %100 = arith.addf %98, %99 : vector<64x256xf32>
    %cst_43 = arith.constant 5.000000e-01 : f32
    %101 = vector.broadcast %cst_43 : f32 to vector<64x256xf32>
    %102 = arith.mulf %101, %100 : vector<64x256xf32>
    %cst_44 = arith.constant 0.707106769 : f32
    %103 = vector.broadcast %cst_44 : f32 to vector<64x256xf32>
    %104 = arith.mulf %100, %103 : vector<64x256xf32>
    %105 = math.erf %104 : vector<64x256xf32>
    %cst_45 = arith.constant 1.000000e+00 : f32
    %106 = vector.broadcast %cst_45 : f32 to vector<64x256xf32>
    %107 = arith.addf %106, %105 : vector<64x256xf32>
    %108 = arith.mulf %102, %107 : vector<64x256xf32>
    %cst_46 = arith.constant dense<0.000000e+00> : vector<32x256xf32>
    %109 = tpu.matmul %1, %108, %cst_46 {dimension_numbers = #tpu.dot_dimension_numbers<[1], [0], [0], [1], [0, 0, 1, 1], [], []>} : vector<32x64xf32>, vector<64x256xf32>, vector<32x256xf32> -> vector<32x256xf32>
    %cst_47 = arith.constant dense<0.000000e+00> : vector<32xf32>
    %110 = vector.multi_reduction <add>, %109, %cst_47 [1] : vector<32x256xf32> to vector<32xf32>
    %111 = vector.shape_cast %110 : vector<32xf32> to vector<32x1xf32>
    %cst_48 = arith.constant 2.560000e+02 : f32
    %112 = vector.broadcast %cst_48 : f32 to vector<32x1xf32>
    %113 = arith.divf %111, %112 : vector<32x1xf32>
    %114 = arith.mulf %109, %109 : vector<32x256xf32>
    %cst_49 = arith.constant dense<0.000000e+00> : vector<32xf32>
    %115 = vector.multi_reduction <add>, %114, %cst_49 [1] : vector<32x256xf32> to vector<32xf32>
    %116 = vector.shape_cast %115 : vector<32xf32> to vector<32x1xf32>
    %cst_50 = arith.constant 2.560000e+02 : f32
    %117 = vector.broadcast %cst_50 : f32 to vector<32x1xf32>
    %118 = arith.divf %116, %117 : vector<32x1xf32>
    %119 = arith.mulf %113, %113 : vector<32x1xf32>
    %120 = arith.subf %118, %119 : vector<32x1xf32>
    %121 = vector.broadcast %113 : vector<32x1xf32> to vector<32x256xf32>
    %122 = arith.subf %109, %121 : vector<32x256xf32>
    %cst_51 = arith.constant 9.99999974E-6 : f32
    %123 = vector.broadcast %cst_51 : f32 to vector<32x1xf32>
    %124 = arith.addf %120, %123 : vector<32x1xf32>
    %125 = math.rsqrt %124 : vector<32x1xf32>
    %126 = vector.broadcast %125 : vector<32x1xf32> to vector<32x256xf32>
    %127 = arith.mulf %122, %126 : vector<32x256xf32>
    %128 = vector.broadcast %4 : vector<32x1xf32> to vector<32x256xf32>
    %129 = arith.mulf %127, %128 : vector<32x256xf32>
    %130 = vector.broadcast %5 : vector<32x1xf32> to vector<32x256xf32>
    %131 = arith.addf %129, %130 : vector<32x256xf32>
    %cst_52 = arith.constant 5.000000e-01 : f32
    %132 = vector.broadcast %cst_52 : f32 to vector<32x256xf32>
    %133 = arith.mulf %132, %131 : vector<32x256xf32>
    %cst_53 = arith.constant 0.707106769 : f32
    %134 = vector.broadcast %cst_53 : f32 to vector<32x256xf32>
    %135 = arith.mulf %131, %134 : vector<32x256xf32>
    %136 = math.erf %135 : vector<32x256xf32>
    %cst_54 = arith.constant 1.000000e+00 : f32
    %137 = vector.broadcast %cst_54 : f32 to vector<32x256xf32>
    %138 = arith.addf %137, %136 : vector<32x256xf32>
    %139 = arith.mulf %133, %138 : vector<32x256xf32>
    %c1 = arith.constant 1 : index
    %c0_55 = arith.constant 0 : index
    %c0_56 = arith.constant 0 : index
    %140 = vector.load %arg8[%c1, %c0_55, %c0_56] : memref<2x32x256xf32, #tpu.memory_space<vmem>>, vector<1x32x256xf32>
    %141 = vector.shape_cast %140 : vector<1x32x256xf32> to vector<32x256xf32>
    %142 = vector.shape_cast %139 : vector<32x256xf32> to vector<1x32x256xf32>
    tpu.vector_store %arg8[%c1, %c0_55, %c0_56], %142 {strides = array<i32>} : memref<2x32x256xf32, #tpu.memory_space<vmem>>, vector<1x32x256xf32>,
    return
  }
}

</mosaic_0001>

<llo_original>
// kernel: pfm_apply.1
$region0: #{pfm_apply.1}
  #allocation0 [shape = 'u32[]', space=smem, size = 0x4, offset = 0x4, fixed_abs, tag = 'smem constant byte address 0x4 - core index']
  #allocation1 [shape = 'u32[72,128]{1,0:T(1,128)}', space=vmem, size = 0x9000, scoped, tag = 'internal scratch']
  %s0 = inlined_call_operand.vmem [shape: f32[2,32,256], index: 0, kind: input, shape index: {}]
  %s1 = inlined_call_operand.vmem [shape: f32[2,32,256], index: 1, kind: input, shape index: {}]
  %s2 = inlined_call_operand.vmem [shape: f32[64,64], index: 2, kind: input, shape index: {}]
  %s3 = inlined_call_operand.vmem [shape: f32[64,1], index: 3, kind: input, shape index: {}]
  %s4 = inlined_call_operand.vmem [shape: f32[64,1], index: 4, kind: input, shape index: {}]
  %s5 = inlined_call_operand.vmem [shape: f32[32,64], index: 5, kind: input, shape index: {}]
  %s6 = inlined_call_operand.vmem [shape: f32[32,1], index: 6, kind: input, shape index: {}]
  %s7 = inlined_call_operand.vmem [shape: f32[32,1], index: 7, kind: input, shape index: {}]
  %s8 = inlined_call_operand.vmem [shape: f32[2,32,256], index: 8, kind: output, shape index: {}]
  %s9 = sld [smem:[#allocation0]]
  $region42: #{pfm_apply.1} parent=0
    _
  %s11 = ssub.s32 1, %s9
  %s12 = scalar_select 0, %s11, %s9
  // Predicated region
  $region2: #{pfm_apply.1} parent=0 // pred_check
    _
  $region3: #{pfm_apply.1} parent=0 // pred_check_branch
    %14 = sbr.rel (0) target = $region5
  $region4: #{pfm_apply.1} parent=0 // pred_region
    _
  $region5: #{pfm_apply.1} parent=0 // pred_fallthru
    _
  // Predicated region
  $region6: #{pfm_apply.1} parent=0 // pred_check
    _
  $region7: #{pfm_apply.1} parent=0 // pred_check_branch
    %16 = sbr.rel (0) target = $region9
  $region8: #{pfm_apply.1} parent=0 // pred_region
    _
  $region9: #{pfm_apply.1} parent=0 // pred_fallthru
    _
  // Predicated region
  $region10: #{pfm_apply.1} parent=0 // pred_check
    _
  $region11: #{pfm_apply.1} parent=0 // pred_check_branch
    %18 = sbr.rel (0) target = $region13
  $region12: #{pfm_apply.1} parent=0 // pred_region
    _
  $region13: #{pfm_apply.1} parent=0 // pred_fallthru
    _
  // Predicated region
  $region14: #{pfm_apply.1} parent=0 // pred_check
    _
  $region15: #{pfm_apply.1} parent=0 // pred_check_branch
    %20 = sbr.rel (0) target = $region17
  $region16: #{pfm_apply.1} parent=0 // pred_region
    _
  $region17: #{pfm_apply.1} parent=0 // pred_fallthru
    _
  // Predicated region
  $region18: #{pfm_apply.1} parent=0 // pred_check
    _
  $region19: #{pfm_apply.1} parent=0 // pred_check_branch
    %22 = sbr.rel (0) target = $region21
  $region20: #{pfm_apply.1} parent=0 // pred_region
    _
  $region21: #{pfm_apply.1} parent=0 // pred_fallthru
    _
  // Predicated region
  $region22: #{pfm_apply.1} parent=0 // pred_check
    _
  $region23: #{pfm_apply.1} parent=0 // pred_check_branch
    %24 = sbr.rel (0) target = $region25
  $region24: #{pfm_apply.1} parent=0 // pred_region
    _
  $region25: #{pfm_apply.1} parent=0 // pred_fallthru
    _
  // Predicated region
  $region26: #{pfm_apply.1} parent=0 // pred_check
    _
  $region27: #{pfm_apply.1} parent=0 // pred_check_branch
    %26 = sbr.rel (0) target = $region29
  $region28: #{pfm_apply.1} parent=0 // pred_region
    _
  $region29: #{pfm_apply.1} parent=0 // pred_fallthru
    _
  // Predicated region
  $region30: #{pfm_apply.1} parent=0 // pred_check
    _
  $region31: #{pfm_apply.1} parent=0 // pred_check_branch
    %28 = sbr.rel (0) target = $region33
  $region32: #{pfm_apply.1} parent=0 // pred_region
    _
  $region33: #{pfm_apply.1} parent=0 // pred_fallthru
    _
  %v29 = vld [vmem:[%s2] sm:$0xff]
  %v30 = vld [vmem:[%s2 + $0x8] sm:$0xff]
  %v31 = vld [vmem:[%s2 + $0x10] sm:$0xff]
  %v32 = vld [vmem:[%s2 + $0x18] sm:$0xff]
  %v33 = vld [vmem:[%s2 + $0x20] sm:$0xff]
  %v34 = vld [vmem:[%s2 + $0x28] sm:$0xff]
  %v35 = vld [vmem:[%s2 + $0x30] sm:$0xff]
  %v36 = vld [vmem:[%s2 + $0x38] sm:$0xff]
  %v37 = vld [vmem:[%s5] sm:$0xff]
  %v38 = vld [vmem:[%s5 + $0x8] sm:$0xff]
  %v39 = vld [vmem:[%s5 + $0x10] sm:$0xff]
  %v40 = vld [vmem:[%s5 + $0x18] sm:$0xff]
  %v41 = vld [vmem:[%s3] sm:$0xff]
  %v42 = vld [vmem:[%s3 + $0x8] sm:$0xff]
  %v43 = vld [vmem:[%s3 + $0x10] sm:$0xff]
  %v44 = vld [vmem:[%s3 + $0x18] sm:$0xff]
  %v45 = vld [vmem:[%s3 + $0x20] sm:$0xff]
  %v46 = vld [vmem:[%s3 + $0x28] sm:$0xff]
  %v47 = vld [vmem:[%s3 + $0x30] sm:$0xff]
  %v48 = vld [vmem:[%s3 + $0x38] sm:$0xff]
  %v49 = vld [vmem:[%s4] sm:$0xff]
  %v50 = vld [vmem:[%s4 + $0x8] sm:$0xff]
  %v51 = vld [vmem:[%s4 + $0x10] sm:$0xff]
  %v52 = vld [vmem:[%s4 + $0x18] sm:$0xff]
  %v53 = vld [vmem:[%s4 + $0x20] sm:$0xff]
  %v54 = vld [vmem:[%s4 + $0x28] sm:$0xff]
  %v55 = vld [vmem:[%s4 + $0x30] sm:$0xff]
  %v56 = vld [vmem:[%s4 + $0x38] sm:$0xff]
  %v57 = vld [vmem:[%s6] sm:$0xff]
  %v58 = vld [vmem:[%s6 + $0x8] sm:$0xff]
  %v59 = vld [vmem:[%s6 + $0x10] sm:$0xff]
  %v60 = vld [vmem:[%s6 + $0x18] sm:$0xff]
  %v61 = vld [vmem:[%s7] sm:$0xff]
  %v62 = vld [vmem:[%s7 + $0x8] sm:$0xff]
  %v63 = vld [vmem:[%s7 + $0x10] sm:$0xff]
  %v64 = vld [vmem:[%s7 + $0x18] sm:$0xff]
  %v65 = vld [vmem:[%s0] sm:$0xff]
  %v66 = vld [vmem:[%s0 + $0x8] sm:$0xff]
  %v67 = vld [vmem:[%s0 + $0x10] sm:$0xff]
  %v68 = vld [vmem:[%s0 + $0x18] sm:$0xff]
  %v69 = vld [vmem:[%s0 + $0x20] sm:$0xff]
  %v70 = vld [vmem:[%s0 + $0x28] sm:$0xff]
  %v71 = vld [vmem:[%s0 + $0x30] sm:$0xff]
  %v72 = vld [vmem:[%s0 + $0x38] sm:$0xff]
  %v73 = vld [vmem:[%s0 + $0x40] sm:$0xff]
  %v74 = vld [vmem:[%s0 + $0x48] sm:$0xff]
  %v75 = vld [vmem:[%s0 + $0x50] sm:$0xff]
  %v76 = vld [vmem:[%s0 + $0x58] sm:$0xff]
  %v77 = vld [vmem:[%s0 + $0x60] sm:$0xff]
  %v78 = vld [vmem:[%s0 + $0x68] sm:$0xff]
  %v79 = vld [vmem:[%s0 + $0x70] sm:$0xff]
  %v80 = vld [vmem:[%s0 + $0x78] sm:$0xff]
  %v81 = vld [vmem:[%s1] sm:$0xff]
  %v82 = vld [vmem:[%s1 + $0x8] sm:$0xff]
  %v83 = vld [vmem:[%s1 + $0x10] sm:$0xff]
  %v84 = vld [vmem:[%s1 + $0x18] sm:$0xff]
  %v85 = vld [vmem:[%s1 + $0x20] sm:$0xff]
  %v86 = vld [vmem:[%s1 + $0x28] sm:$0xff]
  %v87 = vld [vmem:[%s1 + $0x30] sm:$0xff]
  %v88 = vld [vmem:[%s1 + $0x38] sm:$0xff]
  %v89 = vld [vmem:[%s1 + $0x40] sm:$0xff]
  %v90 = vld [vmem:[%s1 + $0x48] sm:$0xff]
  %v91 = vld [vmem:[%s1 + $0x50] sm:$0xff]
  %v92 = vld [vmem:[%s1 + $0x58] sm:$0xff]
  %v93 = vld [vmem:[%s1 + $0x60] sm:$0xff]
  %v94 = vld [vmem:[%s1 + $0x68] sm:$0xff]
  %v95 = vld [vmem:[%s1 + $0x70] sm:$0xff]
  %v96 = vld [vmem:[%s1 + $0x78] sm:$0xff]
  %vm97 = vcmask 523264
  %v99 = vsel %vm97, %v29, 0
  %v102 = vsel %vm97, %v30, 0
  %v105 = vsel %vm97, %v31, 0
  %v108 = vsel %vm97, %v32, 0
  %v111 = vsel %vm97, %v33, 0
  %v114 = vsel %vm97, %v34, 0
  %v117 = vsel %vm97, %v35, 0
  %v120 = vsel %vm97, %v36, 0
  %122 = vmatpush.msra.mxu0 0.0
  %123 = vmatpush.msra.mxu0 0.0
  %124 = vmatpush.msra.mxu0 0.0
  %125 = vmatpush.msra.mxu0 0.0
  %126 = vmatpush.msra.mxu0 0.0
  %127 = vmatpush.msra.mxu0 0.0
  %128 = vmatpush.msra.mxu0 0.0
  %129 = vmatpush.msra.mxu0 0.0
  %130 = vmatpush.msra.mxu0 %v87
  %131 = vmatpush.msra.mxu0 %v85
  %132 = vmatpush.msra.mxu0 %v83
  %133 = vmatpush.msra.mxu0 %v81
  %134 = vmatpush.msra.mxu0 %v71
  %135 = vmatpush.msra.mxu0 %v69
  %136 = vmatpush.msra.mxu0 %v67
  %137 = vmatpush.msra.mxu0 %v65
  %138 = vmatmul.f32.gmra.mxu0 %v99
  %v139 = vpop.f32.mrf.mxu0
  %v140 = vadd.f32 0.0, %v139
  %141 = vmatmul.f32.gmra.mxu0 %v102
  %v142 = vpop.f32.mrf.mxu0
  %v143 = vadd.f32 0.0, %v142
  %144 = vmatmul.f32.gmra.mxu0 %v105
  %v145 = vpop.f32.mrf.mxu0
  %v146 = vadd.f32 0.0, %v145
  %147 = vmatmul.f32.gmra.mxu0 %v108
  %v148 = vpop.f32.mrf.mxu0
  %v149 = vadd.f32 0.0, %v148
  %150 = vmatmul.f32.gmra.mxu0 %v111
  %v151 = vpop.f32.mrf.mxu0
  %v152 = vadd.f32 0.0, %v151
  %153 = vmatmul.f32.gmra.mxu0 %v114
  %v154 = vpop.f32.mrf.mxu0
  %v155 = vadd.f32 0.0, %v154
  %156 = vmatmul.f32.gmra.mxu0 %v117
  %v157 = vpop.f32.mrf.mxu0
  %v158 = vadd.f32 0.0, %v157
  %159 = vmatmul.f32.gmra.mxu0 %v120
  %v160 = vpop.f32.mrf.mxu0
  %v161 = vadd.f32 0.0, %v160
  %162 = vdwg.mxu0
  %163 = vmatpush.msra.mxu0 0.0
  %164 = vmatpush.msra.mxu0 0.0
  %165 = vmatpush.msra.mxu0 0.0
  %166 = vmatpush.msra.mxu0 0.0
  %167 = vmatpush.msra.mxu0 0.0
  %168 = vmatpush.msra.mxu0 0.0
  %169 = vmatpush.msra.mxu0 0.0
  %170 = vmatpush.msra.mxu0 0.0
  %171 = vmatpush.msra.mxu0 %v88
  %172 = vmatpush.msra.mxu0 %v86
  %173 = vmatpush.msra.mxu0 %v84
  %174 = vmatpush.msra.mxu0 %v82
  %175 = vmatpush.msra.mxu0 %v72
  %176 = vmatpush.msra.mxu0 %v70
  %177 = vmatpush.msra.mxu0 %v68
  %178 = vmatpush.msra.mxu0 %v66
  %179 = vmatmul.f32.gmra.mxu0 %v99
  %v180 = vpop.f32.mrf.mxu0
  %v181 = vadd.f32 0.0, %v180
  %182 = vmatmul.f32.gmra.mxu0 %v102
  %v183 = vpop.f32.mrf.mxu0
  %v184 = vadd.f32 0.0, %v183
  %185 = vmatmul.f32.gmra.mxu0 %v105
  %v186 = vpop.f32.mrf.mxu0
  %v187 = vadd.f32 0.0, %v186
  %188 = vmatmul.f32.gmra.mxu0 %v108
  %v189 = vpop.f32.mrf.mxu0
  %v190 = vadd.f32 0.0, %v189
  %191 = vmatmul.f32.gmra.mxu0 %v111
  %v192 = vpop.f32.mrf.mxu0
  %v193 = vadd.f32 0.0, %v192
  %194 = vmatmul.f32.gmra.mxu0 %v114
  %v195 = vpop.f32.mrf.mxu0
  %v196 = vadd.f32 0.0, %v195
  %197 = vmatmul.f32.gmra.mxu0 %v117
  %v198 = vpop.f32.mrf.mxu0
  %v199 = vadd.f32 0.0, %v198
  %200 = vmatmul.f32.gmra.mxu0 %v120
  %v201 = vpop.f32.mrf.mxu0
  %v202 = vadd.f32 0.0, %v201
  %203 = vdwg.mxu0
  %v204 = vadd.f32 %v140, %v181
  %205 = vadd.xlane.f32.xlu0 %v204
  %v206 = vpop.xlane.xlu0 %205
  %v207 = vadd.f32 %v143, %v184
  %208 = vadd.xlane.f32.xlu0 %v207
  %v209 = vpop.xlane.xlu0 %208
  %v210 = vadd.f32 %v146, %v187
  %211 = vadd.xlane.f32.xlu0 %v210
  %v212 = vpop.xlane.xlu0 %211
  %v213 = vadd.f32 %v149, %v190
  %214 = vadd.xlane.f32.xlu0 %v213
  %v215 = vpop.xlane.xlu0 %214
  %v216 = vadd.f32 %v152, %v193
  %217 = vadd.xlane.f32.xlu0 %v216
  %v218 = vpop.xlane.xlu0 %217
  %v219 = vadd.f32 %v155, %v196
  %220 = vadd.xlane.f32.xlu0 %v219
  %v221 = vpop.xlane.xlu0 %220
  %v222 = vadd.f32 %v158, %v199
  %223 = vadd.xlane.f32.xlu0 %v222
  %v224 = vpop.xlane.xlu0 %223
  %v225 = vadd.f32 %v161, %v202
  %226 = vadd.xlane.f32.xlu0 %v225
  %v227 = vpop.xlane.xlu0 %226
  %v228 = vrcp.pop 256.0
  %v229 = vmul.f32 256.0, %v228
  %v230 = vsub.f32 1.0, %v229
  %v231 = vmul.f32 %v228, %v230
  %v232 = vadd.f32 %v228, %v231
  %vm233 = vweird.f32 %v228
  %v234 = vsel %vm233, %v228, %v232
  %v235 = vmul.f32 %v206, %v234
  %v236 = vmul.f32 %v209, %v234
  %v237 = vmul.f32 %v212, %v234
  %v238 = vmul.f32 %v215, %v234
  %v239 = vmul.f32 %v218, %v234
  %v240 = vmul.f32 %v221, %v234
  %v241 = vmul.f32 %v224, %v234
  %v242 = vmul.f32 %v227, %v234
  %v243 = vmul.f32 %v140, %v140
  %v244 = vmul.f32 %v181, %v181
  %v245 = vmul.f32 %v143, %v143
  %v246 = vmul.f32 %v184, %v184
  %v247 = vmul.f32 %v146, %v146
  %v248 = vmul.f32 %v187, %v187
  %v249 = vmul.f32 %v149, %v149
  %v250 = vmul.f32 %v190, %v190
  %v251 = vmul.f32 %v152, %v152
  %v252 = vmul.f32 %v193, %v193
  %v253 = vmul.f32 %v155, %v155
  %v254 = vmul.f32 %v196, %v196
  %v255 = vmul.f32 %v158, %v158
  %v256 = vmul.f32 %v199, %v199
  %v257 = vmul.f32 %v161, %v161
  %v258 = vmul.f32 %v202, %v202
  %v259 = vadd.f32 %v243, %v244
  %260 = vadd.xlane.f32.xlu0 %v259
  %v261 = vpop.xlane.xlu0 %260
  %v262 = vadd.f32 %v245, %v246
  %263 = vadd.xlane.f32.xlu0 %v262
  %v264 = vpop.xlane.xlu0 %263
  %v265 = vadd.f32 %v247, %v248
  %266 = vadd.xlane.f32.xlu0 %v265
  %v267 = vpop.xlane.xlu0 %266
  %v268 = vadd.f32 %v249, %v250
  %269 = vadd.xlane.f32.xlu0 %v268
  %v270 = vpop.xlane.xlu0 %269
  %v271 = vadd.f32 %v251, %v252
  %272 = vadd.xlane.f32.xlu0 %v271
  %v273 = vpop.xlane.xlu0 %272
  %v274 = vadd.f32 %v253, %v254
  %275 = vadd.xlane.f32.xlu0 %v274
  %v276 = vpop.xlane.xlu0 %275
  %v277 = vadd.f32 %v255, %v256
  %278 = vadd.xlane.f32.xlu0 %v277
  %v279 = vpop.xlane.xlu0 %278
  %v280 = vadd.f32 %v257, %v258
  %281 = vadd.xlane.f32.xlu0 %v280
  %v282 = vpop.xlane.xlu0 %281
  %v283 = vmul.f32 %v261, %v234
  %v284 = vmul.f32 %v264, %v234
  %v285 = vmul.f32 %v267, %v234
  %v286 = vmul.f32 %v270, %v234
  %v287 = vmul.f32 %v273, %v234
  %v288 = vmul.f32 %v276, %v234
  %v289 = vmul.f32 %v279, %v234
  %v290 = vmul.f32 %v282, %v234
  %v291 = vmul.f32 %v235, %v235
  %v292 = vmul.f32 %v236, %v236
  %v293 = vmul.f32 %v237, %v237
  %v294 = vmul.f32 %v238, %v238
  %v295 = vmul.f32 %v239, %v239
  %v296 = vmul.f32 %v240, %v240
  %v297 = vmul.f32 %v241, %v241
  %v298 = vmul.f32 %v242, %v242
  %v299 = vsub.f32 %v283, %v291
  %v300 = vsub.f32 %v284, %v292
  %v301 = vsub.f32 %v285, %v293
  %v302 = vsub.f32 %v286, %v294
  %v303 = vsub.f32 %v287, %v295
  %v304 = vsub.f32 %v288, %v296
  %v305 = vsub.f32 %v289, %v297
  %v306 = vsub.f32 %v290, %v298
  %v307 = vsub.f32 %v140, %v235
  %v308 = vsub.f32 %v181, %v235
  %v309 = vsub.f32 %v143, %v236
  %v310 = vsub.f32 %v184, %v236
  %v311 = vsub.f32 %v146, %v237
  %v312 = vsub.f32 %v187, %v237
  %v313 = vsub.f32 %v149, %v238
  %v314 = vsub.f32 %v190, %v238
  %v315 = vsub.f32 %v152, %v239
  %v316 = vsub.f32 %v193, %v239
  %v317 = vsub.f32 %v155, %v240
  %v318 = vsub.f32 %v196, %v240
  %v319 = vsub.f32 %v158, %v241
  %v320 = vsub.f32 %v199, %v241
  %v321 = vsub.f32 %v161, %v242
  %v322 = vsub.f32 %v202, %v242
  %v323 = vadd.f32 %v299, 1e-05
  %v324 = vadd.f32 %v300, 1e-05
  %v325 = vadd.f32 %v301, 1e-05
  %v326 = vadd.f32 %v302, 1e-05
  %v327 = vadd.f32 %v303, 1e-05
  %v328 = vadd.f32 %v304, 1e-05
  %v329 = vadd.f32 %v305, 1e-05
  %v330 = vadd.f32 %v306, 1e-05
  %v331 = vrsqrt.pop %v323
  %v332 = vmul.f32 %v331, %v323
  %v333 = vmul.f32 %v332, %v331
  %v334 = vmul.f32 0.5, %v333
  %v335 = vsub.f32 1.5, %v334
  %v336 = vmul.f32 %v331, %v335
  %vm337 = vweird.f32 %v323
  %vm338 = vweird.f32 %v331
  %vm339 = vmor %vm337, %vm338
  %v340 = vsel %vm339, %v331, %v336
  %v341 = vrsqrt.pop %v324
  %v342 = vmul.f32 %v341, %v324
  %v343 = vmul.f32 %v342, %v341
  %v344 = vmul.f32 0.5, %v343
  %v345 = vsub.f32 1.5, %v344
  %v346 = vmul.f32 %v341, %v345
  %vm347 = vweird.f32 %v324
  %vm348 = vweird.f32 %v341
  %vm349 = vmor %vm347, %vm348
  %v350 = vsel %vm349, %v341, %v346
  %v351 = vrsqrt.pop %v325
  %v352 = vmul.f32 %v351, %v325
  %v353 = vmul.f32 %v352, %v351
  %v354 = vmul.f32 0.5, %v353
  %v355 = vsub.f32 1.5, %v354
  %v356 = vmul.f32 %v351, %v355
  %vm357 = vweird.f32 %v325
  %vm358 = vweird.f32 %v351
  %vm359 = vmor %vm357, %vm358
  %v360 = vsel %vm359, %v351, %v356
  %v361 = vrsqrt.pop %v326
  %v362 = vmul.f32 %v361, %v326
  %v363 = vmul.f32 %v362, %v361
  %v364 = vmul.f32 0.5, %v363
  %v365 = vsub.f32 1.5, %v364
  %v366 = vmul.f32 %v361, %v365
  %vm367 = vweird.f32 %v326
  %vm368 = vweird.f32 %v361
  %vm369 = vmor %vm367, %vm368
  %v370 = vsel %vm369, %v361, %v366
  %v371 = vrsqrt.pop %v327
  %v372 = vmul.f32 %v371, %v327
  %v373 = vmul.f32 %v372, %v371
  %v374 = vmul.f32 0.5, %v373
  %v375 = vsub.f32 1.5, %v374
  %v376 = vmul.f32 %v371, %v375
  %vm377 = vweird.f32 %v327
  %vm378 = vweird.f32 %v371
  %vm379 = vmor %vm377, %vm378
  %v380 = vsel %vm379, %v371, %v376
  %v381 = vrsqrt.pop %v328
  %v382 = vmul.f32 %v381, %v328
  %v383 = vmul.f32 %v382, %v381
  %v384 = vmul.f32 0.5, %v383
  %v385 = vsub.f32 1.5, %v384
  %v386 = vmul.f32 %v381, %v385
  %vm387 = vweird.f32 %v328
  %vm388 = vweird.f32 %v381
  %vm389 = vmor %vm387, %vm388
  %v390 = vsel %vm389, %v381, %v386
  %v391 = vrsqrt.pop %v329
  %v392 = vmul.f32 %v391, %v329
  %v393 = vmul.f32 %v392, %v391
  %v394 = vmul.f32 0.5, %v393
  %v395 = vsub.f32 1.5, %v394
  %v396 = vmul.f32 %v391, %v395
  %vm397 = vweird.f32 %v329
  %vm398 = vweird.f32 %v391
  %vm399 = vmor %vm397, %vm398
  %v400 = vsel %vm399, %v391, %v396
  %v401 = vrsqrt.pop %v330
  %v402 = vmul.f32 %v401, %v330
  %v403 = vmul.f32 %v402, %v401
  %v404 = vmul.f32 0.5, %v403
  %v405 = vsub.f32 1.5, %v404
  %v406 = vmul.f32 %v401, %v405
  %vm407 = vweird.f32 %v330
  %vm408 = vweird.f32 %v401
  %vm409 = vmor %vm407, %vm408
  %v410 = vsel %vm409, %v401, %v406
  %v411 = vmul.f32 %v307, %v340
  %v412 = vmul.f32 %v308, %v340
  %v413 = vmul.f32 %v309, %v350
  %v414 = vmul.f32 %v310, %v350
  %v415 = vmul.f32 %v311, %v360
  %v416 = vmul.f32 %v312, %v360
  %v417 = vmul.f32 %v313, %v370
  %v418 = vmul.f32 %v314, %v370
  %v419 = vmul.f32 %v315, %v380
  %v420 = vmul.f32 %v316, %v380
  %v421 = vmul.f32 %v317, %v390
  %v422 = vmul.f32 %v318, %v390
  %v423 = vmul.f32 %v319, %v400
  %v424 = vmul.f32 %v320, %v400
  %v425 = vmul.f32 %v321, %v410
  %v426 = vmul.f32 %v322, %v410
  %428 = vset.pattern.permute.xlu0 0
  %429 = vperm.xlu0 %428, %v41
  %v430 = vpop.permute.xlu0 %429
  %433 = vset.pattern.permute.xlu0 0
  %434 = vperm.xlu0 %433, %v42
  %v435 = vpop.permute.xlu0 %434
  %438 = vset.pattern.permute.xlu0 0
  %439 = vperm.xlu0 %438, %v43
  %v440 = vpop.permute.xlu0 %439
  %443 = vset.pattern.permute.xlu0 0
  %444 = vperm.xlu0 %443, %v44
  %v445 = vpop.permute.xlu0 %444
  %448 = vset.pattern.permute.xlu0 0
  %449 = vperm.xlu0 %448, %v45
  %v450 = vpop.permute.xlu0 %449
  %453 = vset.pattern.permute.xlu0 0
  %454 = vperm.xlu0 %453, %v46
  %v455 = vpop.permute.xlu0 %454
  %458 = vset.pattern.permute.xlu0 0
  %459 = vperm.xlu0 %458, %v47
  %v460 = vpop.permute.xlu0 %459
  %463 = vset.pattern.permute.xlu0 0
  %464 = vperm.xlu0 %463, %v48
  %v465 = vpop.permute.xlu0 %464
  %v467 = vmul.f32 %v411, %v430
  %v468 = vmul.f32 %v412, %v430
  %v469 = vmul.f32 %v413, %v435
  %v470 = vmul.f32 %v414, %v435
  %v471 = vmul.f32 %v415, %v440
  %v472 = vmul.f32 %v416, %v440
  %v473 = vmul.f32 %v417, %v445
  %v474 = vmul.f32 %v418, %v445
  %v475 = vmul.f32 %v419, %v450
  %v476 = vmul.f32 %v420, %v450
  %v477 = vmul.f32 %v421, %v455
  %v478 = vmul.f32 %v422, %v455
  %v479 = vmul.f32 %v423, %v460
  %v480 = vmul.f32 %v424, %v460
  %v481 = vmul.f32 %v425, %v465
  %v482 = vmul.f32 %v426, %v465
  %484 = vset.pattern.permute.xlu0 0
  %485 = vperm.xlu0 %484, %v49
  %v486 = vpop.permute.xlu0 %485
  %489 = vset.pattern.permute.xlu0 0
  %490 = vperm.xlu0 %489, %v50
  %v491 = vpop.permute.xlu0 %490
  %494 = vset.pattern.permute.xlu0 0
  %495 = vperm.xlu0 %494, %v51
  %v496 = vpop.permute.xlu0 %495
  %499 = vset.pattern.permute.xlu0 0
  %500 = vperm.xlu0 %499, %v52
  %v501 = vpop.permute.xlu0 %500
  %504 = vset.pattern.permute.xlu0 0
  %505 = vperm.xlu0 %504, %v53
  %v506 = vpop.permute.xlu0 %505
  %509 = vset.pattern.permute.xlu0 0
  %510 = vperm.xlu0 %509, %v54
  %v511 = vpop.permute.xlu0 %510
  %514 = vset.pattern.permute.xlu0 0
  %515 = vperm.xlu0 %514, %v55
  %v516 = vpop.permute.xlu0 %515
  %519 = vset.pattern.permute.xlu0 0
  %520 = vperm.xlu0 %519, %v56
  %v521 = vpop.permute.xlu0 %520
  %v523 = vadd.f32 %v467, %v486
  %v524 = vadd.f32 %v468, %v486
  %v525 = vadd.f32 %v469, %v491
  %v526 = vadd.f32 %v470, %v491
  %v527 = vadd.f32 %v471, %v496
  %v528 = vadd.f32 %v472, %v496
  %v529 = vadd.f32 %v473, %v501
  %v530 = vadd.f32 %v474, %v501
  %v531 = vadd.f32 %v475, %v506
  %v532 = vadd.f32 %v476, %v506
  %v533 = vadd.f32 %v477, %v511
  %v534 = vadd.f32 %v478, %v511
  %v535 = vadd.f32 %v479, %v516
  %v536 = vadd.f32 %v480, %v516
  %v537 = vadd.f32 %v481, %v521
  %v538 = vadd.f32 %v482, %v521
  %v539 = vmul.f32 %v523, 0.5
  %v540 = vmul.f32 %v524, 0.5
  %v541 = vmul.f32 %v525, 0.5
  %v542 = vmul.f32 %v526, 0.5
  %v543 = vmul.f32 %v527, 0.5
  %v544 = vmul.f32 %v528, 0.5
  %v545 = vmul.f32 %v529, 0.5
  %v546 = vmul.f32 %v530, 0.5
  %v547 = vmul.f32 %v531, 0.5
  %v548 = vmul.f32 %v532, 0.5
  %v549 = vmul.f32 %v533, 0.5
  %v550 = vmul.f32 %v534, 0.5
  %v551 = vmul.f32 %v535, 0.5
  %v552 = vmul.f32 %v536, 0.5
  %v553 = vmul.f32 %v537, 0.5
  %v554 = vmul.f32 %v538, 0.5
  %v555 = vmul.f32 %v523, 0.70710677
  %v556 = vmul.f32 %v524, 0.70710677
  %v557 = vmul.f32 %v525, 0.70710677
  %v558 = vmul.f32 %v526, 0.70710677
  %v559 = vmul.f32 %v527, 0.70710677
  %v560 = vmul.f32 %v528, 0.70710677
  %v561 = vmul.f32 %v529, 0.70710677
  %v562 = vmul.f32 %v530, 0.70710677
  %v563 = vmul.f32 %v531, 0.70710677
  %v564 = vmul.f32 %v532, 0.70710677
  %v565 = vmul.f32 %v533, 0.70710677
  %v566 = vmul.f32 %v534, 0.70710677
  %v567 = vmul.f32 %v535, 0.70710677
  %v568 = vmul.f32 %v536, 0.70710677
  %v569 = vmul.f32 %v537, 0.70710677
  %v570 = vmul.f32 %v538, 0.70710677
  %v571 = vmul.f32 %v555, %v555
  %v572 = vmin.f32 16.0, %v571
  %v573 = vmul.f32 %v572, 2.1237322e-06
  %v574 = vadd.f32 %v573, 0.00028619796
  %v575 = vmul.f32 %v572, %v574
  %v576 = vadd.f32 %v575, 0.0036580483
  %v577 = vmul.f32 %v572, %v576
  %v578 = vadd.f32 %v577, 0.05243302
  %v579 = vmul.f32 %v572, %v578
  %v580 = vadd.f32 %v579, 0.18741608
  %v581 = vmul.f32 %v572, %v580
  %v582 = vadd.f32 %v581, 1.1283791
  %v583 = vmul.f32 %v555, %v582
  %v584 = vmul.f32 %v572, 3.8918573e-05
  %v585 = vadd.f32 %v584, 0.001143296
  %v586 = vmul.f32 %v572, %v585
  %v587 = vadd.f32 %v586, 0.014752088
  %v588 = vmul.f32 %v572, %v587
  %v589 = vadd.f32 %v588, 0.112945676
  %v590 = vmul.f32 %v572, %v589
  %v591 = vadd.f32 %v590, 0.4994258
  %v592 = vmul.f32 %v572, %v591
  %v593 = vadd.f32 %v592, 1.0
  %v594 = vrcp.pop %v593
  %v595 = vmul.f32 %v593, %v594
  %v596 = vsub.f32 1.0, %v595
  %v597 = vmul.f32 %v594, %v596
  %v598 = vadd.f32 %v594, %v597
  %vm599 = vweird.f32 %v593
  %vm600 = vweird.f32 %v594
  %vm601 = vmor %vm599, %vm600
  %v602 = vsel %vm601, %v594, %v598
  %v603 = vand.u32 2147483647, %v593
  %vm604 = vcmp.eq.f32.partialorder %v603, 8.507059e+37
  %v605 = vand.u32 %v593, 2147483648
  %v606 = vor.u32 1.1754944e-38, %v605
  %v607 = vsel %vm604, %v606, %v602
  %v608 = vmul.f32 %v583, %v607
  %v609 = vmin.f32 %v608, 1.0
  %v610 = vmax.f32 %v609, -1.0
  %v611 = vmul.f32 %v556, %v556
  %v612 = vmin.f32 16.0, %v611
  %v613 = vmul.f32 %v612, 2.1237322e-06
  %v614 = vadd.f32 %v613, 0.00028619796
  %v615 = vmul.f32 %v612, %v614
  %v616 = vadd.f32 %v615, 0.0036580483
  %v617 = vmul.f32 %v612, %v616
  %v618 = vadd.f32 %v617, 0.05243302
  %v619 = vmul.f32 %v612, %v618
  %v620 = vadd.f32 %v619, 0.18741608
  %v621 = vmul.f32 %v612, %v620
  %v622 = vadd.f32 %v621, 1.1283791
  %v623 = vmul.f32 %v556, %v622
  %v624 = vmul.f32 %v612, 3.8918573e-05
  %v625 = vadd.f32 %v624, 0.001143296
  %v626 = vmul.f32 %v612, %v625
  %v627 = vadd.f32 %v626, 0.014752088
  %v628 = vmul.f32 %v612, %v627
  %v629 = vadd.f32 %v628, 0.112945676
  %v630 = vmul.f32 %v612, %v629
  %v631 = vadd.f32 %v630, 0.4994258
  %v632 = vmul.f32 %v612, %v631
  %v633 = vadd.f32 %v632, 1.0
  %v634 = vrcp.pop %v633
  %v635 = vmul.f32 %v633, %v634
  %v636 = vsub.f32 1.0, %v635
  %v637 = vmul.f32 %v634, %v636
  %v638 = vadd.f32 %v634, %v637
  %vm639 = vweird.f32 %v633
  %vm640 = vweird.f32 %v634
  %vm641 = vmor %vm639, %vm640
  %v642 = vsel %vm641, %v634, %v638
  %v643 = vand.u32 2147483647, %v633
  %vm644 = vcmp.eq.f32.partialorder %v643, 8.507059e+37
  %v645 = vand.u32 %v633, 2147483648
  %v646 = vor.u32 1.1754944e-38, %v645
  %v647 = vsel %vm644, %v646, %v642
  %v648 = vmul.f32 %v623, %v647
  %v649 = vmin.f32 %v648, 1.0
  %v650 = vmax.f32 %v649, -1.0
  %v651 = vmul.f32 %v557, %v557
  %v652 = vmin.f32 16.0, %v651
  %v653 = vmul.f32 %v652, 2.1237322e-06
  %v654 = vadd.f32 %v653, 0.00028619796
  %v655 = vmul.f32 %v652, %v654
  %v656 = vadd.f32 %v655, 0.0036580483
  %v657 = vmul.f32 %v652, %v656
  %v658 = vadd.f32 %v657, 0.05243302
  %v659 = vmul.f32 %v652, %v658
  %v660 = vadd.f32 %v659, 0.18741608
  %v661 = vmul.f32 %v652, %v660
  %v662 = vadd.f32 %v661, 1.1283791
  %v663 = vmul.f32 %v557, %v662
  %v664 = vmul.f32 %v652, 3.8918573e-05
  %v665 = vadd.f32 %v664, 0.001143296
  %v666 = vmul.f32 %v652, %v665
  %v667 = vadd.f32 %v666, 0.014752088
  %v668 = vmul.f32 %v652, %v667
  %v669 = vadd.f32 %v668, 0.112945676
  %v670 = vmul.f32 %v652, %v669
  %v671 = vadd.f32 %v670, 0.4994258
  %v672 = vmul.f32 %v652, %v671
  %v673 = vadd.f32 %v672, 1.0
  %v674 = vrcp.pop %v673
  %v675 = vmul.f32 %v673, %v674
  %v676 = vsub.f32 1.0, %v675
  %v677 = vmul.f32 %v674, %v676
  %v678 = vadd.f32 %v674, %v677
  %vm679 = vweird.f32 %v673
  %vm680 = vweird.f32 %v674
  %vm681 = vmor %vm679, %vm680
  %v682 = vsel %vm681, %v674, %v678
  %v683 = vand.u32 2147483647, %v673
  %vm684 = vcmp.eq.f32.partialorder %v683, 8.507059e+37
  %v685 = vand.u32 %v673, 2147483648
  %v686 = vor.u32 1.1754944e-38, %v685
  %v687 = vsel %vm684, %v686, %v682
  %v688 = vmul.f32 %v663, %v687
  %v689 = vmin.f32 %v688, 1.0
  %v690 = vmax.f32 %v689, -1.0
  %v691 = vmul.f32 %v558, %v558
  %v692 = vmin.f32 16.0, %v691
  %v693 = vmul.f32 %v692, 2.1237322e-06
  %v694 = vadd.f32 %v693, 0.00028619796
  %v695 = vmul.f32 %v692, %v694
  %v696 = vadd.f32 %v695, 0.0036580483
  %v697 = vmul.f32 %v692, %v696
  %v698 = vadd.f32 %v697, 0.05243302
  %v699 = vmul.f32 %v692, %v698
  %v700 = vadd.f32 %v699, 0.18741608
  %v701 = vmul.f32 %v692, %v700
  %v702 = vadd.f32 %v701, 1.1283791
  %v703 = vmul.f32 %v558, %v702
  %v704 = vmul.f32 %v692, 3.8918573e-05
  %v705 = vadd.f32 %v704, 0.001143296
  %v706 = vmul.f32 %v692, %v705
  %v707 = vadd.f32 %v706, 0.014752088
  %v708 = vmul.f32 %v692, %v707
  %v709 = vadd.f32 %v708, 0.112945676
  %v710 = vmul.f32 %v692, %v709
  %v711 = vadd.f32 %v710, 0.4994258
  %v712 = vmul.f32 %v692, %v711
  %v713 = vadd.f32 %v712, 1.0
  %v714 = vrcp.pop %v713
  %v715 = vmul.f32 %v713, %v714
  %v716 = vsub.f32 1.0, %v715
  %v717 = vmul.f32 %v714, %v716
  %v718 = vadd.f32 %v714, %v717
  %vm719 = vweird.f32 %v713
  %vm720 = vweird.f32 %v714
  %vm721 = vmor %vm719, %vm720
  %v722 = vsel %vm721, %v714, %v718
  %v723 = vand.u32 2147483647, %v713
  %vm724 = vcmp.eq.f32.partialorder %v723, 8.507059e+37
  %v725 = vand.u32 %v713, 2147483648
  %v726 = vor.u32 1.1754944e-38, %v725
  %v727 = vsel %vm724, %v726, %v722
  %v728 = vmul.f32 %v703, %v727
  %v729 = vmin.f32 %v728, 1.0
  %v730 = vmax.f32 %v729, -1.0
  %v731 = vmul.f32 %v559, %v559
  %v732 = vmin.f32 16.0, %v731
  %v733 = vmul.f32 %v732, 2.1237322e-06
  %v734 = vadd.f32 %v733, 0.00028619796
  %v735 = vmul.f32 %v732, %v734
  %v736 = vadd.f32 %v735, 0.0036580483
  %v737 = vmul.f32 %v732, %v736
  %v738 = vadd.f32 %v737, 0.05243302
  %v739 = vmul.f32 %v732, %v738
  %v740 = vadd.f32 %v739, 0.18741608
  %v741 = vmul.f32 %v732, %v740
  %v742 = vadd.f32 %v741, 1.1283791
  %v743 = vmul.f32 %v559, %v742
  %v744 = vmul.f32 %v732, 3.8918573e-05
  %v745 = vadd.f32 %v744, 0.001143296
  %v746 = vmul.f32 %v732, %v745
  %v747 = vadd.f32 %v746, 0.014752088
  %v748 = vmul.f32 %v732, %v747
  %v749 = vadd.f32 %v748, 0.112945676
  %v750 = vmul.f32 %v732, %v749
  %v751 = vadd.f32 %v750, 0.4994258
  %v752 = vmul.f32 %v732, %v751
  %v753 = vadd.f32 %v752, 1.0
  %v754 = vrcp.pop %v753
  %v755 = vmul.f32 %v753, %v754
  %v756 = vsub.f32 1.0, %v755
  %v757 = vmul.f32 %v754, %v756
  %v758 = vadd.f32 %v754, %v757
  %vm759 = vweird.f32 %v753
  %vm760 = vweird.f32 %v754
  %vm761 = vmor %vm759, %vm760
  %v762 = vsel %vm761, %v754, %v758
  %v763 = vand.u32 2147483647, %v753
  %vm764 = vcmp.eq.f32.partialorder %v763, 8.507059e+37
  %v765 = vand.u32 %v753, 2147483648
  %v766 = vor.u32 1.1754944e-38, %v765
  %v767 = vsel %vm764, %v766, %v762
  %v768 = vmul.f32 %v743, %v767
  %v769 = vmin.f32 %v768, 1.0
  %v770 = vmax.f32 %v769, -1.0
  %v771 = vmul.f32 %v560, %v560
  %v772 = vmin.f32 16.0, %v771
  %v773 = vmul.f32 %v772, 2.1237322e-06
  %v774 = vadd.f32 %v773, 0.00028619796
  %v775 = vmul.f32 %v772, %v774
  %v776 = vadd.f32 %v775, 0.0036580483
  %v777 = vmul.f32 %v772, %v776
  %v778 = vadd.f32 %v777, 0.05243302
  %v779 = vmul.f32 %v772, %v778
  %v780 = vadd.f32 %v779, 0.18741608
  %v781 = vmul.f32 %v772, %v780
  %v782 = vadd.f32 %v781, 1.1283791
  %v783 = vmul.f32 %v560, %v782
  %v784 = vmul.f32 %v772, 3.8918573e-05
  %v785 = vadd.f32 %v784, 0.001143296
  %v786 = vmul.f32 %v772, %v785
  %v787 = vadd.f32 %v786, 0.014752088
  %v788 = vmul.f32 %v772, %v787
  %v789 = vadd.f32 %v788, 0.112945676
  %v790 = vmul.f32 %v772, %v789
  %v791 = vadd.f32 %v790, 0.4994258
  %v792 = vmul.f32 %v772, %v791
  %v793 = vadd.f32 %v792, 1.0
  %v794 = vrcp.pop %v793
  %v795 = vmul.f32 %v793, %v794
  %v796 = vsub.f32 1.0, %v795
  %v797 = vmul.f32 %v794, %v796
  %v798 = vadd.f32 %v794, %v797
  %vm799 = vweird.f32 %v793
  %vm800 = vweird.f32 %v794
  %vm801 = vmor %vm799, %vm800
  %v802 = vsel %vm801, %v794, %v798
  %v803 = vand.u32 2147483647, %v793
  %vm804 = vcmp.eq.f32.partialorder %v803, 8.507059e+37
  %v805 = vand.u32 %v793, 2147483648
  %v806 = vor.u32 1.1754944e-38, %v805
  %v807 = vsel %vm804, %v806, %v802
  %v808 = vmul.f32 %v783, %v807
  %v809 = vmin.f32 %v808, 1.0
  %v810 = vmax.f32 %v809, -1.0
  %v811 = vmul.f32 %v561, %v561
  %v812 = vmin.f32 16.0, %v811
  %v813 = vmul.f32 %v812, 2.1237322e-06
  %v814 = vadd.f32 %v813, 0.00028619796
  %v815 = vmul.f32 %v812, %v814
  %v816 = vadd.f32 %v815, 0.0036580483
  %v817 = vmul.f32 %v812, %v816
  %v818 = vadd.f32 %v817, 0.05243302
  %v819 = vmul.f32 %v812, %v818
  %v820 = vadd.f32 %v819, 0.18741608
  %v821 = vmul.f32 %v812, %v820
  %v822 = vadd.f32 %v821, 1.1283791
  %v823 = vmul.f32 %v561, %v822
  %v824 = vmul.f32 %v812, 3.8918573e-05
  %v825 = vadd.f32 %v824, 0.001143296
  %v826 = vmul.f32 %v812, %v825
  %v827 = vadd.f32 %v826, 0.014752088
  %v828 = vmul.f32 %v812, %v827
  %v829 = vadd.f32 %v828, 0.112945676
  %v830 = vmul.f32 %v812, %v829
  %v831 = vadd.f32 %v830, 0.4994258
  %v832 = vmul.f32 %v812, %v831
  %v833 = vadd.f32 %v832, 1.0
  %v834 = vrcp.pop %v833
  %v835 = vmul.f32 %v833, %v834
  %v836 = vsub.f32 1.0, %v835
  %v837 = vmul.f32 %v834, %v836
  %v838 = vadd.f32 %v834, %v837
  %vm839 = vweird.f32 %v833
  %vm840 = vweird.f32 %v834
  %vm841 = vmor %vm839, %vm840
  %v842 = vsel %vm841, %v834, %v838
  %v843 = vand.u32 2147483647, %v833
  %vm844 = vcmp.eq.f32.partialorder %v843, 8.507059e+37
  %v845 = vand.u32 %v833, 2147483648
  %v846 = vor.u32 1.1754944e-38, %v845
  %v847 = vsel %vm844, %v846, %v842
  %v848 = vmul.f32 %v823, %v847
  %v849 = vmin.f32 %v848, 1.0
  %v850 = vmax.f32 %v849, -1.0
  %v851 = vmul.f32 %v562, %v562
  %v852 = vmin.f32 16.0, %v851
  %v853 = vmul.f32 %v852, 2.1237322e-06
  %v854 = vadd.f32 %v853, 0.00028619796
  %v855 = vmul.f32 %v852, %v854
  %v856 = vadd.f32 %v855, 0.0036580483
  %v857 = vmul.f32 %v852, %v856
  %v858 = vadd.f32 %v857, 0.05243302
  %v859 = vmul.f32 %v852, %v858
  %v860 = vadd.f32 %v859, 0.18741608
  %v861 = vmul.f32 %v852, %v860
  %v862 = vadd.f32 %v861, 1.1283791
  %v863 = vmul.f32 %v562, %v862
  %v864 = vmul.f32 %v852, 3.8918573e-05
  %v865 = vadd.f32 %v864, 0.001143296
  %v866 = vmul.f32 %v852, %v865
  %v867 = vadd.f32 %v866, 0.014752088
  %v868 = vmul.f32 %v852, %v867
  %v869 = vadd.f32 %v868, 0.112945676
  %v870 = vmul.f32 %v852, %v869
  %v871 = vadd.f32 %v870, 0.4994258
  %v872 = vmul.f32 %v852, %v871
  %v873 = vadd.f32 %v872, 1.0
  %v874 = vrcp.pop %v873
  %v875 = vmul.f32 %v873, %v874
  %v876 = vsub.f32 1.0, %v875
  %v877 = vmul.f32 %v874, %v876
  %v878 = vadd.f32 %v874, %v877
  %vm879 = vweird.f32 %v873
  %vm880 = vweird.f32 %v874
  %vm881 = vmor %vm879, %vm880
  %v882 = vsel %vm881, %v874, %v878
  %v883 = vand.u32 2147483647, %v873
  %vm884 = vcmp.eq.f32.partialorder %v883, 8.507059e+37
  %v885 = vand.u32 %v873, 2147483648
  %v886 = vor.u32 1.1754944e-38, %v885
  %v887 = vsel %vm884, %v886, %v882
  %v888 = vmul.f32 %v863, %v887
  %v889 = vmin.f32 %v888, 1.0
  %v890 = vmax.f32 %v889, -1.0
  %v891 = vmul.f32 %v563, %v563
  %v892 = vmin.f32 16.0, %v891
  %v893 = vmul.f32 %v892, 2.1237322e-06
  %v894 = vadd.f32 %v893, 0.00028619796
  %v895 = vmul.f32 %v892, %v894
  %v896 = vadd.f32 %v895, 0.0036580483
  %v897 = vmul.f32 %v892, %v896
  %v898 = vadd.f32 %v897, 0.05243302
  %v899 = vmul.f32 %v892, %v898
  %v900 = vadd.f32 %v899, 0.18741608
  %v901 = vmul.f32 %v892, %v900
  %v902 = vadd.f32 %v901, 1.1283791
  %v903 = vmul.f32 %v563, %v902
  %v904 = vmul.f32 %v892, 3.8918573e-05
  %v905 = vadd.f32 %v904, 0.001143296
  %v906 = vmul.f32 %v892, %v905
  %v907 = vadd.f32 %v906, 0.014752088
  %v908 = vmul.f32 %v892, %v907
  %v909 = vadd.f32 %v908, 0.112945676
  %v910 = vmul.f32 %v892, %v909
  %v911 = vadd.f32 %v910, 0.4994258
  %v912 = vmul.f32 %v892, %v911
  %v913 = vadd.f32 %v912, 1.0
  %v914 = vrcp.pop %v913
  %v915 = vmul.f32 %v913, %v914
  %v916 = vsub.f32 1.0, %v915
  %v917 = vmul.f32 %v914, %v916
  %v918 = vadd.f32 %v914, %v917
  %vm919 = vweird.f32 %v913
  %vm920 = vweird.f32 %v914
  %vm921 = vmor %vm919, %vm920
  %v922 = vsel %vm921, %v914, %v918
  %v923 = vand.u32 2147483647, %v913
  %vm924 = vcmp.eq.f32.partialorder %v923, 8.507059e+37
  %v925 = vand.u32 %v913, 2147483648
  %v926 = vor.u32 1.1754944e-38, %v925
  %v927 = vsel %vm924, %v926, %v922
  %v928 = vmul.f32 %v903, %v927
  %v929 = vmin.f32 %v928, 1.0
  %v930 = vmax.f32 %v929, -1.0
  %v931 = vmul.f32 %v564, %v564
  %v932 = vmin.f32 16.0, %v931
  %v933 = vmul.f32 %v932, 2.1237322e-06
  %v934 = vadd.f32 %v933, 0.00028619796
  %v935 = vmul.f32 %v932, %v934
  %v936 = vadd.f32 %v935, 0.0036580483
  %v937 = vmul.f32 %v932, %v936
  %v938 = vadd.f32 %v937, 0.05243302
  %v939 = vmul.f32 %v932, %v938
  %v940 = vadd.f32 %v939, 0.18741608
  %v941 = vmul.f32 %v932, %v940
  %v942 = vadd.f32 %v941, 1.1283791
  %v943 = vmul.f32 %v564, %v942
  %v944 = vmul.f32 %v932, 3.8918573e-05
  %v945 = vadd.f32 %v944, 0.001143296
  %v946 = vmul.f32 %v932, %v945
  %v947 = vadd.f32 %v946, 0.014752088
  %v948 = vmul.f32 %v932, %v947
  %v949 = vadd.f32 %v948, 0.112945676
  %v950 = vmul.f32 %v932, %v949
  %v951 = vadd.f32 %v950, 0.4994258
  %v952 = vmul.f32 %v932, %v951
  %v953 = vadd.f32 %v952, 1.0
  %v954 = vrcp.pop %v953
  %v955 = vmul.f32 %v953, %v954
  %v956 = vsub.f32 1.0, %v955
  %v957 = vmul.f32 %v954, %v956
  %v958 = vadd.f32 %v954, %v957
  %vm959 = vweird.f32 %v953
  %vm960 = vweird.f32 %v954
  %vm961 = vmor %vm959, %vm960
  %v962 = vsel %vm961, %v954, %v958
  %v963 = vand.u32 2147483647, %v953
  %vm964 = vcmp.eq.f32.partialorder %v963, 8.507059e+37
  %v965 = vand.u32 %v953, 2147483648
  %v966 = vor.u32 1.1754944e-38, %v965
  %v967 = vsel %vm964, %v966, %v962
  %v968 = vmul.f32 %v943, %v967
  %v969 = vmin.f32 %v968, 1.0
  %v970 = vmax.f32 %v969, -1.0
  %v971 = vmul.f32 %v565, %v565
  %v972 = vmin.f32 16.0, %v971
  %v973 = vmul.f32 %v972, 2.1237322e-06
  %v974 = vadd.f32 %v973, 0.00028619796
  %v975 = vmul.f32 %v972, %v974
  %v976 = vadd.f32 %v975, 0.0036580483
  %v977 = vmul.f32 %v972, %v976
  %v978 = vadd.f32 %v977, 0.05243302
  %v979 = vmul.f32 %v972, %v978
  %v980 = vadd.f32 %v979, 0.18741608
  %v981 = vmul.f32 %v972, %v980
  %v982 = vadd.f32 %v981, 1.1283791
  %v983 = vmul.f32 %v565, %v982
  %v984 = vmul.f32 %v972, 3.8918573e-05
  %v985 = vadd.f32 %v984, 0.001143296
  %v986 = vmul.f32 %v972, %v985
  %v987 = vadd.f32 %v986, 0.014752088
  %v988 = vmul.f32 %v972, %v987
  %v989 = vadd.f32 %v988, 0.112945676
  %v990 = vmul.f32 %v972, %v989
  %v991 = vadd.f32 %v990, 0.4994258
  %v992 = vmul.f32 %v972, %v991
  %v993 = vadd.f32 %v992, 1.0
  %v994 = vrcp.pop %v993
  %v995 = vmul.f32 %v993, %v994
  %v996 = vsub.f32 1.0, %v995
  %v997 = vmul.f32 %v994, %v996
  %v998 = vadd.f32 %v994, %v997
  %vm999 = vweird.f32 %v993
  %vm1000 = vweird.f32 %v994
  %vm1001 = vmor %vm999, %vm1000
  %v1002 = vsel %vm1001, %v994, %v998
  %v1003 = vand.u32 2147483647, %v993
  %vm1004 = vcmp.eq.f32.partialorder %v1003, 8.507059e+37
  %v1005 = vand.u32 %v993, 2147483648
  %v1006 = vor.u32 1.1754944e-38, %v1005
  %v1007 = vsel %vm1004, %v1006, %v1002
  %v1008 = vmul.f32 %v983, %v1007
  %v1009 = vmin.f32 %v1008, 1.0
  %v1010 = vmax.f32 %v1009, -1.0
  %v1011 = vmul.f32 %v566, %v566
  %v1012 = vmin.f32 16.0, %v1011
  %v1013 = vmul.f32 %v1012, 2.1237322e-06
  %v1014 = vadd.f32 %v1013, 0.00028619796
  %v1015 = vmul.f32 %v1012, %v1014
  %v1016 = vadd.f32 %v1015, 0.0036580483
  %v1017 = vmul.f32 %v1012, %v1016
  %v1018 = vadd.f32 %v1017, 0.05243302
  %v1019 = vmul.f32 %v1012, %v1018
  %v1020 = vadd.f32 %v1019, 0.18741608
  %v1021 = vmul.f32 %v1012, %v1020
  %v1022 = vadd.f32 %v1021, 1.1283791
  %v1023 = vmul.f32 %v566, %v1022
  %v1024 = vmul.f32 %v1012, 3.8918573e-05
  %v1025 = vadd.f32 %v1024, 0.001143296
  %v1026 = vmul.f32 %v1012, %v1025
  %v1027 = vadd.f32 %v1026, 0.014752088
  %v1028 = vmul.f32 %v1012, %v1027
  %v1029 = vadd.f32 %v1028, 0.112945676
  %v1030 = vmul.f32 %v1012, %v1029
  %v1031 = vadd.f32 %v1030, 0.4994258
  %v1032 = vmul.f32 %v1012, %v1031
  %v1033 = vadd.f32 %v1032, 1.0
  %v1034 = vrcp.pop %v1033
  %v1035 = vmul.f32 %v1033, %v1034
  %v1036 = vsub.f32 1.0, %v1035
  %v1037 = vmul.f32 %v1034, %v1036
  %v1038 = vadd.f32 %v1034, %v1037
  %vm1039 = vweird.f32 %v1033
  %vm1040 = vweird.f32 %v1034
  %vm1041 = vmor %vm1039, %vm1040
  %v1042 = vsel %vm1041, %v1034, %v1038
  %v1043 = vand.u32 2147483647, %v1033
  %vm1044 = vcmp.eq.f32.partialorder %v1043, 8.507059e+37
  %v1045 = vand.u32 %v1033, 2147483648
  %v1046 = vor.u32 1.1754944e-38, %v1045
  %v1047 = vsel %vm1044, %v1046, %v1042
  %v1048 = vmul.f32 %v1023, %v1047
  %v1049 = vmin.f32 %v1048, 1.0
  %v1050 = vmax.f32 %v1049, -1.0
  %v1051 = vmul.f32 %v567, %v567
  %v1052 = vmin.f32 16.0, %v1051
  %v1053 = vmul.f32 %v1052, 2.1237322e-06
  %v1054 = vadd.f32 %v1053, 0.00028619796
  %v1055 = vmul.f32 %v1052, %v1054
  %v1056 = vadd.f32 %v1055, 0.0036580483
  %v1057 = vmul.f32 %v1052, %v1056
  %v1058 = vadd.f32 %v1057, 0.05243302
  %v1059 = vmul.f32 %v1052, %v1058
  %v1060 = vadd.f32 %v1059, 0.18741608
  %v1061 = vmul.f32 %v1052, %v1060
  %v1062 = vadd.f32 %v1061, 1.1283791
  %v1063 = vmul.f32 %v567, %v1062
  %v1064 = vmul.f32 %v1052, 3.8918573e-05
  %v1065 = vadd.f32 %v1064, 0.001143296
  %v1066 = vmul.f32 %v1052, %v1065
  %v1067 = vadd.f32 %v1066, 0.014752088
  %v1068 = vmul.f32 %v1052, %v1067
  %v1069 = vadd.f32 %v1068, 0.112945676
  %v1070 = vmul.f32 %v1052, %v1069
  %v1071 = vadd.f32 %v1070, 0.4994258
  %v1072 = vmul.f32 %v1052, %v1071
  %v1073 = vadd.f32 %v1072, 1.0
  %v1074 = vrcp.pop %v1073
  %v1075 = vmul.f32 %v1073, %v1074
  %v1076 = vsub.f32 1.0, %v1075
  %v1077 = vmul.f32 %v1074, %v1076
  %v1078 = vadd.f32 %v1074, %v1077
  %vm1079 = vweird.f32 %v1073
  %vm1080 = vweird.f32 %v1074
  %vm1081 = vmor %vm1079, %vm1080
  %v1082 = vsel %vm1081, %v1074, %v1078
  %v1083 = vand.u32 2147483647, %v1073
  %vm1084 = vcmp.eq.f32.partialorder %v1083, 8.507059e+37
  %v1085 = vand.u32 %v1073, 2147483648
  %v1086 = vor.u32 1.1754944e-38, %v1085
  %v1087 = vsel %vm1084, %v1086, %v1082
  %v1088 = vmul.f32 %v1063, %v1087
  %v1089 = vmin.f32 %v1088, 1.0
  %v1090 = vmax.f32 %v1089, -1.0
  %v1091 = vmul.f32 %v568, %v568
  %v1092 = vmin.f32 16.0, %v1091
  %v1093 = vmul.f32 %v1092, 2.1237322e-06
  %v1094 = vadd.f32 %v1093, 0.00028619796
  %v1095 = vmul.f32 %v1092, %v1094
  %v1096 = vadd.f32 %v1095, 0.0036580483
  %v1097 = vmul.f32 %v1092, %v1096
  %v1098 = vadd.f32 %v1097, 0.05243302
  %v1099 = vmul.f32 %v1092, %v1098
  %v1100 = vadd.f32 %v1099, 0.18741608
  %v1101 = vmul.f32 %v1092, %v1100
  %v1102 = vadd.f32 %v1101, 1.1283791
  %v1103 = vmul.f32 %v568, %v1102
  %v1104 = vmul.f32 %v1092, 3.8918573e-05
  %v1105 = vadd.f32 %v1104, 0.001143296
  %v1106 = vmul.f32 %v1092, %v1105
  %v1107 = vadd.f32 %v1106, 0.014752088
  %v1108 = vmul.f32 %v1092, %v1107
  %v1109 = vadd.f32 %v1108, 0.112945676
  %v1110 = vmul.f32 %v1092, %v1109
  %v1111 = vadd.f32 %v1110, 0.4994258
  %v1112 = vmul.f32 %v1092, %v1111
  %v1113 = vadd.f32 %v1112, 1.0
  %v1114 = vrcp.pop %v1113
  %v1115 = vmul.f32 %v1113, %v1114
  %v1116 = vsub.f32 1.0, %v1115
  %v1117 = vmul.f32 %v1114, %v1116
  %v1118 = vadd.f32 %v1114, %v1117
  %vm1119 = vweird.f32 %v1113
  %vm1120 = vweird.f32 %v1114
  %vm1121 = vmor %vm1119, %vm1120
  %v1122 = vsel %vm1121, %v1114, %v1118
  %v1123 = vand.u32 2147483647, %v1113
  %vm1124 = vcmp.eq.f32.partialorder %v1123, 8.507059e+37
  %v1125 = vand.u32 %v1113, 2147483648
  %v1126 = vor.u32 1.1754944e-38, %v1125
  %v1127 = vsel %vm1124, %v1126, %v1122
  %v1128 = vmul.f32 %v1103, %v1127
  %v1129 = vmin.f32 %v1128, 1.0
  %v1130 = vmax.f32 %v1129, -1.0
  %v1131 = vmul.f32 %v569, %v569
  %v1132 = vmin.f32 16.0, %v1131
  %v1133 = vmul.f32 %v1132, 2.1237322e-06
  %v1134 = vadd.f32 %v1133, 0.00028619796
  %v1135 = vmul.f32 %v1132, %v1134
  %v1136 = vadd.f32 %v1135, 0.0036580483
  %v1137 = vmul.f32 %v1132, %v1136
  %v1138 = vadd.f32 %v1137, 0.05243302
  %v1139 = vmul.f32 %v1132, %v1138
  %v1140 = vadd.f32 %v1139, 0.18741608
  %v1141 = vmul.f32 %v1132, %v1140
  %v1142 = vadd.f32 %v1141, 1.1283791
  %v1143 = vmul.f32 %v569, %v1142
  %v1144 = vmul.f32 %v1132, 3.8918573e-05
  %v1145 = vadd.f32 %v1144, 0.001143296
  %v1146 = vmul.f32 %v1132, %v1145
  %v1147 = vadd.f32 %v1146, 0.014752088
  %v1148 = vmul.f32 %v1132, %v1147
  %v1149 = vadd.f32 %v1148, 0.112945676
  %v1150 = vmul.f32 %v1132, %v1149
  %v1151 = vadd.f32 %v1150, 0.4994258
  %v1152 = vmul.f32 %v1132, %v1151
  %v1153 = vadd.f32 %v1152, 1.0
  %v1154 = vrcp.pop %v1153
  %v1155 = vmul.f32 %v1153, %v1154
  %v1156 = vsub.f32 1.0, %v1155
  %v1157 = vmul.f32 %v1154, %v1156
  %v1158 = vadd.f32 %v1154, %v1157
  %vm1159 = vweird.f32 %v1153
  %vm1160 = vweird.f32 %v1154
  %vm1161 = vmor %vm1159, %vm1160
  %v1162 = vsel %vm1161, %v1154, %v1158
  %v1163 = vand.u32 2147483647, %v1153
  %vm1164 = vcmp.eq.f32.partialorder %v1163, 8.507059e+37
  %v1165 = vand.u32 %v1153, 2147483648
  %v1166 = vor.u32 1.1754944e-38, %v1165
  %v1167 = vsel %vm1164, %v1166, %v1162
  %v1168 = vmul.f32 %v1143, %v1167
  %v1169 = vmin.f32 %v1168, 1.0
  %v1170 = vmax.f32 %v1169, -1.0
  %v1171 = vmul.f32 %v570, %v570
  %v1172 = vmin.f32 16.0, %v1171
  %v1173 = vmul.f32 %v1172, 2.1237322e-06
  %v1174 = vadd.f32 %v1173, 0.00028619796
  %v1175 = vmul.f32 %v1172, %v1174
  %v1176 = vadd.f32 %v1175, 0.0036580483
  %v1177 = vmul.f32 %v1172, %v1176
  %v1178 = vadd.f32 %v1177, 0.05243302
  %v1179 = vmul.f32 %v1172, %v1178
  %v1180 = vadd.f32 %v1179, 0.18741608
  %v1181 = vmul.f32 %v1172, %v1180
  %v1182 = vadd.f32 %v1181, 1.1283791
  %v1183 = vmul.f32 %v570, %v1182
  %v1184 = vmul.f32 %v1172, 3.8918573e-05
  %v1185 = vadd.f32 %v1184, 0.001143296
  %v1186 = vmul.f32 %v1172, %v1185
  %v1187 = vadd.f32 %v1186, 0.014752088
  %v1188 = vmul.f32 %v1172, %v1187
  %v1189 = vadd.f32 %v1188, 0.112945676
  %v1190 = vmul.f32 %v1172, %v1189
  %v1191 = vadd.f32 %v1190, 0.4994258
  %v1192 = vmul.f32 %v1172, %v1191
  %v1193 = vadd.f32 %v1192, 1.0
  %v1194 = vrcp.pop %v1193
  %v1195 = vmul.f32 %v1193, %v1194
  %v1196 = vsub.f32 1.0, %v1195
  %v1197 = vmul.f32 %v1194, %v1196
  %v1198 = vadd.f32 %v1194, %v1197
  %vm1199 = vweird.f32 %v1193
  %vm1200 = vweird.f32 %v1194
  %vm1201 = vmor %vm1199, %vm1200
  %v1202 = vsel %vm1201, %v1194, %v1198
  %v1203 = vand.u32 2147483647, %v1193
  %vm1204 = vcmp.eq.f32.partialorder %v1203, 8.507059e+37
  %v1205 = vand.u32 %v1193, 2147483648
  %v1206 = vor.u32 1.1754944e-38, %v1205
  %v1207 = vsel %vm1204, %v1206, %v1202
  %v1208 = vmul.f32 %v1183, %v1207
  %v1209 = vmin.f32 %v1208, 1.0
  %v1210 = vmax.f32 %v1209, -1.0
  %v1211 = vadd.f32 %v610, 1.0
  %v1212 = vadd.f32 %v650, 1.0
  %v1213 = vadd.f32 %v690, 1.0
  %v1214 = vadd.f32 %v730, 1.0
  %v1215 = vadd.f32 %v770, 1.0
  %v1216 = vadd.f32 %v810, 1.0
  %v1217 = vadd.f32 %v850, 1.0
  %v1218 = vadd.f32 %v890, 1.0
  %v1219 = vadd.f32 %v930, 1.0
  %v1220 = vadd.f32 %v970, 1.0
  %v1221 = vadd.f32 %v1010, 1.0
  %v1222 = vadd.f32 %v1050, 1.0
  %v1223 = vadd.f32 %v1090, 1.0
  %v1224 = vadd.f32 %v1130, 1.0
  %v1225 = vadd.f32 %v1170, 1.0
  %v1226 = vadd.f32 %v1210, 1.0
  %v1227 = vmul.f32 %v539, %v1211
  %v1228 = vmul.f32 %v540, %v1212
  %v1229 = vmul.f32 %v541, %v1213
  %v1230 = vmul.f32 %v542, %v1214
  %v1231 = vmul.f32 %v543, %v1215
  %v1232 = vmul.f32 %v544, %v1216
  %v1233 = vmul.f32 %v545, %v1217
  %v1234 = vmul.f32 %v546, %v1218
  %v1235 = vmul.f32 %v547, %v1219
  %v1236 = vmul.f32 %v548, %v1220
  %v1237 = vmul.f32 %v549, %v1221
  %v1238 = vmul.f32 %v550, %v1222
  %v1239 = vmul.f32 %v551, %v1223
  %v1240 = vmul.f32 %v552, %v1224
  %v1241 = vmul.f32 %v553, %v1225
  %v1242 = vmul.f32 %v554, %v1226
  %v1244 = vsel %vm97, %v37, 0
  %v1247 = vsel %vm97, %v38, 0
  %v1250 = vsel %vm97, %v39, 0
  %v1253 = vsel %vm97, %v40, 0
  %1255 = vmatpush.msra.mxu0 0.0
  %1256 = vmatpush.msra.mxu0 0.0
  %1257 = vmatpush.msra.mxu0 0.0
  %1258 = vmatpush.msra.mxu0 0.0
  %1259 = vmatpush.msra.mxu0 0.0
  %1260 = vmatpush.msra.mxu0 0.0
  %1261 = vmatpush.msra.mxu0 0.0
  %1262 = vmatpush.msra.mxu0 0.0
  %1263 = vmatpush.msra.mxu0 %v1241
  %1264 = vmatpush.msra.mxu0 %v1239
  %1265 = vmatpush.msra.mxu0 %v1237
  %1266 = vmatpush.msra.mxu0 %v1235
  %1267 = vmatpush.msra.mxu0 %v1233
  %1268 = vmatpush.msra.mxu0 %v1231
  %1269 = vmatpush.msra.mxu0 %v1229
  %1270 = vmatpush.msra.mxu0 %v1227
  %1271 = vmatmul.f32.gmra.mxu0 %v1244
  %v1272 = vpop.f32.mrf.mxu0
  %v1273 = vadd.f32 0.0, %v1272
  %1274 = vmatmul.f32.gmra.mxu0 %v1247
  %v1275 = vpop.f32.mrf.mxu0
  %v1276 = vadd.f32 0.0, %v1275
  %1277 = vmatmul.f32.gmra.mxu0 %v1250
  %v1278 = vpop.f32.mrf.mxu0
  %v1279 = vadd.f32 0.0, %v1278
  %1280 = vmatmul.f32.gmra.mxu0 %v1253
  %v1281 = vpop.f32.mrf.mxu0
  %v1282 = vadd.f32 0.0, %v1281
  %1283 = vdwg.mxu0
  %1284 = vmatpush.msra.mxu0 0.0
  %1285 = vmatpush.msra.mxu0 0.0
  %1286 = vmatpush.msra.mxu0 0.0
  %1287 = vmatpush.msra.mxu0 0.0
  %1288 = vmatpush.msra.mxu0 0.0
  %1289 = vmatpush.msra.mxu0 0.0
  %1290 = vmatpush.msra.mxu0 0.0
  %1291 = vmatpush.msra.mxu0 0.0
  %1292 = vmatpush.msra.mxu0 %v1242
  %1293 = vmatpush.msra.mxu0 %v1240
  %1294 = vmatpush.msra.mxu0 %v1238
  %1295 = vmatpush.msra.mxu0 %v1236
  %1296 = vmatpush.msra.mxu0 %v1234
  %1297 = vmatpush.msra.mxu0 %v1232
  %1298 = vmatpush.msra.mxu0 %v1230
  %1299 = vmatpush.msra.mxu0 %v1228
  %1300 = vmatmul.f32.gmra.mxu0 %v1244
  %v1301 = vpop.f32.mrf.mxu0
  %v1302 = vadd.f32 0.0, %v1301
  %1303 = vmatmul.f32.gmra.mxu0 %v1247
  %v1304 = vpop.f32.mrf.mxu0
  %v1305 = vadd.f32 0.0, %v1304
  %1306 = vmatmul.f32.gmra.mxu0 %v1250
  %v1307 = vpop.f32.mrf.mxu0
  %v1308 = vadd.f32 0.0, %v1307
  %1309 = vmatmul.f32.gmra.mxu0 %v1253
  %v1310 = vpop.f32.mrf.mxu0
  %v1311 = vadd.f32 0.0, %v1310
  %1312 = vdwg.mxu0
  %v1313 = vadd.f32 %v1273, %v1302
  %1314 = vadd.xlane.f32.xlu0 %v1313
  %v1315 = vpop.xlane.xlu0 %1314
  %v1316 = vadd.f32 %v1276, %v1305
  %1317 = vadd.xlane.f32.xlu0 %v1316
  %v1318 = vpop.xlane.xlu0 %1317
  %v1319 = vadd.f32 %v1279, %v1308
  %1320 = vadd.xlane.f32.xlu0 %v1319
  %v1321 = vpop.xlane.xlu0 %1320
  %v1322 = vadd.f32 %v1282, %v1311
  %1323 = vadd.xlane.f32.xlu0 %v1322
  %v1324 = vpop.xlane.xlu0 %1323
  %v1325 = vmul.f32 %v1315, %v234
  %v1326 = vmul.f32 %v1318, %v234
  %v1327 = vmul.f32 %v1321, %v234
  %v1328 = vmul.f32 %v1324, %v234
  %v1329 = vmul.f32 %v1273, %v1273
  %v1330 = vmul.f32 %v1302, %v1302
  %v1331 = vmul.f32 %v1276, %v1276
  %v1332 = vmul.f32 %v1305, %v1305
  %v1333 = vmul.f32 %v1279, %v1279
  %v1334 = vmul.f32 %v1308, %v1308
  %v1335 = vmul.f32 %v1282, %v1282
  %v1336 = vmul.f32 %v1311, %v1311
  %v1337 = vadd.f32 %v1329, %v1330
  %1338 = vadd.xlane.f32.xlu0 %v1337
  %v1339 = vpop.xlane.xlu0 %1338
  %v1340 = vadd.f32 %v1331, %v1332
  %1341 = vadd.xlane.f32.xlu0 %v1340
  %v1342 = vpop.xlane.xlu0 %1341
  %v1343 = vadd.f32 %v1333, %v1334
  %1344 = vadd.xlane.f32.xlu0 %v1343
  %v1345 = vpop.xlane.xlu0 %1344
  %v1346 = vadd.f32 %v1335, %v1336
  %1347 = vadd.xlane.f32.xlu0 %v1346
  %v1348 = vpop.xlane.xlu0 %1347
  %v1349 = vmul.f32 %v1339, %v234
  %v1350 = vmul.f32 %v1342, %v234
  %v1351 = vmul.f32 %v1345, %v234
  %v1352 = vmul.f32 %v1348, %v234
  %v1353 = vmul.f32 %v1325, %v1325
  %v1354 = vmul.f32 %v1326, %v1326
  %v1355 = vmul.f32 %v1327, %v1327
  %v1356 = vmul.f32 %v1328, %v1328
  %v1357 = vsub.f32 %v1349, %v1353
  %v1358 = vsub.f32 %v1350, %v1354
  %v1359 = vsub.f32 %v1351, %v1355
  %v1360 = vsub.f32 %v1352, %v1356
  %v1361 = vsub.f32 %v1273, %v1325
  %v1362 = vsub.f32 %v1302, %v1325
  %v1363 = vsub.f32 %v1276, %v1326
  %v1364 = vsub.f32 %v1305, %v1326
  %v1365 = vsub.f32 %v1279, %v1327
  %v1366 = vsub.f32 %v1308, %v1327
  %v1367 = vsub.f32 %v1282, %v1328
  %v1368 = vsub.f32 %v1311, %v1328
  %v1369 = vadd.f32 %v1357, 1e-05
  %v1370 = vadd.f32 %v1358, 1e-05
  %v1371 = vadd.f32 %v1359, 1e-05
  %v1372 = vadd.f32 %v1360, 1e-05
  %v1373 = vrsqrt.pop %v1369
  %v1374 = vmul.f32 %v1373, %v1369
  %v1375 = vmul.f32 %v1374, %v1373
  %v1376 = vmul.f32 0.5, %v1375
  %v1377 = vsub.f32 1.5, %v1376
  %v1378 = vmul.f32 %v1373, %v1377
  %vm1379 = vweird.f32 %v1369
  %vm1380 = vweird.f32 %v1373
  %vm1381 = vmor %vm1379, %vm1380
  %v1382 = vsel %vm1381, %v1373, %v1378
  %v1383 = vrsqrt.pop %v1370
  %v1384 = vmul.f32 %v1383, %v1370
  %v1385 = vmul.f32 %v1384, %v1383
  %v1386 = vmul.f32 0.5, %v1385
  %v1387 = vsub.f32 1.5, %v1386
  %v1388 = vmul.f32 %v1383, %v1387
  %vm1389 = vweird.f32 %v1370
  %vm1390 = vweird.f32 %v1383
  %vm1391 = vmor %vm1389, %vm1390
  %v1392 = vsel %vm1391, %v1383, %v1388
  %v1393 = vrsqrt.pop %v1371
  %v1394 = vmul.f32 %v1393, %v1371
  %v1395 = vmul.f32 %v1394, %v1393
  %v1396 = vmul.f32 0.5, %v1395
  %v1397 = vsub.f32 1.5, %v1396
  %v1398 = vmul.f32 %v1393, %v1397
  %vm1399 = vweird.f32 %v1371
  %vm1400 = vweird.f32 %v1393
  %vm1401 = vmor %vm1399, %vm1400
  %v1402 = vsel %vm1401, %v1393, %v1398
  %v1403 = vrsqrt.pop %v1372
  %v1404 = vmul.f32 %v1403, %v1372
  %v1405 = vmul.f32 %v1404, %v1403
  %v1406 = vmul.f32 0.5, %v1405
  %v1407 = vsub.f32 1.5, %v1406
  %v1408 = vmul.f32 %v1403, %v1407
  %vm1409 = vweird.f32 %v1372
  %vm1410 = vweird.f32 %v1403
  %vm1411 = vmor %vm1409, %vm1410
  %v1412 = vsel %vm1411, %v1403, %v1408
  %v1413 = vmul.f32 %v1361, %v1382
  %v1414 = vmul.f32 %v1362, %v1382
  %v1415 = vmul.f32 %v1363, %v1392
  %v1416 = vmul.f32 %v1364, %v1392
  %v1417 = vmul.f32 %v1365, %v1402
  %v1418 = vmul.f32 %v1366, %v1402
  %v1419 = vmul.f32 %v1367, %v1412
  %v1420 = vmul.f32 %v1368, %v1412
  %1422 = vset.pattern.permute.xlu0 0
  %1423 = vperm.xlu0 %1422, %v57
  %v1424 = vpop.permute.xlu0 %1423
  %1427 = vset.pattern.permute.xlu0 0
  %1428 = vperm.xlu0 %1427, %v58
  %v1429 = vpop.permute.xlu0 %1428
  %1432 = vset.pattern.permute.xlu0 0
  %1433 = vperm.xlu0 %1432, %v59
  %v1434 = vpop.permute.xlu0 %1433
  %1437 = vset.pattern.permute.xlu0 0
  %1438 = vperm.xlu0 %1437, %v60
  %v1439 = vpop.permute.xlu0 %1438
  %v1441 = vmul.f32 %v1413, %v1424
  %v1442 = vmul.f32 %v1414, %v1424
  %v1443 = vmul.f32 %v1415, %v1429
  %v1444 = vmul.f32 %v1416, %v1429
  %v1445 = vmul.f32 %v1417, %v1434
  %v1446 = vmul.f32 %v1418, %v1434
  %v1447 = vmul.f32 %v1419, %v1439
  %v1448 = vmul.f32 %v1420, %v1439
  %1450 = vset.pattern.permute.xlu0 0
  %1451 = vperm.xlu0 %1450, %v61
  %v1452 = vpop.permute.xlu0 %1451
  %1455 = vset.pattern.permute.xlu0 0
  %1456 = vperm.xlu0 %1455, %v62
  %v1457 = vpop.permute.xlu0 %1456
  %1460 = vset.pattern.permute.xlu0 0
  %1461 = vperm.xlu0 %1460, %v63
  %v1462 = vpop.permute.xlu0 %1461
  %1465 = vset.pattern.permute.xlu0 0
  %1466 = vperm.xlu0 %1465, %v64
  %v1467 = vpop.permute.xlu0 %1466
  %v1469 = vadd.f32 %v1441, %v1452
  %v1470 = vadd.f32 %v1442, %v1452
  %v1471 = vadd.f32 %v1443, %v1457
  %v1472 = vadd.f32 %v1444, %v1457
  %v1473 = vadd.f32 %v1445, %v1462
  %v1474 = vadd.f32 %v1446, %v1462
  %v1475 = vadd.f32 %v1447, %v1467
  %v1476 = vadd.f32 %v1448, %v1467
  %v1477 = vmul.f32 %v1469, 0.5
  %v1478 = vmul.f32 %v1470, 0.5
  %v1479 = vmul.f32 %v1471, 0.5
  %v1480 = vmul.f32 %v1472, 0.5
  %v1481 = vmul.f32 %v1473, 0.5
  %v1482 = vmul.f32 %v1474, 0.5
  %v1483 = vmul.f32 %v1475, 0.5
  %v1484 = vmul.f32 %v1476, 0.5
  %v1485 = vmul.f32 %v1469, 0.70710677
  %v1486 = vmul.f32 %v1470, 0.70710677
  %v1487 = vmul.f32 %v1471, 0.70710677
  %v1488 = vmul.f32 %v1472, 0.70710677
  %v1489 = vmul.f32 %v1473, 0.70710677
  %v1490 = vmul.f32 %v1474, 0.70710677
  %v1491 = vmul.f32 %v1475, 0.70710677
  %v1492 = vmul.f32 %v1476, 0.70710677
  %v1493 = vmul.f32 %v1485, %v1485
  %v1494 = vmin.f32 16.0, %v1493
  %v1495 = vmul.f32 %v1494, 2.1237322e-06
  %v1496 = vadd.f32 %v1495, 0.00028619796
  %v1497 = vmul.f32 %v1494, %v1496
  %v1498 = vadd.f32 %v1497, 0.0036580483
  %v1499 = vmul.f32 %v1494, %v1498
  %v1500 = vadd.f32 %v1499, 0.05243302
  %v1501 = vmul.f32 %v1494, %v1500
  %v1502 = vadd.f32 %v1501, 0.18741608
  %v1503 = vmul.f32 %v1494, %v1502
  %v1504 = vadd.f32 %v1503, 1.1283791
  %v1505 = vmul.f32 %v1485, %v1504
  %v1506 = vmul.f32 %v1494, 3.8918573e-05
  %v1507 = vadd.f32 %v1506, 0.001143296
  %v1508 = vmul.f32 %v1494, %v1507
  %v1509 = vadd.f32 %v1508, 0.014752088
  %v1510 = vmul.f32 %v1494, %v1509
  %v1511 = vadd.f32 %v1510, 0.112945676
  %v1512 = vmul.f32 %v1494, %v1511
  %v1513 = vadd.f32 %v1512, 0.4994258
  %v1514 = vmul.f32 %v1494, %v1513
  %v1515 = vadd.f32 %v1514, 1.0
  %v1516 = vrcp.pop %v1515
  %v1517 = vmul.f32 %v1515, %v1516
  %v1518 = vsub.f32 1.0, %v1517
  %v1519 = vmul.f32 %v1516, %v1518
  %v1520 = vadd.f32 %v1516, %v1519
  %vm1521 = vweird.f32 %v1515
  %vm1522 = vweird.f32 %v1516
  %vm1523 = vmor %vm1521, %vm1522
  %v1524 = vsel %vm1523, %v1516, %v1520
  %v1525 = vand.u32 2147483647, %v1515
  %vm1526 = vcmp.eq.f32.partialorder %v1525, 8.507059e+37
  %v1527 = vand.u32 %v1515, 2147483648
  %v1528 = vor.u32 1.1754944e-38, %v1527
  %v1529 = vsel %vm1526, %v1528, %v1524
  %v1530 = vmul.f32 %v1505, %v1529
  %v1531 = vmin.f32 %v1530, 1.0
  %v1532 = vmax.f32 %v1531, -1.0
  %v1533 = vmul.f32 %v1486, %v1486
  %v1534 = vmin.f32 16.0, %v1533
  %v1535 = vmul.f32 %v1534, 2.1237322e-06
  %v1536 = vadd.f32 %v1535, 0.00028619796
  %v1537 = vmul.f32 %v1534, %v1536
  %v1538 = vadd.f32 %v1537, 0.0036580483
  %v1539 = vmul.f32 %v1534, %v1538
  %v1540 = vadd.f32 %v1539, 0.05243302
  %v1541 = vmul.f32 %v1534, %v1540
  %v1542 = vadd.f32 %v1541, 0.18741608
  %v1543 = vmul.f32 %v1534, %v1542
  %v1544 = vadd.f32 %v1543, 1.1283791
  %v1545 = vmul.f32 %v1486, %v1544
  %v1546 = vmul.f32 %v1534, 3.8918573e-05
  %v1547 = vadd.f32 %v1546, 0.001143296
  %v1548 = vmul.f32 %v1534, %v1547
  %v1549 = vadd.f32 %v1548, 0.014752088
  %v1550 = vmul.f32 %v1534, %v1549
  %v1551 = vadd.f32 %v1550, 0.112945676
  %v1552 = vmul.f32 %v1534, %v1551
  %v1553 = vadd.f32 %v1552, 0.4994258
  %v1554 = vmul.f32 %v1534, %v1553
  %v1555 = vadd.f32 %v1554, 1.0
  %v1556 = vrcp.pop %v1555
  %v1557 = vmul.f32 %v1555, %v1556
  %v1558 = vsub.f32 1.0, %v1557
  %v1559 = vmul.f32 %v1556, %v1558
  %v1560 = vadd.f32 %v1556, %v1559
  %vm1561 = vweird.f32 %v1555
  %vm1562 = vweird.f32 %v1556
  %vm1563 = vmor %vm1561, %vm1562
  %v1564 = vsel %vm1563, %v1556, %v1560
  %v1565 = vand.u32 2147483647, %v1555
  %vm1566 = vcmp.eq.f32.partialorder %v1565, 8.507059e+37
  %v1567 = vand.u32 %v1555, 2147483648
  %v1568 = vor.u32 1.1754944e-38, %v1567
  %v1569 = vsel %vm1566, %v1568, %v1564
  %v1570 = vmul.f32 %v1545, %v1569
  %v1571 = vmin.f32 %v1570, 1.0
  %v1572 = vmax.f32 %v1571, -1.0
  %v1573 = vmul.f32 %v1487, %v1487
  %v1574 = vmin.f32 16.0, %v1573
  %v1575 = vmul.f32 %v1574, 2.1237322e-06
  %v1576 = vadd.f32 %v1575, 0.00028619796
  %v1577 = vmul.f32 %v1574, %v1576
  %v1578 = vadd.f32 %v1577, 0.0036580483
  %v1579 = vmul.f32 %v1574, %v1578
  %v1580 = vadd.f32 %v1579, 0.05243302
  %v1581 = vmul.f32 %v1574, %v1580
  %v1582 = vadd.f32 %v1581, 0.18741608
  %v1583 = vmul.f32 %v1574, %v1582
  %v1584 = vadd.f32 %v1583, 1.1283791
  %v1585 = vmul.f32 %v1487, %v1584
  %v1586 = vmul.f32 %v1574, 3.8918573e-05
  %v1587 = vadd.f32 %v1586, 0.001143296
  %v1588 = vmul.f32 %v1574, %v1587
  %v1589 = vadd.f32 %v1588, 0.014752088
  %v1590 = vmul.f32 %v1574, %v1589
  %v1591 = vadd.f32 %v1590, 0.112945676
  %v1592 = vmul.f32 %v1574, %v1591
  %v1593 = vadd.f32 %v1592, 0.4994258
  %v1594 = vmul.f32 %v1574, %v1593
  %v1595 = vadd.f32 %v1594, 1.0
  %v1596 = vrcp.pop %v1595
  %v1597 = vmul.f32 %v1595, %v1596
  %v1598 = vsub.f32 1.0, %v1597
  %v1599 = vmul.f32 %v1596, %v1598
  %v1600 = vadd.f32 %v1596, %v1599
  %vm1601 = vweird.f32 %v1595
  %vm1602 = vweird.f32 %v1596
  %vm1603 = vmor %vm1601, %vm1602
  %v1604 = vsel %vm1603, %v1596, %v1600
  %v1605 = vand.u32 2147483647, %v1595
  %vm1606 = vcmp.eq.f32.partialorder %v1605, 8.507059e+37
  %v1607 = vand.u32 %v1595, 2147483648
  %v1608 = vor.u32 1.1754944e-38, %v1607
  %v1609 = vsel %vm1606, %v1608, %v1604
  %v1610 = vmul.f32 %v1585, %v1609
  %v1611 = vmin.f32 %v1610, 1.0
  %v1612 = vmax.f32 %v1611, -1.0
  %v1613 = vmul.f32 %v1488, %v1488
  %v1614 = vmin.f32 16.0, %v1613
  %v1615 = vmul.f32 %v1614, 2.1237322e-06
  %v1616 = vadd.f32 %v1615, 0.00028619796
  %v1617 = vmul.f32 %v1614, %v1616
  %v1618 = vadd.f32 %v1617, 0.0036580483
  %v1619 = vmul.f32 %v1614, %v1618
  %v1620 = vadd.f32 %v1619, 0.05243302
  %v1621 = vmul.f32 %v1614, %v1620
  %v1622 = vadd.f32 %v1621, 0.18741608
  %v1623 = vmul.f32 %v1614, %v1622
  %v1624 = vadd.f32 %v1623, 1.1283791
  %v1625 = vmul.f32 %v1488, %v1624
  %v1626 = vmul.f32 %v1614, 3.8918573e-05
  %v1627 = vadd.f32 %v1626, 0.001143296
  %v1628 = vmul.f32 %v1614, %v1627
  %v1629 = vadd.f32 %v1628, 0.014752088
  %v1630 = vmul.f32 %v1614, %v1629
  %v1631 = vadd.f32 %v1630, 0.112945676
  %v1632 = vmul.f32 %v1614, %v1631
  %v1633 = vadd.f32 %v1632, 0.4994258
  %v1634 = vmul.f32 %v1614, %v1633
  %v1635 = vadd.f32 %v1634, 1.0
  %v1636 = vrcp.pop %v1635
  %v1637 = vmul.f32 %v1635, %v1636
  %v1638 = vsub.f32 1.0, %v1637
  %v1639 = vmul.f32 %v1636, %v1638
  %v1640 = vadd.f32 %v1636, %v1639
  %vm1641 = vweird.f32 %v1635
  %vm1642 = vweird.f32 %v1636
  %vm1643 = vmor %vm1641, %vm1642
  %v1644 = vsel %vm1643, %v1636, %v1640
  %v1645 = vand.u32 2147483647, %v1635
  %vm1646 = vcmp.eq.f32.partialorder %v1645, 8.507059e+37
  %v1647 = vand.u32 %v1635, 2147483648
  %v1648 = vor.u32 1.1754944e-38, %v1647
  %v1649 = vsel %vm1646, %v1648, %v1644
  %v1650 = vmul.f32 %v1625, %v1649
  %v1651 = vmin.f32 %v1650, 1.0
  %v1652 = vmax.f32 %v1651, -1.0
  %v1653 = vmul.f32 %v1489, %v1489
  %v1654 = vmin.f32 16.0, %v1653
  %v1655 = vmul.f32 %v1654, 2.1237322e-06
  %v1656 = vadd.f32 %v1655, 0.00028619796
  %v1657 = vmul.f32 %v1654, %v1656
  %v1658 = vadd.f32 %v1657, 0.0036580483
  %v1659 = vmul.f32 %v1654, %v1658
  %v1660 = vadd.f32 %v1659, 0.05243302
  %v1661 = vmul.f32 %v1654, %v1660
  %v1662 = vadd.f32 %v1661, 0.18741608
  %v1663 = vmul.f32 %v1654, %v1662
  %v1664 = vadd.f32 %v1663, 1.1283791
  %v1665 = vmul.f32 %v1489, %v1664
  %v1666 = vmul.f32 %v1654, 3.8918573e-05
  %v1667 = vadd.f32 %v1666, 0.001143296
  %v1668 = vmul.f32 %v1654, %v1667
  %v1669 = vadd.f32 %v1668, 0.014752088
  %v1670 = vmul.f32 %v1654, %v1669
  %v1671 = vadd.f32 %v1670, 0.112945676
  %v1672 = vmul.f32 %v1654, %v1671
  %v1673 = vadd.f32 %v1672, 0.4994258
  %v1674 = vmul.f32 %v1654, %v1673
  %v1675 = vadd.f32 %v1674, 1.0
  %v1676 = vrcp.pop %v1675
  %v1677 = vmul.f32 %v1675, %v1676
  %v1678 = vsub.f32 1.0, %v1677
  %v1679 = vmul.f32 %v1676, %v1678
  %v1680 = vadd.f32 %v1676, %v1679
  %vm1681 = vweird.f32 %v1675
  %vm1682 = vweird.f32 %v1676
  %vm1683 = vmor %vm1681, %vm1682
  %v1684 = vsel %vm1683, %v1676, %v1680
  %v1685 = vand.u32 2147483647, %v1675
  %vm1686 = vcmp.eq.f32.partialorder %v1685, 8.507059e+37
  %v1687 = vand.u32 %v1675, 2147483648
  %v1688 = vor.u32 1.1754944e-38, %v1687
  %v1689 = vsel %vm1686, %v1688, %v1684
  %v1690 = vmul.f32 %v1665, %v1689
  %v1691 = vmin.f32 %v1690, 1.0
  %v1692 = vmax.f32 %v1691, -1.0
  %v1693 = vmul.f32 %v1490, %v1490
  %v1694 = vmin.f32 16.0, %v1693
  %v1695 = vmul.f32 %v1694, 2.1237322e-06
  %v1696 = vadd.f32 %v1695, 0.00028619796
  %v1697 = vmul.f32 %v1694, %v1696
  %v1698 = vadd.f32 %v1697, 0.0036580483
  %v1699 = vmul.f32 %v1694, %v1698
  %v1700 = vadd.f32 %v1699, 0.05243302
  %v1701 = vmul.f32 %v1694, %v1700
  %v1702 = vadd.f32 %v1701, 0.18741608
  %v1703 = vmul.f32 %v1694, %v1702
  %v1704 = vadd.f32 %v1703, 1.1283791
  %v1705 = vmul.f32 %v1490, %v1704
  %v1706 = vmul.f32 %v1694, 3.8918573e-05
  %v1707 = vadd.f32 %v1706, 0.001143296
  %v1708 = vmul.f32 %v1694, %v1707
  %v1709 = vadd.f32 %v1708, 0.014752088
  %v1710 = vmul.f32 %v1694, %v1709
  %v1711 = vadd.f32 %v1710, 0.112945676
  %v1712 = vmul.f32 %v1694, %v1711
  %v1713 = vadd.f32 %v1712, 0.4994258
  %v1714 = vmul.f32 %v1694, %v1713
  %v1715 = vadd.f32 %v1714, 1.0
  %v1716 = vrcp.pop %v1715
  %v1717 = vmul.f32 %v1715, %v1716
  %v1718 = vsub.f32 1.0, %v1717
  %v1719 = vmul.f32 %v1716, %v1718
  %v1720 = vadd.f32 %v1716, %v1719
  %vm1721 = vweird.f32 %v1715
  %vm1722 = vweird.f32 %v1716
  %vm1723 = vmor %vm1721, %vm1722
  %v1724 = vsel %vm1723, %v1716, %v1720
  %v1725 = vand.u32 2147483647, %v1715
  %vm1726 = vcmp.eq.f32.partialorder %v1725, 8.507059e+37
  %v1727 = vand.u32 %v1715, 2147483648
  %v1728 = vor.u32 1.1754944e-38, %v1727
  %v1729 = vsel %vm1726, %v1728, %v1724
  %v1730 = vmul.f32 %v1705, %v1729
  %v1731 = vmin.f32 %v1730, 1.0
  %v1732 = vmax.f32 %v1731, -1.0
  %v1733 = vmul.f32 %v1491, %v1491
  %v1734 = vmin.f32 16.0, %v1733
  %v1735 = vmul.f32 %v1734, 2.1237322e-06
  %v1736 = vadd.f32 %v1735, 0.00028619796
  %v1737 = vmul.f32 %v1734, %v1736
  %v1738 = vadd.f32 %v1737, 0.0036580483
  %v1739 = vmul.f32 %v1734, %v1738
  %v1740 = vadd.f32 %v1739, 0.05243302
  %v1741 = vmul.f32 %v1734, %v1740
  %v1742 = vadd.f32 %v1741, 0.18741608
  %v1743 = vmul.f32 %v1734, %v1742
  %v1744 = vadd.f32 %v1743, 1.1283791
  %v1745 = vmul.f32 %v1491, %v1744
  %v1746 = vmul.f32 %v1734, 3.8918573e-05
  %v1747 = vadd.f32 %v1746, 0.001143296
  %v1748 = vmul.f32 %v1734, %v1747
  %v1749 = vadd.f32 %v1748, 0.014752088
  %v1750 = vmul.f32 %v1734, %v1749
  %v1751 = vadd.f32 %v1750, 0.112945676
  %v1752 = vmul.f32 %v1734, %v1751
  %v1753 = vadd.f32 %v1752, 0.4994258
  %v1754 = vmul.f32 %v1734, %v1753
  %v1755 = vadd.f32 %v1754, 1.0
  %v1756 = vrcp.pop %v1755
  %v1757 = vmul.f32 %v1755, %v1756
  %v1758 = vsub.f32 1.0, %v1757
  %v1759 = vmul.f32 %v1756, %v1758
  %v1760 = vadd.f32 %v1756, %v1759
  %vm1761 = vweird.f32 %v1755
  %vm1762 = vweird.f32 %v1756
  %vm1763 = vmor %vm1761, %vm1762
  %v1764 = vsel %vm1763, %v1756, %v1760
  %v1765 = vand.u32 2147483647, %v1755
  %vm1766 = vcmp.eq.f32.partialorder %v1765, 8.507059e+37
  %v1767 = vand.u32 %v1755, 2147483648
  %v1768 = vor.u32 1.1754944e-38, %v1767
  %v1769 = vsel %vm1766, %v1768, %v1764
  %v1770 = vmul.f32 %v1745, %v1769
  %v1771 = vmin.f32 %v1770, 1.0
  %v1772 = vmax.f32 %v1771, -1.0
  %v1773 = vmul.f32 %v1492, %v1492
  %v1774 = vmin.f32 16.0, %v1773
  %v1775 = vmul.f32 %v1774, 2.1237322e-06
  %v1776 = vadd.f32 %v1775, 0.00028619796
  %v1777 = vmul.f32 %v1774, %v1776
  %v1778 = vadd.f32 %v1777, 0.0036580483
  %v1779 = vmul.f32 %v1774, %v1778
  %v1780 = vadd.f32 %v1779, 0.05243302
  %v1781 = vmul.f32 %v1774, %v1780
  %v1782 = vadd.f32 %v1781, 0.18741608
  %v1783 = vmul.f32 %v1774, %v1782
  %v1784 = vadd.f32 %v1783, 1.1283791
  %v1785 = vmul.f32 %v1492, %v1784
  %v1786 = vmul.f32 %v1774, 3.8918573e-05
  %v1787 = vadd.f32 %v1786, 0.001143296
  %v1788 = vmul.f32 %v1774, %v1787
  %v1789 = vadd.f32 %v1788, 0.014752088
  %v1790 = vmul.f32 %v1774, %v1789
  %v1791 = vadd.f32 %v1790, 0.112945676
  %v1792 = vmul.f32 %v1774, %v1791
  %v1793 = vadd.f32 %v1792, 0.4994258
  %v1794 = vmul.f32 %v1774, %v1793
  %v1795 = vadd.f32 %v1794, 1.0
  %v1796 = vrcp.pop %v1795
  %v1797 = vmul.f32 %v1795, %v1796
  %v1798 = vsub.f32 1.0, %v1797
  %v1799 = vmul.f32 %v1796, %v1798
  %v1800 = vadd.f32 %v1796, %v1799
  %vm1801 = vweird.f32 %v1795
  %vm1802 = vweird.f32 %v1796
  %vm1803 = vmor %vm1801, %vm1802
  %v1804 = vsel %vm1803, %v1796, %v1800
  %v1805 = vand.u32 2147483647, %v1795
  %vm1806 = vcmp.eq.f32.partialorder %v1805, 8.507059e+37
  %v1807 = vand.u32 %v1795, 2147483648
  %v1808 = vor.u32 1.1754944e-38, %v1807
  %v1809 = vsel %vm1806, %v1808, %v1804
  %v1810 = vmul.f32 %v1785, %v1809
  %v1811 = vmin.f32 %v1810, 1.0
  %v1812 = vmax.f32 %v1811, -1.0
  %v1813 = vadd.f32 %v1532, 1.0
  %v1814 = vadd.f32 %v1572, 1.0
  %v1815 = vadd.f32 %v1612, 1.0
  %v1816 = vadd.f32 %v1652, 1.0
  %v1817 = vadd.f32 %v1692, 1.0
  %v1818 = vadd.f32 %v1732, 1.0
  %v1819 = vadd.f32 %v1772, 1.0
  %v1820 = vadd.f32 %v1812, 1.0
  %v1821 = vmul.f32 %v1477, %v1813
  %v1822 = vmul.f32 %v1478, %v1814
  %v1823 = vmul.f32 %v1479, %v1815
  %v1824 = vmul.f32 %v1480, %v1816
  %v1825 = vmul.f32 %v1481, %v1817
  %v1826 = vmul.f32 %v1482, %v1818
  %v1827 = vmul.f32 %v1483, %v1819
  %v1828 = vmul.f32 %v1484, %v1820
  %1829 = vst [vmem:[%s8] sm:$0xff] %v1821
  %1830 = vst [vmem:[%s8 + $0x8] sm:$0xff] %v1822
  %1831 = vst [vmem:[%s8 + $0x10] sm:$0xff] %v1823
  %1832 = vst [vmem:[%s8 + $0x18] sm:$0xff] %v1824
  %1833 = vst [vmem:[%s8 + $0x20] sm:$0xff] %v1825
  %1834 = vst [vmem:[%s8 + $0x28] sm:$0xff] %v1826
  %1835 = vst [vmem:[%s8 + $0x30] sm:$0xff] %v1827
  %1836 = vst [vmem:[%s8 + $0x38] sm:$0xff] %v1828
  %1837 = vmatpush.msra.mxu0 0.0
  %1838 = vmatpush.msra.mxu0 0.0
  %1839 = vmatpush.msra.mxu0 0.0
  %1840 = vmatpush.msra.mxu0 0.0
  %1841 = vmatpush.msra.mxu0 0.0
  %1842 = vmatpush.msra.mxu0 0.0
  %1843 = vmatpush.msra.mxu0 0.0
  %1844 = vmatpush.msra.mxu0 0.0
  %1845 = vmatpush.msra.mxu0 %v95
  %1846 = vmatpush.msra.mxu0 %v93
  %1847 = vmatpush.msra.mxu0 %v91
  %1848 = vmatpush.msra.mxu0 %v89
  %1849 = vmatpush.msra.mxu0 %v79
  %1850 = vmatpush.msra.mxu0 %v77
  %1851 = vmatpush.msra.mxu0 %v75
  %1852 = vmatpush.msra.mxu0 %v73
  %1853 = vmatmul.f32.gmra.mxu0 %v99
  %v1854 = vpop.f32.mrf.mxu0
  %v1855 = vadd.f32 0.0, %v1854
  %1856 = vmatmul.f32.gmra.mxu0 %v102
  %v1857 = vpop.f32.mrf.mxu0
  %v1858 = vadd.f32 0.0, %v1857
  %1859 = vmatmul.f32.gmra.mxu0 %v105
  %v1860 = vpop.f32.mrf.mxu0
  %v1861 = vadd.f32 0.0, %v1860
  %1862 = vmatmul.f32.gmra.mxu0 %v108
  %v1863 = vpop.f32.mrf.mxu0
  %v1864 = vadd.f32 0.0, %v1863
  %1865 = vmatmul.f32.gmra.mxu0 %v111
  %v1866 = vpop.f32.mrf.mxu0
  %v1867 = vadd.f32 0.0, %v1866
  %1868 = vmatmul.f32.gmra.mxu0 %v114
  %v1869 = vpop.f32.mrf.mxu0
  %v1870 = vadd.f32 0.0, %v1869
  %1871 = vmatmul.f32.gmra.mxu0 %v117
  %v1872 = vpop.f32.mrf.mxu0
  %v1873 = vadd.f32 0.0, %v1872
  %1874 = vmatmul.f32.gmra.mxu0 %v120
  %v1875 = vpop.f32.mrf.mxu0
  %v1876 = vadd.f32 0.0, %v1875
  %1877 = vdwg.mxu0
  %1878 = vmatpush.msra.mxu0 0.0
  %1879 = vmatpush.msra.mxu0 0.0
  %1880 = vmatpush.msra.mxu0 0.0
  %1881 = vmatpush.msra.mxu0 0.0
  %1882 = vmatpush.msra.mxu0 0.0
  %1883 = vmatpush.msra.mxu0 0.0
  %1884 = vmatpush.msra.mxu0 0.0
  %1885 = vmatpush.msra.mxu0 0.0
  %1886 = vmatpush.msra.mxu0 %v96
  %1887 = vmatpush.msra.mxu0 %v94
  %1888 = vmatpush.msra.mxu0 %v92
  %1889 = vmatpush.msra.mxu0 %v90
  %1890 = vmatpush.msra.mxu0 %v80
  %1891 = vmatpush.msra.mxu0 %v78
  %1892 = vmatpush.msra.mxu0 %v76
  %1893 = vmatpush.msra.mxu0 %v74
  %1894 = vmatmul.f32.gmra.mxu0 %v99
  %v1895 = vpop.f32.mrf.mxu0
  %v1896 = vadd.f32 0.0, %v1895
  %1897 = vmatmul.f32.gmra.mxu0 %v102
  %v1898 = vpop.f32.mrf.mxu0
  %v1899 = vadd.f32 0.0, %v1898
  %1900 = vmatmul.f32.gmra.mxu0 %v105
  %v1901 = vpop.f32.mrf.mxu0
  %v1902 = vadd.f32 0.0, %v1901
  %1903 = vmatmul.f32.gmra.mxu0 %v108
  %v1904 = vpop.f32.mrf.mxu0
  %v1905 = vadd.f32 0.0, %v1904
  %1906 = vmatmul.f32.gmra.mxu0 %v111
  %v1907 = vpop.f32.mrf.mxu0
  %v1908 = vadd.f32 0.0, %v1907
  %1909 = vmatmul.f32.gmra.mxu0 %v114
  %v1910 = vpop.f32.mrf.mxu0
  %v1911 = vadd.f32 0.0, %v1910
  %1912 = vmatmul.f32.gmra.mxu0 %v117
  %v1913 = vpop.f32.mrf.mxu0
  %v1914 = vadd.f32 0.0, %v1913
  %1915 = vmatmul.f32.gmra.mxu0 %v120
  %v1916 = vpop.f32.mrf.mxu0
  %v1917 = vadd.f32 0.0, %v1916
  %1918 = vdwg.mxu0
  %v1919 = vadd.f32 %v1855, %v1896
  %1920 = vadd.xlane.f32.xlu0 %v1919
  %v1921 = vpop.xlane.xlu0 %1920
  %v1922 = vadd.f32 %v1858, %v1899
  %1923 = vadd.xlane.f32.xlu0 %v1922
  %v1924 = vpop.xlane.xlu0 %1923
  %v1925 = vadd.f32 %v1861, %v1902
  %1926 = vadd.xlane.f32.xlu0 %v1925
  %v1927 = vpop.xlane.xlu0 %1926
  %v1928 = vadd.f32 %v1864, %v1905
  %1929 = vadd.xlane.f32.xlu0 %v1928
  %v1930 = vpop.xlane.xlu0 %1929
  %v1931 = vadd.f32 %v1867, %v1908
  %1932 = vadd.xlane.f32.xlu0 %v1931
  %v1933 = vpop.xlane.xlu0 %1932
  %v1934 = vadd.f32 %v1870, %v1911
  %1935 = vadd.xlane.f32.xlu0 %v1934
  %v1936 = vpop.xlane.xlu0 %1935
  %v1937 = vadd.f32 %v1873, %v1914
  %1938 = vadd.xlane.f32.xlu0 %v1937
  %v1939 = vpop.xlane.xlu0 %1938
  %v1940 = vadd.f32 %v1876, %v1917
  %1941 = vadd.xlane.f32.xlu0 %v1940
  %v1942 = vpop.xlane.xlu0 %1941
  %v1943 = vmul.f32 %v1921, %v234
  %v1944 = vmul.f32 %v1924, %v234
  %v1945 = vmul.f32 %v1927, %v234
  %v1946 = vmul.f32 %v1930, %v234
  %v1947 = vmul.f32 %v1933, %v234
  %v1948 = vmul.f32 %v1936, %v234
  %v1949 = vmul.f32 %v1939, %v234
  %v1950 = vmul.f32 %v1942, %v234
  %v1951 = vmul.f32 %v1855, %v1855
  %v1952 = vmul.f32 %v1896, %v1896
  %v1953 = vmul.f32 %v1858, %v1858
  %v1954 = vmul.f32 %v1899, %v1899
  %v1955 = vmul.f32 %v1861, %v1861
  %v1956 = vmul.f32 %v1902, %v1902
  %v1957 = vmul.f32 %v1864, %v1864
  %v1958 = vmul.f32 %v1905, %v1905
  %v1959 = vmul.f32 %v1867, %v1867
  %v1960 = vmul.f32 %v1908, %v1908
  %v1961 = vmul.f32 %v1870, %v1870
  %v1962 = vmul.f32 %v1911, %v1911
  %v1963 = vmul.f32 %v1873, %v1873
  %v1964 = vmul.f32 %v1914, %v1914
  %v1965 = vmul.f32 %v1876, %v1876
  %v1966 = vmul.f32 %v1917, %v1917
  %v1967 = vadd.f32 %v1951, %v1952
  %1968 = vadd.xlane.f32.xlu0 %v1967
  %v1969 = vpop.xlane.xlu0 %1968
  %v1970 = vadd.f32 %v1953, %v1954
  %1971 = vadd.xlane.f32.xlu0 %v1970
  %v1972 = vpop.xlane.xlu0 %1971
  %v1973 = vadd.f32 %v1955, %v1956
  %1974 = vadd.xlane.f32.xlu0 %v1973
  %v1975 = vpop.xlane.xlu0 %1974
  %v1976 = vadd.f32 %v1957, %v1958
  %1977 = vadd.xlane.f32.xlu0 %v1976
  %v1978 = vpop.xlane.xlu0 %1977
  %v1979 = vadd.f32 %v1959, %v1960
  %1980 = vadd.xlane.f32.xlu0 %v1979
  %v1981 = vpop.xlane.xlu0 %1980
  %v1982 = vadd.f32 %v1961, %v1962
  %1983 = vadd.xlane.f32.xlu0 %v1982
  %v1984 = vpop.xlane.xlu0 %1983
  %v1985 = vadd.f32 %v1963, %v1964
  %1986 = vadd.xlane.f32.xlu0 %v1985
  %v1987 = vpop.xlane.xlu0 %1986
  %v1988 = vadd.f32 %v1965, %v1966
  %1989 = vadd.xlane.f32.xlu0 %v1988
  %v1990 = vpop.xlane.xlu0 %1989
  %v1991 = vmul.f32 %v1969, %v234
  %v1992 = vmul.f32 %v1972, %v234
  %v1993 = vmul.f32 %v1975, %v234
  %v1994 = vmul.f32 %v1978, %v234
  %v1995 = vmul.f32 %v1981, %v234
  %v1996 = vmul.f32 %v1984, %v234
  %v1997 = vmul.f32 %v1987, %v234
  %v1998 = vmul.f32 %v1990, %v234
  %v1999 = vmul.f32 %v1943, %v1943
  %v2000 = vmul.f32 %v1944, %v1944
  %v2001 = vmul.f32 %v1945, %v1945
  %v2002 = vmul.f32 %v1946, %v1946
  %v2003 = vmul.f32 %v1947, %v1947
  %v2004 = vmul.f32 %v1948, %v1948
  %v2005 = vmul.f32 %v1949, %v1949
  %v2006 = vmul.f32 %v1950, %v1950
  %v2007 = vsub.f32 %v1991, %v1999
  %v2008 = vsub.f32 %v1992, %v2000
  %v2009 = vsub.f32 %v1993, %v2001
  %v2010 = vsub.f32 %v1994, %v2002
  %v2011 = vsub.f32 %v1995, %v2003
  %v2012 = vsub.f32 %v1996, %v2004
  %v2013 = vsub.f32 %v1997, %v2005
  %v2014 = vsub.f32 %v1998, %v2006
  %v2015 = vsub.f32 %v1855, %v1943
  %v2016 = vsub.f32 %v1896, %v1943
  %v2017 = vsub.f32 %v1858, %v1944
  %v2018 = vsub.f32 %v1899, %v1944
  %v2019 = vsub.f32 %v1861, %v1945
  %v2020 = vsub.f32 %v1902, %v1945
  %v2021 = vsub.f32 %v1864, %v1946
  %v2022 = vsub.f32 %v1905, %v1946
  %v2023 = vsub.f32 %v1867, %v1947
  %v2024 = vsub.f32 %v1908, %v1947
  %v2025 = vsub.f32 %v1870, %v1948
  %v2026 = vsub.f32 %v1911, %v1948
  %v2027 = vsub.f32 %v1873, %v1949
  %v2028 = vsub.f32 %v1914, %v1949
  %v2029 = vsub.f32 %v1876, %v1950
  %v2030 = vsub.f32 %v1917, %v1950
  %v2031 = vadd.f32 %v2007, 1e-05
  %v2032 = vadd.f32 %v2008, 1e-05
  %v2033 = vadd.f32 %v2009, 1e-05
  %v2034 = vadd.f32 %v2010, 1e-05
  %v2035 = vadd.f32 %v2011, 1e-05
  %v2036 = vadd.f32 %v2012, 1e-05
  %v2037 = vadd.f32 %v2013, 1e-05
  %v2038 = vadd.f32 %v2014, 1e-05
  %v2039 = vrsqrt.pop %v2031
  %v2040 = vmul.f32 %v2039, %v2031
  %v2041 = vmul.f32 %v2040, %v2039
  %v2042 = vmul.f32 0.5, %v2041
  %v2043 = vsub.f32 1.5, %v2042
  %v2044 = vmul.f32 %v2039, %v2043
  %vm2045 = vweird.f32 %v2031
  %vm2046 = vweird.f32 %v2039
  %vm2047 = vmor %vm2045, %vm2046
  %v2048 = vsel %vm2047, %v2039, %v2044
  %v2049 = vrsqrt.pop %v2032
  %v2050 = vmul.f32 %v2049, %v2032
  %v2051 = vmul.f32 %v2050, %v2049
  %v2052 = vmul.f32 0.5, %v2051
  %v2053 = vsub.f32 1.5, %v2052
  %v2054 = vmul.f32 %v2049, %v2053
  %vm2055 = vweird.f32 %v2032
  %vm2056 = vweird.f32 %v2049
  %vm2057 = vmor %vm2055, %vm2056
  %v2058 = vsel %vm2057, %v2049, %v2054
  %v2059 = vrsqrt.pop %v2033
  %v2060 = vmul.f32 %v2059, %v2033
  %v2061 = vmul.f32 %v2060, %v2059
  %v2062 = vmul.f32 0.5, %v2061
  %v2063 = vsub.f32 1.5, %v2062
  %v2064 = vmul.f32 %v2059, %v2063
  %vm2065 = vweird.f32 %v2033
  %vm2066 = vweird.f32 %v2059
  %vm2067 = vmor %vm2065, %vm2066
  %v2068 = vsel %vm2067, %v2059, %v2064
  %v2069 = vrsqrt.pop %v2034
  %v2070 = vmul.f32 %v2069, %v2034
  %v2071 = vmul.f32 %v2070, %v2069
  %v2072 = vmul.f32 0.5, %v2071
  %v2073 = vsub.f32 1.5, %v2072
  %v2074 = vmul.f32 %v2069, %v2073
  %vm2075 = vweird.f32 %v2034
  %vm2076 = vweird.f32 %v2069
  %vm2077 = vmor %vm2075, %vm2076
  %v2078 = vsel %vm2077, %v2069, %v2074
  %v2079 = vrsqrt.pop %v2035
  %v2080 = vmul.f32 %v2079, %v2035
  %v2081 = vmul.f32 %v2080, %v2079
  %v2082 = vmul.f32 0.5, %v2081
  %v2083 = vsub.f32 1.5, %v2082
  %v2084 = vmul.f32 %v2079, %v2083
  %vm2085 = vweird.f32 %v2035
  %vm2086 = vweird.f32 %v2079
  %vm2087 = vmor %vm2085, %vm2086
  %v2088 = vsel %vm2087, %v2079, %v2084
  %v2089 = vrsqrt.pop %v2036
  %v2090 = vmul.f32 %v2089, %v2036
  %v2091 = vmul.f32 %v2090, %v2089
  %v2092 = vmul.f32 0.5, %v2091
  %v2093 = vsub.f32 1.5, %v2092
  %v2094 = vmul.f32 %v2089, %v2093
  %vm2095 = vweird.f32 %v2036
  %vm2096 = vweird.f32 %v2089
  %vm2097 = vmor %vm2095, %vm2096
  %v2098 = vsel %vm2097, %v2089, %v2094
  %v2099 = vrsqrt.pop %v2037
  %v2100 = vmul.f32 %v2099, %v2037
  %v2101 = vmul.f32 %v2100, %v2099
  %v2102 = vmul.f32 0.5, %v2101
  %v2103 = vsub.f32 1.5, %v2102
  %v2104 = vmul.f32 %v2099, %v2103
  %vm2105 = vweird.f32 %v2037
  %vm2106 = vweird.f32 %v2099
  %vm2107 = vmor %vm2105, %vm2106
  %v2108 = vsel %vm2107, %v2099, %v2104
  %v2109 = vrsqrt.pop %v2038
  %v2110 = vmul.f32 %v2109, %v2038
  %v2111 = vmul.f32 %v2110, %v2109
  %v2112 = vmul.f32 0.5, %v2111
  %v2113 = vsub.f32 1.5, %v2112
  %v2114 = vmul.f32 %v2109, %v2113
  %vm2115 = vweird.f32 %v2038
  %vm2116 = vweird.f32 %v2109
  %vm2117 = vmor %vm2115, %vm2116
  %v2118 = vsel %vm2117, %v2109, %v2114
  %v2119 = vmul.f32 %v2015, %v2048
  %v2120 = vmul.f32 %v2016, %v2048
  %v2121 = vmul.f32 %v2017, %v2058
  %v2122 = vmul.f32 %v2018, %v2058
  %v2123 = vmul.f32 %v2019, %v2068
  %v2124 = vmul.f32 %v2020, %v2068
  %v2125 = vmul.f32 %v2021, %v2078
  %v2126 = vmul.f32 %v2022, %v2078
  %v2127 = vmul.f32 %v2023, %v2088
  %v2128 = vmul.f32 %v2024, %v2088
  %v2129 = vmul.f32 %v2025, %v2098
  %v2130 = vmul.f32 %v2026, %v2098
  %v2131 = vmul.f32 %v2027, %v2108
  %v2132 = vmul.f32 %v2028, %v2108
  %v2133 = vmul.f32 %v2029, %v2118
  %v2134 = vmul.f32 %v2030, %v2118
  %v2135 = vmul.f32 %v2119, %v430
  %v2136 = vmul.f32 %v2120, %v430
  %v2137 = vmul.f32 %v2121, %v435
  %v2138 = vmul.f32 %v2122, %v435
  %v2139 = vmul.f32 %v2123, %v440
  %v2140 = vmul.f32 %v2124, %v440
  %v2141 = vmul.f32 %v2125, %v445
  %v2142 = vmul.f32 %v2126, %v445
  %v2143 = vmul.f32 %v2127, %v450
  %v2144 = vmul.f32 %v2128, %v450
  %v2145 = vmul.f32 %v2129, %v455
  %v2146 = vmul.f32 %v2130, %v455
  %v2147 = vmul.f32 %v2131, %v460
  %v2148 = vmul.f32 %v2132, %v460
  %v2149 = vmul.f32 %v2133, %v465
  %v2150 = vmul.f32 %v2134, %v465
  %v2151 = vadd.f32 %v2135, %v486
  %v2152 = vadd.f32 %v2136, %v486
  %v2153 = vadd.f32 %v2137, %v491
  %v2154 = vadd.f32 %v2138, %v491
  %v2155 = vadd.f32 %v2139, %v496
  %v2156 = vadd.f32 %v2140, %v496
  %v2157 = vadd.f32 %v2141, %v501
  %v2158 = vadd.f32 %v2142, %v501
  %v2159 = vadd.f32 %v2143, %v506
  %v2160 = vadd.f32 %v2144, %v506
  %v2161 = vadd.f32 %v2145, %v511
  %v2162 = vadd.f32 %v2146, %v511
  %v2163 = vadd.f32 %v2147, %v516
  %v2164 = vadd.f32 %v2148, %v516
  %v2165 = vadd.f32 %v2149, %v521
  %v2166 = vadd.f32 %v2150, %v521
  %v2167 = vmul.f32 %v2151, 0.5
  %v2168 = vmul.f32 %v2152, 0.5
  %v2169 = vmul.f32 %v2153, 0.5
  %v2170 = vmul.f32 %v2154, 0.5
  %v2171 = vmul.f32 %v2155, 0.5
  %v2172 = vmul.f32 %v2156, 0.5
  %v2173 = vmul.f32 %v2157, 0.5
  %v2174 = vmul.f32 %v2158, 0.5
  %v2175 = vmul.f32 %v2159, 0.5
  %v2176 = vmul.f32 %v2160, 0.5
  %v2177 = vmul.f32 %v2161, 0.5
  %v2178 = vmul.f32 %v2162, 0.5
  %v2179 = vmul.f32 %v2163, 0.5
  %v2180 = vmul.f32 %v2164, 0.5
  %v2181 = vmul.f32 %v2165, 0.5
  %v2182 = vmul.f32 %v2166, 0.5
  %v2183 = vmul.f32 %v2151, 0.70710677
  %v2184 = vmul.f32 %v2152, 0.70710677
  %v2185 = vmul.f32 %v2153, 0.70710677
  %v2186 = vmul.f32 %v2154, 0.70710677
  %v2187 = vmul.f32 %v2155, 0.70710677
  %v2188 = vmul.f32 %v2156, 0.70710677
  %v2189 = vmul.f32 %v2157, 0.70710677
  %v2190 = vmul.f32 %v2158, 0.70710677
  %v2191 = vmul.f32 %v2159, 0.70710677
  %v2192 = vmul.f32 %v2160, 0.70710677
  %v2193 = vmul.f32 %v2161, 0.70710677
  %v2194 = vmul.f32 %v2162, 0.70710677
  %v2195 = vmul.f32 %v2163, 0.70710677
  %v2196 = vmul.f32 %v2164, 0.70710677
  %v2197 = vmul.f32 %v2165, 0.70710677
  %v2198 = vmul.f32 %v2166, 0.70710677
  %v2199 = vmul.f32 %v2183, %v2183
  %v2200 = vmin.f32 16.0, %v2199
  %v2201 = vmul.f32 %v2200, 2.1237322e-06
  %v2202 = vadd.f32 %v2201, 0.00028619796
  %v2203 = vmul.f32 %v2200, %v2202
  %v2204 = vadd.f32 %v2203, 0.0036580483
  %v2205 = vmul.f32 %v2200, %v2204
  %v2206 = vadd.f32 %v2205, 0.05243302
  %v2207 = vmul.f32 %v2200, %v2206
  %v2208 = vadd.f32 %v2207, 0.18741608
  %v2209 = vmul.f32 %v2200, %v2208
  %v2210 = vadd.f32 %v2209, 1.1283791
  %v2211 = vmul.f32 %v2183, %v2210
  %v2212 = vmul.f32 %v2200, 3.8918573e-05
  %v2213 = vadd.f32 %v2212, 0.001143296
  %v2214 = vmul.f32 %v2200, %v2213
  %v2215 = vadd.f32 %v2214, 0.014752088
  %v2216 = vmul.f32 %v2200, %v2215
  %v2217 = vadd.f32 %v2216, 0.112945676
  %v2218 = vmul.f32 %v2200, %v2217
  %v2219 = vadd.f32 %v2218, 0.4994258
  %v2220 = vmul.f32 %v2200, %v2219
  %v2221 = vadd.f32 %v2220, 1.0
  %v2222 = vrcp.pop %v2221
  %v2223 = vmul.f32 %v2221, %v2222
  %v2224 = vsub.f32 1.0, %v2223
  %v2225 = vmul.f32 %v2222, %v2224
  %v2226 = vadd.f32 %v2222, %v2225
  %vm2227 = vweird.f32 %v2221
  %vm2228 = vweird.f32 %v2222
  %vm2229 = vmor %vm2227, %vm2228
  %v2230 = vsel %vm2229, %v2222, %v2226
  %v2231 = vand.u32 2147483647, %v2221
  %vm2232 = vcmp.eq.f32.partialorder %v2231, 8.507059e+37
  %v2233 = vand.u32 %v2221, 2147483648
  %v2234 = vor.u32 1.1754944e-38, %v2233
  %v2235 = vsel %vm2232, %v2234, %v2230
  %v2236 = vmul.f32 %v2211, %v2235
  %v2237 = vmin.f32 %v2236, 1.0
  %v2238 = vmax.f32 %v2237, -1.0
  %v2239 = vmul.f32 %v2184, %v2184
  %v2240 = vmin.f32 16.0, %v2239
  %v2241 = vmul.f32 %v2240, 2.1237322e-06
  %v2242 = vadd.f32 %v2241, 0.00028619796
  %v2243 = vmul.f32 %v2240, %v2242
  %v2244 = vadd.f32 %v2243, 0.0036580483
  %v2245 = vmul.f32 %v2240, %v2244
  %v2246 = vadd.f32 %v2245, 0.05243302
  %v2247 = vmul.f32 %v2240, %v2246
  %v2248 = vadd.f32 %v2247, 0.18741608
  %v2249 = vmul.f32 %v2240, %v2248
  %v2250 = vadd.f32 %v2249, 1.1283791
  %v2251 = vmul.f32 %v2184, %v2250
  %v2252 = vmul.f32 %v2240, 3.8918573e-05
  %v2253 = vadd.f32 %v2252, 0.001143296
  %v2254 = vmul.f32 %v2240, %v2253
  %v2255 = vadd.f32 %v2254, 0.014752088
  %v2256 = vmul.f32 %v2240, %v2255
  %v2257 = vadd.f32 %v2256, 0.112945676
  %v2258 = vmul.f32 %v2240, %v2257
  %v2259 = vadd.f32 %v2258, 0.4994258
  %v2260 = vmul.f32 %v2240, %v2259
  %v2261 = vadd.f32 %v2260, 1.0
  %v2262 = vrcp.pop %v2261
  %v2263 = vmul.f32 %v2261, %v2262
  %v2264 = vsub.f32 1.0, %v2263
  %v2265 = vmul.f32 %v2262, %v2264
  %v2266 = vadd.f32 %v2262, %v2265
  %vm2267 = vweird.f32 %v2261
  %vm2268 = vweird.f32 %v2262
  %vm2269 = vmor %vm2267, %vm2268
  %v2270 = vsel %vm2269, %v2262, %v2266
  %v2271 = vand.u32 2147483647, %v2261
  %vm2272 = vcmp.eq.f32.partialorder %v2271, 8.507059e+37
  %v2273 = vand.u32 %v2261, 2147483648
  %v2274 = vor.u32 1.1754944e-38, %v2273
  %v2275 = vsel %vm2272, %v2274, %v2270
  %v2276 = vmul.f32 %v2251, %v2275
  %v2277 = vmin.f32 %v2276, 1.0
  %v2278 = vmax.f32 %v2277, -1.0
  %v2279 = vmul.f32 %v2185, %v2185
  %v2280 = vmin.f32 16.0, %v2279
  %v2281 = vmul.f32 %v2280, 2.1237322e-06
  %v2282 = vadd.f32 %v2281, 0.00028619796
  %v2283 = vmul.f32 %v2280, %v2282
  %v2284 = vadd.f32 %v2283, 0.0036580483
  %v2285 = vmul.f32 %v2280, %v2284
  %v2286 = vadd.f32 %v2285, 0.05243302
  %v2287 = vmul.f32 %v2280, %v2286
  %v2288 = vadd.f32 %v2287, 0.18741608
  %v2289 = vmul.f32 %v2280, %v2288
  %v2290 = vadd.f32 %v2289, 1.1283791
  %v2291 = vmul.f32 %v2185, %v2290
  %v2292 = vmul.f32 %v2280, 3.8918573e-05
  %v2293 = vadd.f32 %v2292, 0.001143296
  %v2294 = vmul.f32 %v2280, %v2293
  %v2295 = vadd.f32 %v2294, 0.014752088
  %v2296 = vmul.f32 %v2280, %v2295
  %v2297 = vadd.f32 %v2296, 0.112945676
  %v2298 = vmul.f32 %v2280, %v2297
  %v2299 = vadd.f32 %v2298, 0.4994258
  %v2300 = vmul.f32 %v2280, %v2299
  %v2301 = vadd.f32 %v2300, 1.0
  %v2302 = vrcp.pop %v2301
  %v2303 = vmul.f32 %v2301, %v2302
  %v2304 = vsub.f32 1.0, %v2303
  %v2305 = vmul.f32 %v2302, %v2304
  %v2306 = vadd.f32 %v2302, %v2305
  %vm2307 = vweird.f32 %v2301
  %vm2308 = vweird.f32 %v2302
  %vm2309 = vmor %vm2307, %vm2308
  %v2310 = vsel %vm2309, %v2302, %v2306
  %v2311 = vand.u32 2147483647, %v2301
  %vm2312 = vcmp.eq.f32.partialorder %v2311, 8.507059e+37
  %v2313 = vand.u32 %v2301, 2147483648
  %v2314 = vor.u32 1.1754944e-38, %v2313
  %v2315 = vsel %vm2312, %v2314, %v2310
  %v2316 = vmul.f32 %v2291, %v2315
  %v2317 = vmin.f32 %v2316, 1.0
  %v2318 = vmax.f32 %v2317, -1.0
  %v2319 = vmul.f32 %v2186, %v2186
  %v2320 = vmin.f32 16.0, %v2319
  %v2321 = vmul.f32 %v2320, 2.1237322e-06
  %v2322 = vadd.f32 %v2321, 0.00028619796
  %v2323 = vmul.f32 %v2320, %v2322
  %v2324 = vadd.f32 %v2323, 0.0036580483
  %v2325 = vmul.f32 %v2320, %v2324
  %v2326 = vadd.f32 %v2325, 0.05243302
  %v2327 = vmul.f32 %v2320, %v2326
  %v2328 = vadd.f32 %v2327, 0.18741608
  %v2329 = vmul.f32 %v2320, %v2328
  %v2330 = vadd.f32 %v2329, 1.1283791
  %v2331 = vmul.f32 %v2186, %v2330
  %v2332 = vmul.f32 %v2320, 3.8918573e-05
  %v2333 = vadd.f32 %v2332, 0.001143296
  %v2334 = vmul.f32 %v2320, %v2333
  %v2335 = vadd.f32 %v2334, 0.014752088
  %v2336 = vmul.f32 %v2320, %v2335
  %v2337 = vadd.f32 %v2336, 0.112945676
  %v2338 = vmul.f32 %v2320, %v2337
  %v2339 = vadd.f32 %v2338, 0.4994258
  %v2340 = vmul.f32 %v2320, %v2339
  %v2341 = vadd.f32 %v2340, 1.0
  %v2342 = vrcp.pop %v2341
  %v2343 = vmul.f32 %v2341, %v2342
  %v2344 = vsub.f32 1.0, %v2343
  %v2345 = vmul.f32 %v2342, %v2344
  %v2346 = vadd.f32 %v2342, %v2345
  %vm2347 = vweird.f32 %v2341
  %vm2348 = vweird.f32 %v2342
  %vm2349 = vmor %vm2347, %vm2348
  %v2350 = vsel %vm2349, %v2342, %v2346
  %v2351 = vand.u32 2147483647, %v2341
  %vm2352 = vcmp.eq.f32.partialorder %v2351, 8.507059e+37
  %v2353 = vand.u32 %v2341, 2147483648
  %v2354 = vor.u32 1.1754944e-38, %v2353
  %v2355 = vsel %vm2352, %v2354, %v2350
  %v2356 = vmul.f32 %v2331, %v2355
  %v2357 = vmin.f32 %v2356, 1.0
  %v2358 = vmax.f32 %v2357, -1.0
  %v2359 = vmul.f32 %v2187, %v2187
  %v2360 = vmin.f32 16.0, %v2359
  %v2361 = vmul.f32 %v2360, 2.1237322e-06
  %v2362 = vadd.f32 %v2361, 0.00028619796
  %v2363 = vmul.f32 %v2360, %v2362
  %v2364 = vadd.f32 %v2363, 0.0036580483
  %v2365 = vmul.f32 %v2360, %v2364
  %v2366 = vadd.f32 %v2365, 0.05243302
  %v2367 = vmul.f32 %v2360, %v2366
  %v2368 = vadd.f32 %v2367, 0.18741608
  %v2369 = vmul.f32 %v2360, %v2368
  %v2370 = vadd.f32 %v2369, 1.1283791
  %v2371 = vmul.f32 %v2187, %v2370
  %v2372 = vmul.f32 %v2360, 3.8918573e-05
  %v2373 = vadd.f32 %v2372, 0.001143296
  %v2374 = vmul.f32 %v2360, %v2373
  %v2375 = vadd.f32 %v2374, 0.014752088
  %v2376 = vmul.f32 %v2360, %v2375
  %v2377 = vadd.f32 %v2376, 0.112945676
  %v2378 = vmul.f32 %v2360, %v2377
  %v2379 = vadd.f32 %v2378, 0.4994258
  %v2380 = vmul.f32 %v2360, %v2379
  %v2381 = vadd.f32 %v2380, 1.0
  %v2382 = vrcp.pop %v2381
  %v2383 = vmul.f32 %v2381, %v2382
  %v2384 = vsub.f32 1.0, %v2383
  %v2385 = vmul.f32 %v2382, %v2384
  %v2386 = vadd.f32 %v2382, %v2385
  %vm2387 = vweird.f32 %v2381
  %vm2388 = vweird.f32 %v2382
  %vm2389 = vmor %vm2387, %vm2388
  %v2390 = vsel %vm2389, %v2382, %v2386
  %v2391 = vand.u32 2147483647, %v2381
  %vm2392 = vcmp.eq.f32.partialorder %v2391, 8.507059e+37
  %v2393 = vand.u32 %v2381, 2147483648
  %v2394 = vor.u32 1.1754944e-38, %v2393
  %v2395 = vsel %vm2392, %v2394, %v2390
  %v2396 = vmul.f32 %v2371, %v2395
  %v2397 = vmin.f32 %v2396, 1.0
  %v2398 = vmax.f32 %v2397, -1.0
  %v2399 = vmul.f32 %v2188, %v2188
  %v2400 = vmin.f32 16.0, %v2399
  %v2401 = vmul.f32 %v2400, 2.1237322e-06
  %v2402 = vadd.f32 %v2401, 0.00028619796
  %v2403 = vmul.f32 %v2400, %v2402
  %v2404 = vadd.f32 %v2403, 0.0036580483
  %v2405 = vmul.f32 %v2400, %v2404
  %v2406 = vadd.f32 %v2405, 0.05243302
  %v2407 = vmul.f32 %v2400, %v2406
  %v2408 = vadd.f32 %v2407, 0.18741608
  %v2409 = vmul.f32 %v2400, %v2408
  %v2410 = vadd.f32 %v2409, 1.1283791
  %v2411 = vmul.f32 %v2188, %v2410
  %v2412 = vmul.f32 %v2400, 3.8918573e-05
  %v2413 = vadd.f32 %v2412, 0.001143296
  %v2414 = vmul.f32 %v2400, %v2413
  %v2415 = vadd.f32 %v2414, 0.014752088
  %v2416 = vmul.f32 %v2400, %v2415
  %v2417 = vadd.f32 %v2416, 0.112945676
  %v2418 = vmul.f32 %v2400, %v2417
  %v2419 = vadd.f32 %v2418, 0.4994258
  %v2420 = vmul.f32 %v2400, %v2419
  %v2421 = vadd.f32 %v2420, 1.0
  %v2422 = vrcp.pop %v2421
  %v2423 = vmul.f32 %v2421, %v2422
  %v2424 = vsub.f32 1.0, %v2423
  %v2425 = vmul.f32 %v2422, %v2424
  %v2426 = vadd.f32 %v2422, %v2425
  %vm2427 = vweird.f32 %v2421
  %vm2428 = vweird.f32 %v2422
  %vm2429 = vmor %vm2427, %vm2428
  %v2430 = vsel %vm2429, %v2422, %v2426
  %v2431 = vand.u32 2147483647, %v2421
  %vm2432 = vcmp.eq.f32.partialorder %v2431, 8.507059e+37
  %v2433 = vand.u32 %v2421, 2147483648
  %v2434 = vor.u32 1.1754944e-38, %v2433
  %v2435 = vsel %vm2432, %v2434, %v2430
  %v2436 = vmul.f32 %v2411, %v2435
  %v2437 = vmin.f32 %v2436, 1.0
  %v2438 = vmax.f32 %v2437, -1.0
  %v2439 = vmul.f32 %v2189, %v2189
  %v2440 = vmin.f32 16.0, %v2439
  %v2441 = vmul.f32 %v2440, 2.1237322e-06
  %v2442 = vadd.f32 %v2441, 0.00028619796
  %v2443 = vmul.f32 %v2440, %v2442
  %v2444 = vadd.f32 %v2443, 0.0036580483
  %v2445 = vmul.f32 %v2440, %v2444
  %v2446 = vadd.f32 %v2445, 0.05243302
  %v2447 = vmul.f32 %v2440, %v2446
  %v2448 = vadd.f32 %v2447, 0.18741608
  %v2449 = vmul.f32 %v2440, %v2448
  %v2450 = vadd.f32 %v2449, 1.1283791
  %v2451 = vmul.f32 %v2189, %v2450
  %v2452 = vmul.f32 %v2440, 3.8918573e-05
  %v2453 = vadd.f32 %v2452, 0.001143296
  %v2454 = vmul.f32 %v2440, %v2453
  %v2455 = vadd.f32 %v2454, 0.014752088
  %v2456 = vmul.f32 %v2440, %v2455
  %v2457 = vadd.f32 %v2456, 0.112945676
  %v2458 = vmul.f32 %v2440, %v2457
  %v2459 = vadd.f32 %v2458, 0.4994258
  %v2460 = vmul.f32 %v2440, %v2459
  %v2461 = vadd.f32 %v2460, 1.0
  %v2462 = vrcp.pop %v2461
  %v2463 = vmul.f32 %v2461, %v2462
  %v2464 = vsub.f32 1.0, %v2463
  %v2465 = vmul.f32 %v2462, %v2464
  %v2466 = vadd.f32 %v2462, %v2465
  %vm2467 = vweird.f32 %v2461
  %vm2468 = vweird.f32 %v2462
  %vm2469 = vmor %vm2467, %vm2468
  %v2470 = vsel %vm2469, %v2462, %v2466
  %v2471 = vand.u32 2147483647, %v2461
  %vm2472 = vcmp.eq.f32.partialorder %v2471, 8.507059e+37
  %v2473 = vand.u32 %v2461, 2147483648
  %v2474 = vor.u32 1.1754944e-38, %v2473
  %v2475 = vsel %vm2472, %v2474, %v2470
  %v2476 = vmul.f32 %v2451, %v2475
  %v2477 = vmin.f32 %v2476, 1.0
  %v2478 = vmax.f32 %v2477, -1.0
  %v2479 = vmul.f32 %v2190, %v2190
  %v2480 = vmin.f32 16.0, %v2479
  %v2481 = vmul.f32 %v2480, 2.1237322e-06
  %v2482 = vadd.f32 %v2481, 0.00028619796
  %v2483 = vmul.f32 %v2480, %v2482
  %v2484 = vadd.f32 %v2483, 0.0036580483
  %v2485 = vmul.f32 %v2480, %v2484
  %v2486 = vadd.f32 %v2485, 0.05243302
  %v2487 = vmul.f32 %v2480, %v2486
  %v2488 = vadd.f32 %v2487, 0.18741608
  %v2489 = vmul.f32 %v2480, %v2488
  %v2490 = vadd.f32 %v2489, 1.1283791
  %v2491 = vmul.f32 %v2190, %v2490
  %v2492 = vmul.f32 %v2480, 3.8918573e-05
  %v2493 = vadd.f32 %v2492, 0.001143296
  %v2494 = vmul.f32 %v2480, %v2493
  %v2495 = vadd.f32 %v2494, 0.014752088
  %v2496 = vmul.f32 %v2480, %v2495
  %v2497 = vadd.f32 %v2496, 0.112945676
  %v2498 = vmul.f32 %v2480, %v2497
  %v2499 = vadd.f32 %v2498, 0.4994258
  %v2500 = vmul.f32 %v2480, %v2499
  %v2501 = vadd.f32 %v2500, 1.0
  %v2502 = vrcp.pop %v2501
  %v2503 = vmul.f32 %v2501, %v2502
  %v2504 = vsub.f32 1.0, %v2503
  %v2505 = vmul.f32 %v2502, %v2504
  %v2506 = vadd.f32 %v2502, %v2505
  %vm2507 = vweird.f32 %v2501
  %vm2508 = vweird.f32 %v2502
  %vm2509 = vmor %vm2507, %vm2508
  %v2510 = vsel %vm2509, %v2502, %v2506
  %v2511 = vand.u32 2147483647, %v2501
  %vm2512 = vcmp.eq.f32.partialorder %v2511, 8.507059e+37
  %v2513 = vand.u32 %v2501, 2147483648
  %v2514 = vor.u32 1.1754944e-38, %v2513
  %v2515 = vsel %vm2512, %v2514, %v2510
  %v2516 = vmul.f32 %v2491, %v2515
  %v2517 = vmin.f32 %v2516, 1.0
  %v2518 = vmax.f32 %v2517, -1.0
  %v2519 = vmul.f32 %v2191, %v2191
  %v2520 = vmin.f32 16.0, %v2519
  %v2521 = vmul.f32 %v2520, 2.1237322e-06
  %v2522 = vadd.f32 %v2521, 0.00028619796
  %v2523 = vmul.f32 %v2520, %v2522
  %v2524 = vadd.f32 %v2523, 0.0036580483
  %v2525 = vmul.f32 %v2520, %v2524
  %v2526 = vadd.f32 %v2525, 0.05243302
  %v2527 = vmul.f32 %v2520, %v2526
  %v2528 = vadd.f32 %v2527, 0.18741608
  %v2529 = vmul.f32 %v2520, %v2528
  %v2530 = vadd.f32 %v2529, 1.1283791
  %v2531 = vmul.f32 %v2191, %v2530
  %v2532 = vmul.f32 %v2520, 3.8918573e-05
  %v2533 = vadd.f32 %v2532, 0.001143296
  %v2534 = vmul.f32 %v2520, %v2533
  %v2535 = vadd.f32 %v2534, 0.014752088
  %v2536 = vmul.f32 %v2520, %v2535
  %v2537 = vadd.f32 %v2536, 0.112945676
  %v2538 = vmul.f32 %v2520, %v2537
  %v2539 = vadd.f32 %v2538, 0.4994258
  %v2540 = vmul.f32 %v2520, %v2539
  %v2541 = vadd.f32 %v2540, 1.0
  %v2542 = vrcp.pop %v2541
  %v2543 = vmul.f32 %v2541, %v2542
  %v2544 = vsub.f32 1.0, %v2543
  %v2545 = vmul.f32 %v2542, %v2544
  %v2546 = vadd.f32 %v2542, %v2545
  %vm2547 = vweird.f32 %v2541
  %vm2548 = vweird.f32 %v2542
  %vm2549 = vmor %vm2547, %vm2548
  %v2550 = vsel %vm2549, %v2542, %v2546
  %v2551 = vand.u32 2147483647, %v2541
  %vm2552 = vcmp.eq.f32.partialorder %v2551, 8.507059e+37
  %v2553 = vand.u32 %v2541, 2147483648
  %v2554 = vor.u32 1.1754944e-38, %v2553
  %v2555 = vsel %vm2552, %v2554, %v2550
  %v2556 = vmul.f32 %v2531, %v2555
  %v2557 = vmin.f32 %v2556, 1.0
  %v2558 = vmax.f32 %v2557, -1.0
  %v2559 = vmul.f32 %v2192, %v2192
  %v2560 = vmin.f32 16.0, %v2559
  %v2561 = vmul.f32 %v2560, 2.1237322e-06
  %v2562 = vadd.f32 %v2561, 0.00028619796
  %v2563 = vmul.f32 %v2560, %v2562
  %v2564 = vadd.f32 %v2563, 0.0036580483
  %v2565 = vmul.f32 %v2560, %v2564
  %v2566 = vadd.f32 %v2565, 0.05243302
  %v2567 = vmul.f32 %v2560, %v2566
  %v2568 = vadd.f32 %v2567, 0.18741608
  %v2569 = vmul.f32 %v2560, %v2568
  %v2570 = vadd.f32 %v2569, 1.1283791
  %v2571 = vmul.f32 %v2192, %v2570
  %v2572 = vmul.f32 %v2560, 3.8918573e-05
  %v2573 = vadd.f32 %v2572, 0.001143296
  %v2574 = vmul.f32 %v2560, %v2573
  %v2575 = vadd.f32 %v2574, 0.014752088
  %v2576 = vmul.f32 %v2560, %v2575
  %v2577 = vadd.f32 %v2576, 0.112945676
  %v2578 = vmul.f32 %v2560, %v2577
  %v2579 = vadd.f32 %v2578, 0.4994258
  %v2580 = vmul.f32 %v2560, %v2579
  %v2581 = vadd.f32 %v2580, 1.0
  %v2582 = vrcp.pop %v2581
  %v2583 = vmul.f32 %v2581, %v2582
  %v2584 = vsub.f32 1.0, %v2583
  %v2585 = vmul.f32 %v2582, %v2584
  %v2586 = vadd.f32 %v2582, %v2585
  %vm2587 = vweird.f32 %v2581
  %vm2588 = vweird.f32 %v2582
  %vm2589 = vmor %vm2587, %vm2588
  %v2590 = vsel %vm2589, %v2582, %v2586
  %v2591 = vand.u32 2147483647, %v2581
  %vm2592 = vcmp.eq.f32.partialorder %v2591, 8.507059e+37
  %v2593 = vand.u32 %v2581, 2147483648
  %v2594 = vor.u32 1.1754944e-38, %v2593
  %v2595 = vsel %vm2592, %v2594, %v2590
  %v2596 = vmul.f32 %v2571, %v2595
  %v2597 = vmin.f32 %v2596, 1.0
  %v2598 = vmax.f32 %v2597, -1.0
  %v2599 = vmul.f32 %v2193, %v2193
  %v2600 = vmin.f32 16.0, %v2599
  %v2601 = vmul.f32 %v2600, 2.1237322e-06
  %v2602 = vadd.f32 %v2601, 0.00028619796
  %v2603 = vmul.f32 %v2600, %v2602
  %v2604 = vadd.f32 %v2603, 0.0036580483
  %v2605 = vmul.f32 %v2600, %v2604
  %v2606 = vadd.f32 %v2605, 0.05243302
  %v2607 = vmul.f32 %v2600, %v2606
  %v2608 = vadd.f32 %v2607, 0.18741608
  %v2609 = vmul.f32 %v2600, %v2608
  %v2610 = vadd.f32 %v2609, 1.1283791
  %v2611 = vmul.f32 %v2193, %v2610
  %v2612 = vmul.f32 %v2600, 3.8918573e-05
  %v2613 = vadd.f32 %v2612, 0.001143296
  %v2614 = vmul.f32 %v2600, %v2613
  %v2615 = vadd.f32 %v2614, 0.014752088
  %v2616 = vmul.f32 %v2600, %v2615
  %v2617 = vadd.f32 %v2616, 0.112945676
  %v2618 = vmul.f32 %v2600, %v2617
  %v2619 = vadd.f32 %v2618, 0.4994258
  %v2620 = vmul.f32 %v2600, %v2619
  %v2621 = vadd.f32 %v2620, 1.0
  %v2622 = vrcp.pop %v2621
  %v2623 = vmul.f32 %v2621, %v2622
  %v2624 = vsub.f32 1.0, %v2623
  %v2625 = vmul.f32 %v2622, %v2624
  %v2626 = vadd.f32 %v2622, %v2625
  %vm2627 = vweird.f32 %v2621
  %vm2628 = vweird.f32 %v2622
  %vm2629 = vmor %vm2627, %vm2628
  %v2630 = vsel %vm2629, %v2622, %v2626
  %v2631 = vand.u32 2147483647, %v2621
  %vm2632 = vcmp.eq.f32.partialorder %v2631, 8.507059e+37
  %v2633 = vand.u32 %v2621, 2147483648
  %v2634 = vor.u32 1.1754944e-38, %v2633
  %v2635 = vsel %vm2632, %v2634, %v2630
  %v2636 = vmul.f32 %v2611, %v2635
  %v2637 = vmin.f32 %v2636, 1.0
  %v2638 = vmax.f32 %v2637, -1.0
  %v2639 = vmul.f32 %v2194, %v2194
  %v2640 = vmin.f32 16.0, %v2639
  %v2641 = vmul.f32 %v2640, 2.1237322e-06
  %v2642 = vadd.f32 %v2641, 0.00028619796
  %v2643 = vmul.f32 %v2640, %v2642
  %v2644 = vadd.f32 %v2643, 0.0036580483
  %v2645 = vmul.f32 %v2640, %v2644
  %v2646 = vadd.f32 %v2645, 0.05243302
  %v2647 = vmul.f32 %v2640, %v2646
  %v2648 = vadd.f32 %v2647, 0.18741608
  %v2649 = vmul.f32 %v2640, %v2648
  %v2650 = vadd.f32 %v2649, 1.1283791
  %v2651 = vmul.f32 %v2194, %v2650
  %v2652 = vmul.f32 %v2640, 3.8918573e-05
  %v2653 = vadd.f32 %v2652, 0.001143296
  %v2654 = vmul.f32 %v2640, %v2653
  %v2655 = vadd.f32 %v2654, 0.014752088
  %v2656 = vmul.f32 %v2640, %v2655
  %v2657 = vadd.f32 %v2656, 0.112945676
  %v2658 = vmul.f32 %v2640, %v2657
  %v2659 = vadd.f32 %v2658, 0.4994258
  %v2660 = vmul.f32 %v2640, %v2659
  %v2661 = vadd.f32 %v2660, 1.0
  %v2662 = vrcp.pop %v2661
  %v2663 = vmul.f32 %v2661, %v2662
  %v2664 = vsub.f32 1.0, %v2663
  %v2665 = vmul.f32 %v2662, %v2664
  %v2666 = vadd.f32 %v2662, %v2665
  %vm2667 = vweird.f32 %v2661
  %vm2668 = vweird.f32 %v2662
  %vm2669 = vmor %vm2667, %vm2668
  %v2670 = vsel %vm2669, %v2662, %v2666
  %v2671 = vand.u32 2147483647, %v2661
  %vm2672 = vcmp.eq.f32.partialorder %v2671, 8.507059e+37
  %v2673 = vand.u32 %v2661, 2147483648
  %v2674 = vor.u32 1.1754944e-38, %v2673
  %v2675 = vsel %vm2672, %v2674, %v2670
  %v2676 = vmul.f32 %v2651, %v2675
  %v2677 = vmin.f32 %v2676, 1.0
  %v2678 = vmax.f32 %v2677, -1.0
  %v2679 = vmul.f32 %v2195, %v2195
  %v2680 = vmin.f32 16.0, %v2679
  %v2681 = vmul.f32 %v2680, 2.1237322e-06
  %v2682 = vadd.f32 %v2681, 0.00028619796
  %v2683 = vmul.f32 %v2680, %v2682
  %v2684 = vadd.f32 %v2683, 0.0036580483
  %v2685 = vmul.f32 %v2680, %v2684
  %v2686 = vadd.f32 %v2685, 0.05243302
  %v2687 = vmul.f32 %v2680, %v2686
  %v2688 = vadd.f32 %v2687, 0.18741608
  %v2689 = vmul.f32 %v2680, %v2688
  %v2690 = vadd.f32 %v2689, 1.1283791
  %v2691 = vmul.f32 %v2195, %v2690
  %v2692 = vmul.f32 %v2680, 3.8918573e-05
  %v2693 = vadd.f32 %v2692, 0.001143296
  %v2694 = vmul.f32 %v2680, %v2693
  %v2695 = vadd.f32 %v2694, 0.014752088
  %v2696 = vmul.f32 %v2680, %v2695
  %v2697 = vadd.f32 %v2696, 0.112945676
  %v2698 = vmul.f32 %v2680, %v2697
  %v2699 = vadd.f32 %v2698, 0.4994258
  %v2700 = vmul.f32 %v2680, %v2699
  %v2701 = vadd.f32 %v2700, 1.0
  %v2702 = vrcp.pop %v2701
  %v2703 = vmul.f32 %v2701, %v2702
  %v2704 = vsub.f32 1.0, %v2703
  %v2705 = vmul.f32 %v2702, %v2704
  %v2706 = vadd.f32 %v2702, %v2705
  %vm2707 = vweird.f32 %v2701
  %vm2708 = vweird.f32 %v2702
  %vm2709 = vmor %vm2707, %vm2708
  %v2710 = vsel %vm2709, %v2702, %v2706
  %v2711 = vand.u32 2147483647, %v2701
  %vm2712 = vcmp.eq.f32.partialorder %v2711, 8.507059e+37
  %v2713 = vand.u32 %v2701, 2147483648
  %v2714 = vor.u32 1.1754944e-38, %v2713
  %v2715 = vsel %vm2712, %v2714, %v2710
  %v2716 = vmul.f32 %v2691, %v2715
  %v2717 = vmin.f32 %v2716, 1.0
  %v2718 = vmax.f32 %v2717, -1.0
  %v2719 = vmul.f32 %v2196, %v2196
  %v2720 = vmin.f32 16.0, %v2719
  %v2721 = vmul.f32 %v2720, 2.1237322e-06
  %v2722 = vadd.f32 %v2721, 0.00028619796
  %v2723 = vmul.f32 %v2720, %v2722
  %v2724 = vadd.f32 %v2723, 0.0036580483
  %v2725 = vmul.f32 %v2720, %v2724
  %v2726 = vadd.f32 %v2725, 0.05243302
  %v2727 = vmul.f32 %v2720, %v2726
  %v2728 = vadd.f32 %v2727, 0.18741608
  %v2729 = vmul.f32 %v2720, %v2728
  %v2730 = vadd.f32 %v2729, 1.1283791
  %v2731 = vmul.f32 %v2196, %v2730
  %v2732 = vmul.f32 %v2720, 3.8918573e-05
  %v2733 = vadd.f32 %v2732, 0.001143296
  %v2734 = vmul.f32 %v2720, %v2733
  %v2735 = vadd.f32 %v2734, 0.014752088
  %v2736 = vmul.f32 %v2720, %v2735
  %v2737 = vadd.f32 %v2736, 0.112945676
  %v2738 = vmul.f32 %v2720, %v2737
  %v2739 = vadd.f32 %v2738, 0.4994258
  %v2740 = vmul.f32 %v2720, %v2739
  %v2741 = vadd.f32 %v2740, 1.0
  %v2742 = vrcp.pop %v2741
  %v2743 = vmul.f32 %v2741, %v2742
  %v2744 = vsub.f32 1.0, %v2743
  %v2745 = vmul.f32 %v2742, %v2744
  %v2746 = vadd.f32 %v2742, %v2745
  %vm2747 = vweird.f32 %v2741
  %vm2748 = vweird.f32 %v2742
  %vm2749 = vmor %vm2747, %vm2748
  %v2750 = vsel %vm2749, %v2742, %v2746
  %v2751 = vand.u32 2147483647, %v2741
  %vm2752 = vcmp.eq.f32.partialorder %v2751, 8.507059e+37
  %v2753 = vand.u32 %v2741, 2147483648
  %v2754 = vor.u32 1.1754944e-38, %v2753
  %v2755 = vsel %vm2752, %v2754, %v2750
  %v2756 = vmul.f32 %v2731, %v2755
  %v2757 = vmin.f32 %v2756, 1.0
  %v2758 = vmax.f32 %v2757, -1.0
  %v2759 = vmul.f32 %v2197, %v2197
  %v2760 = vmin.f32 16.0, %v2759
  %v2761 = vmul.f32 %v2760, 2.1237322e-06
  %v2762 = vadd.f32 %v2761, 0.00028619796
  %v2763 = vmul.f32 %v2760, %v2762
  %v2764 = vadd.f32 %v2763, 0.0036580483
  %v2765 = vmul.f32 %v2760, %v2764
  %v2766 = vadd.f32 %v2765, 0.05243302
  %v2767 = vmul.f32 %v2760, %v2766
  %v2768 = vadd.f32 %v2767, 0.18741608
  %v2769 = vmul.f32 %v2760, %v2768
  %v2770 = vadd.f32 %v2769, 1.1283791
  %v2771 = vmul.f32 %v2197, %v2770
  %v2772 = vmul.f32 %v2760, 3.8918573e-05
  %v2773 = vadd.f32 %v2772, 0.001143296
  %v2774 = vmul.f32 %v2760, %v2773
  %v2775 = vadd.f32 %v2774, 0.014752088
  %v2776 = vmul.f32 %v2760, %v2775
  %v2777 = vadd.f32 %v2776, 0.112945676
  %v2778 = vmul.f32 %v2760, %v2777
  %v2779 = vadd.f32 %v2778, 0.4994258
  %v2780 = vmul.f32 %v2760, %v2779
  %v2781 = vadd.f32 %v2780, 1.0
  %v2782 = vrcp.pop %v2781
  %v2783 = vmul.f32 %v2781, %v2782
  %v2784 = vsub.f32 1.0, %v2783
  %v2785 = vmul.f32 %v2782, %v2784
  %v2786 = vadd.f32 %v2782, %v2785
  %vm2787 = vweird.f32 %v2781
  %vm2788 = vweird.f32 %v2782
  %vm2789 = vmor %vm2787, %vm2788
  %v2790 = vsel %vm2789, %v2782, %v2786
  %v2791 = vand.u32 2147483647, %v2781
  %vm2792 = vcmp.eq.f32.partialorder %v2791, 8.507059e+37
  %v2793 = vand.u32 %v2781, 2147483648
  %v2794 = vor.u32 1.1754944e-38, %v2793
  %v2795 = vsel %vm2792, %v2794, %v2790
  %v2796 = vmul.f32 %v2771, %v2795
  %v2797 = vmin.f32 %v2796, 1.0
  %v2798 = vmax.f32 %v2797, -1.0
  %v2799 = vmul.f32 %v2198, %v2198
  %v2800 = vmin.f32 16.0, %v2799
  %v2801 = vmul.f32 %v2800, 2.1237322e-06
  %v2802 = vadd.f32 %v2801, 0.00028619796
  %v2803 = vmul.f32 %v2800, %v2802
  %v2804 = vadd.f32 %v2803, 0.0036580483
  %v2805 = vmul.f32 %v2800, %v2804
  %v2806 = vadd.f32 %v2805, 0.05243302
  %v2807 = vmul.f32 %v2800, %v2806
  %v2808 = vadd.f32 %v2807, 0.18741608
  %v2809 = vmul.f32 %v2800, %v2808
  %v2810 = vadd.f32 %v2809, 1.1283791
  %v2811 = vmul.f32 %v2198, %v2810
  %v2812 = vmul.f32 %v2800, 3.8918573e-05
  %v2813 = vadd.f32 %v2812, 0.001143296
  %v2814 = vmul.f32 %v2800, %v2813
  %v2815 = vadd.f32 %v2814, 0.014752088
  %v2816 = vmul.f32 %v2800, %v2815
  %v2817 = vadd.f32 %v2816, 0.112945676
  %v2818 = vmul.f32 %v2800, %v2817
  %v2819 = vadd.f32 %v2818, 0.4994258
  %v2820 = vmul.f32 %v2800, %v2819
  %v2821 = vadd.f32 %v2820, 1.0
  %v2822 = vrcp.pop %v2821
  %v2823 = vmul.f32 %v2821, %v2822
  %v2824 = vsub.f32 1.0, %v2823
  %v2825 = vmul.f32 %v2822, %v2824
  %v2826 = vadd.f32 %v2822, %v2825
  %vm2827 = vweird.f32 %v2821
  %vm2828 = vweird.f32 %v2822
  %vm2829 = vmor %vm2827, %vm2828
  %v2830 = vsel %vm2829, %v2822, %v2826
  %v2831 = vand.u32 2147483647, %v2821
  %vm2832 = vcmp.eq.f32.partialorder %v2831, 8.507059e+37
  %v2833 = vand.u32 %v2821, 2147483648
  %v2834 = vor.u32 1.1754944e-38, %v2833
  %v2835 = vsel %vm2832, %v2834, %v2830
  %v2836 = vmul.f32 %v2811, %v2835
  %v2837 = vmin.f32 %v2836, 1.0
  %v2838 = vmax.f32 %v2837, -1.0
  %v2839 = vadd.f32 %v2238, 1.0
  %v2840 = vadd.f32 %v2278, 1.0
  %v2841 = vadd.f32 %v2318, 1.0
  %v2842 = vadd.f32 %v2358, 1.0
  %v2843 = vadd.f32 %v2398, 1.0
  %v2844 = vadd.f32 %v2438, 1.0
  %v2845 = vadd.f32 %v2478, 1.0
  %v2846 = vadd.f32 %v2518, 1.0
  %v2847 = vadd.f32 %v2558, 1.0
  %v2848 = vadd.f32 %v2598, 1.0
  %v2849 = vadd.f32 %v2638, 1.0
  %v2850 = vadd.f32 %v2678, 1.0
  %v2851 = vadd.f32 %v2718, 1.0
  %v2852 = vadd.f32 %v2758, 1.0
  %v2853 = vadd.f32 %v2798, 1.0
  %v2854 = vadd.f32 %v2838, 1.0
  %v2855 = vmul.f32 %v2167, %v2839
  %v2856 = vmul.f32 %v2168, %v2840
  %v2857 = vmul.f32 %v2169, %v2841
  %v2858 = vmul.f32 %v2170, %v2842
  %v2859 = vmul.f32 %v2171, %v2843
  %v2860 = vmul.f32 %v2172, %v2844
  %v2861 = vmul.f32 %v2173, %v2845
  %v2862 = vmul.f32 %v2174, %v2846
  %v2863 = vmul.f32 %v2175, %v2847
  %v2864 = vmul.f32 %v2176, %v2848
  %v2865 = vmul.f32 %v2177, %v2849
  %v2866 = vmul.f32 %v2178, %v2850
  %v2867 = vmul.f32 %v2179, %v2851
  %v2868 = vmul.f32 %v2180, %v2852
  %v2869 = vmul.f32 %v2181, %v2853
  %v2870 = vmul.f32 %v2182, %v2854
  %2871 = vmatpush.msra.mxu0 0.0
  %2872 = vmatpush.msra.mxu0 0.0
  %2873 = vmatpush.msra.mxu0 0.0
  %2874 = vmatpush.msra.mxu0 0.0
  %2875 = vmatpush.msra.mxu0 0.0
  %2876 = vmatpush.msra.mxu0 0.0
  %2877 = vmatpush.msra.mxu0 0.0
  %2878 = vmatpush.msra.mxu0 0.0
  %2879 = vmatpush.msra.mxu0 %v2869
  %2880 = vmatpush.msra.mxu0 %v2867
  %2881 = vmatpush.msra.mxu0 %v2865
  %2882 = vmatpush.msra.mxu0 %v2863
  %2883 = vmatpush.msra.mxu0 %v2861
  %2884 = vmatpush.msra.mxu0 %v2859
  %2885 = vmatpush.msra.mxu0 %v2857
  %2886 = vmatpush.msra.mxu0 %v2855
  %2887 = vmatmul.f32.gmra.mxu0 %v1244
  %v2888 = vpop.f32.mrf.mxu0
  %v2889 = vadd.f32 0.0, %v2888
  %2890 = vmatmul.f32.gmra.mxu0 %v1247
  %v2891 = vpop.f32.mrf.mxu0
  %v2892 = vadd.f32 0.0, %v2891
  %2893 = vmatmul.f32.gmra.mxu0 %v1250
  %v2894 = vpop.f32.mrf.mxu0
  %v2895 = vadd.f32 0.0, %v2894
  %2896 = vmatmul.f32.gmra.mxu0 %v1253
  %v2897 = vpop.f32.mrf.mxu0
  %v2898 = vadd.f32 0.0, %v2897
  %2899 = vdwg.mxu0
  %2900 = vmatpush.msra.mxu0 0.0
  %2901 = vmatpush.msra.mxu0 0.0
  %2902 = vmatpush.msra.mxu0 0.0
  %2903 = vmatpush.msra.mxu0 0.0
  %2904 = vmatpush.msra.mxu0 0.0
  %2905 = vmatpush.msra.mxu0 0.0
  %2906 = vmatpush.msra.mxu0 0.0
  %2907 = vmatpush.msra.mxu0 0.0
  %2908 = vmatpush.msra.mxu0 %v2870
  %2909 = vmatpush.msra.mxu0 %v2868
  %2910 = vmatpush.msra.mxu0 %v2866
  %2911 = vmatpush.msra.mxu0 %v2864
  %2912 = vmatpush.msra.mxu0 %v2862
  %2913 = vmatpush.msra.mxu0 %v2860
  %2914 = vmatpush.msra.mxu0 %v2858
  %2915 = vmatpush.msra.mxu0 %v2856
  %2916 = vmatmul.f32.gmra.mxu0 %v1244
  %v2917 = vpop.f32.mrf.mxu0
  %v2918 = vadd.f32 0.0, %v2917
  %2919 = vmatmul.f32.gmra.mxu0 %v1247
  %v2920 = vpop.f32.mrf.mxu0
  %v2921 = vadd.f32 0.0, %v2920
  %2922 = vmatmul.f32.gmra.mxu0 %v1250
  %v2923 = vpop.f32.mrf.mxu0
  %v2924 = vadd.f32 0.0, %v2923
  %2925 = vmatmul.f32.gmra.mxu0 %v1253
  %v2926 = vpop.f32.mrf.mxu0
  %v2927 = vadd.f32 0.0, %v2926
  %2928 = vdwg.mxu0
  %v2929 = vadd.f32 %v2889, %v2918
  %2930 = vadd.xlane.f32.xlu0 %v2929
  %v2931 = vpop.xlane.xlu0 %2930
  %v2932 = vadd.f32 %v2892, %v2921
  %2933 = vadd.xlane.f32.xlu0 %v2932
  %v2934 = vpop.xlane.xlu0 %2933
  %v2935 = vadd.f32 %v2895, %v2924
  %2936 = vadd.xlane.f32.xlu0 %v2935
  %v2937 = vpop.xlane.xlu0 %2936
  %v2938 = vadd.f32 %v2898, %v2927
  %2939 = vadd.xlane.f32.xlu0 %v2938
  %v2940 = vpop.xlane.xlu0 %2939
  %v2941 = vmul.f32 %v2931, %v234
  %v2942 = vmul.f32 %v2934, %v234
  %v2943 = vmul.f32 %v2937, %v234
  %v2944 = vmul.f32 %v2940, %v234
  %v2945 = vmul.f32 %v2889, %v2889
  %v2946 = vmul.f32 %v2918, %v2918
  %v2947 = vmul.f32 %v2892, %v2892
  %v2948 = vmul.f32 %v2921, %v2921
  %v2949 = vmul.f32 %v2895, %v2895
  %v2950 = vmul.f32 %v2924, %v2924
  %v2951 = vmul.f32 %v2898, %v2898
  %v2952 = vmul.f32 %v2927, %v2927
  %v2953 = vadd.f32 %v2945, %v2946
  %2954 = vadd.xlane.f32.xlu0 %v2953
  %v2955 = vpop.xlane.xlu0 %2954
  %v2956 = vadd.f32 %v2947, %v2948
  %2957 = vadd.xlane.f32.xlu0 %v2956
  %v2958 = vpop.xlane.xlu0 %2957
  %v2959 = vadd.f32 %v2949, %v2950
  %2960 = vadd.xlane.f32.xlu0 %v2959
  %v2961 = vpop.xlane.xlu0 %2960
  %v2962 = vadd.f32 %v2951, %v2952
  %2963 = vadd.xlane.f32.xlu0 %v2962
  %v2964 = vpop.xlane.xlu0 %2963
  %v2965 = vmul.f32 %v2955, %v234
  %v2966 = vmul.f32 %v2958, %v234
  %v2967 = vmul.f32 %v2961, %v234
  %v2968 = vmul.f32 %v2964, %v234
  %v2969 = vmul.f32 %v2941, %v2941
  %v2970 = vmul.f32 %v2942, %v2942
  %v2971 = vmul.f32 %v2943, %v2943
  %v2972 = vmul.f32 %v2944, %v2944
  %v2973 = vsub.f32 %v2965, %v2969
  %v2974 = vsub.f32 %v2966, %v2970
  %v2975 = vsub.f32 %v2967, %v2971
  %v2976 = vsub.f32 %v2968, %v2972
  %v2977 = vsub.f32 %v2889, %v2941
  %v2978 = vsub.f32 %v2918, %v2941
  %v2979 = vsub.f32 %v2892, %v2942
  %v2980 = vsub.f32 %v2921, %v2942
  %v2981 = vsub.f32 %v2895, %v2943
  %v2982 = vsub.f32 %v2924, %v2943
  %v2983 = vsub.f32 %v2898, %v2944
  %v2984 = vsub.f32 %v2927, %v2944
  %v2985 = vadd.f32 %v2973, 1e-05
  %v2986 = vadd.f32 %v2974, 1e-05
  %v2987 = vadd.f32 %v2975, 1e-05
  %v2988 = vadd.f32 %v2976, 1e-05
  %v2989 = vrsqrt.pop %v2985
  %v2990 = vmul.f32 %v2989, %v2985
  %v2991 = vmul.f32 %v2990, %v2989
  %v2992 = vmul.f32 0.5, %v2991
  %v2993 = vsub.f32 1.5, %v2992
  %v2994 = vmul.f32 %v2989, %v2993
  %vm2995 = vweird.f32 %v2985
  %vm2996 = vweird.f32 %v2989
  %vm2997 = vmor %vm2995, %vm2996
  %v2998 = vsel %vm2997, %v2989, %v2994
  %v2999 = vrsqrt.pop %v2986
  %v3000 = vmul.f32 %v2999, %v2986
  %v3001 = vmul.f32 %v3000, %v2999
  %v3002 = vmul.f32 0.5, %v3001
  %v3003 = vsub.f32 1.5, %v3002
  %v3004 = vmul.f32 %v2999, %v3003
  %vm3005 = vweird.f32 %v2986
  %vm3006 = vweird.f32 %v2999
  %vm3007 = vmor %vm3005, %vm3006
  %v3008 = vsel %vm3007, %v2999, %v3004
  %v3009 = vrsqrt.pop %v2987
  %v3010 = vmul.f32 %v3009, %v2987
  %v3011 = vmul.f32 %v3010, %v3009
  %v3012 = vmul.f32 0.5, %v3011
  %v3013 = vsub.f32 1.5, %v3012
  %v3014 = vmul.f32 %v3009, %v3013
  %vm3015 = vweird.f32 %v2987
  %vm3016 = vweird.f32 %v3009
  %vm3017 = vmor %vm3015, %vm3016
  %v3018 = vsel %vm3017, %v3009, %v3014
  %v3019 = vrsqrt.pop %v2988
  %v3020 = vmul.f32 %v3019, %v2988
  %v3021 = vmul.f32 %v3020, %v3019
  %v3022 = vmul.f32 0.5, %v3021
  %v3023 = vsub.f32 1.5, %v3022
  %v3024 = vmul.f32 %v3019, %v3023
  %vm3025 = vweird.f32 %v2988
  %vm3026 = vweird.f32 %v3019
  %vm3027 = vmor %vm3025, %vm3026
  %v3028 = vsel %vm3027, %v3019, %v3024
  %v3029 = vmul.f32 %v2977, %v2998
  %v3030 = vmul.f32 %v2978, %v2998
  %v3031 = vmul.f32 %v2979, %v3008
  %v3032 = vmul.f32 %v2980, %v3008
  %v3033 = vmul.f32 %v2981, %v3018
  %v3034 = vmul.f32 %v2982, %v3018
  %v3035 = vmul.f32 %v2983, %v3028
  %v3036 = vmul.f32 %v2984, %v3028
  %v3037 = vmul.f32 %v3029, %v1424
  %v3038 = vmul.f32 %v3030, %v1424
  %v3039 = vmul.f32 %v3031, %v1429
  %v3040 = vmul.f32 %v3032, %v1429
  %v3041 = vmul.f32 %v3033, %v1434
  %v3042 = vmul.f32 %v3034, %v1434
  %v3043 = vmul.f32 %v3035, %v1439
  %v3044 = vmul.f32 %v3036, %v1439
  %v3045 = vadd.f32 %v3037, %v1452
  %v3046 = vadd.f32 %v3038, %v1452
  %v3047 = vadd.f32 %v3039, %v1457
  %v3048 = vadd.f32 %v3040, %v1457
  %v3049 = vadd.f32 %v3041, %v1462
  %v3050 = vadd.f32 %v3042, %v1462
  %v3051 = vadd.f32 %v3043, %v1467
  %v3052 = vadd.f32 %v3044, %v1467
  %v3053 = vmul.f32 %v3045, 0.5
  %v3054 = vmul.f32 %v3046, 0.5
  %v3055 = vmul.f32 %v3047, 0.5
  %v3056 = vmul.f32 %v3048, 0.5
  %v3057 = vmul.f32 %v3049, 0.5
  %v3058 = vmul.f32 %v3050, 0.5
  %v3059 = vmul.f32 %v3051, 0.5
  %v3060 = vmul.f32 %v3052, 0.5
  %v3061 = vmul.f32 %v3045, 0.70710677
  %v3062 = vmul.f32 %v3046, 0.70710677
  %v3063 = vmul.f32 %v3047, 0.70710677
  %v3064 = vmul.f32 %v3048, 0.70710677
  %v3065 = vmul.f32 %v3049, 0.70710677
  %v3066 = vmul.f32 %v3050, 0.70710677
  %v3067 = vmul.f32 %v3051, 0.70710677
  %v3068 = vmul.f32 %v3052, 0.70710677
  %v3069 = vmul.f32 %v3061, %v3061
  %v3070 = vmin.f32 16.0, %v3069
  %v3071 = vmul.f32 %v3070, 2.1237322e-06
  %v3072 = vadd.f32 %v3071, 0.00028619796
  %v3073 = vmul.f32 %v3070, %v3072
  %v3074 = vadd.f32 %v3073, 0.0036580483
  %v3075 = vmul.f32 %v3070, %v3074
  %v3076 = vadd.f32 %v3075, 0.05243302
  %v3077 = vmul.f32 %v3070, %v3076
  %v3078 = vadd.f32 %v3077, 0.18741608
  %v3079 = vmul.f32 %v3070, %v3078
  %v3080 = vadd.f32 %v3079, 1.1283791
  %v3081 = vmul.f32 %v3061, %v3080
  %v3082 = vmul.f32 %v3070, 3.8918573e-05
  %v3083 = vadd.f32 %v3082, 0.001143296
  %v3084 = vmul.f32 %v3070, %v3083
  %v3085 = vadd.f32 %v3084, 0.014752088
  %v3086 = vmul.f32 %v3070, %v3085
  %v3087 = vadd.f32 %v3086, 0.112945676
  %v3088 = vmul.f32 %v3070, %v3087
  %v3089 = vadd.f32 %v3088, 0.4994258
  %v3090 = vmul.f32 %v3070, %v3089
  %v3091 = vadd.f32 %v3090, 1.0
  %v3092 = vrcp.pop %v3091
  %v3093 = vmul.f32 %v3091, %v3092
  %v3094 = vsub.f32 1.0, %v3093
  %v3095 = vmul.f32 %v3092, %v3094
  %v3096 = vadd.f32 %v3092, %v3095
  %vm3097 = vweird.f32 %v3091
  %vm3098 = vweird.f32 %v3092
  %vm3099 = vmor %vm3097, %vm3098
  %v3100 = vsel %vm3099, %v3092, %v3096
  %v3101 = vand.u32 2147483647, %v3091
  %vm3102 = vcmp.eq.f32.partialorder %v3101, 8.507059e+37
  %v3103 = vand.u32 %v3091, 2147483648
  %v3104 = vor.u32 1.1754944e-38, %v3103
  %v3105 = vsel %vm3102, %v3104, %v3100
  %v3106 = vmul.f32 %v3081, %v3105
  %v3107 = vmin.f32 %v3106, 1.0
  %v3108 = vmax.f32 %v3107, -1.0
  %v3109 = vmul.f32 %v3062, %v3062
  %v3110 = vmin.f32 16.0, %v3109
  %v3111 = vmul.f32 %v3110, 2.1237322e-06
  %v3112 = vadd.f32 %v3111, 0.00028619796
  %v3113 = vmul.f32 %v3110, %v3112
  %v3114 = vadd.f32 %v3113, 0.0036580483
  %v3115 = vmul.f32 %v3110, %v3114
  %v3116 = vadd.f32 %v3115, 0.05243302
  %v3117 = vmul.f32 %v3110, %v3116
  %v3118 = vadd.f32 %v3117, 0.18741608
  %v3119 = vmul.f32 %v3110, %v3118
  %v3120 = vadd.f32 %v3119, 1.1283791
  %v3121 = vmul.f32 %v3062, %v3120
  %v3122 = vmul.f32 %v3110, 3.8918573e-05
  %v3123 = vadd.f32 %v3122, 0.001143296
  %v3124 = vmul.f32 %v3110, %v3123
  %v3125 = vadd.f32 %v3124, 0.014752088
  %v3126 = vmul.f32 %v3110, %v3125
  %v3127 = vadd.f32 %v3126, 0.112945676
  %v3128 = vmul.f32 %v3110, %v3127
  %v3129 = vadd.f32 %v3128, 0.4994258
  %v3130 = vmul.f32 %v3110, %v3129
  %v3131 = vadd.f32 %v3130, 1.0
  %v3132 = vrcp.pop %v3131
  %v3133 = vmul.f32 %v3131, %v3132
  %v3134 = vsub.f32 1.0, %v3133
  %v3135 = vmul.f32 %v3132, %v3134
  %v3136 = vadd.f32 %v3132, %v3135
  %vm3137 = vweird.f32 %v3131
  %vm3138 = vweird.f32 %v3132
  %vm3139 = vmor %vm3137, %vm3138
  %v3140 = vsel %vm3139, %v3132, %v3136
  %v3141 = vand.u32 2147483647, %v3131
  %vm3142 = vcmp.eq.f32.partialorder %v3141, 8.507059e+37
  %v3143 = vand.u32 %v3131, 2147483648
  %v3144 = vor.u32 1.1754944e-38, %v3143
  %v3145 = vsel %vm3142, %v3144, %v3140
  %v3146 = vmul.f32 %v3121, %v3145
  %v3147 = vmin.f32 %v3146, 1.0
  %v3148 = vmax.f32 %v3147, -1.0
  %v3149 = vmul.f32 %v3063, %v3063
  %v3150 = vmin.f32 16.0, %v3149
  %v3151 = vmul.f32 %v3150, 2.1237322e-06
  %v3152 = vadd.f32 %v3151, 0.00028619796
  %v3153 = vmul.f32 %v3150, %v3152
  %v3154 = vadd.f32 %v3153, 0.0036580483
  %v3155 = vmul.f32 %v3150, %v3154
  %v3156 = vadd.f32 %v3155, 0.05243302
  %v3157 = vmul.f32 %v3150, %v3156
  %v3158 = vadd.f32 %v3157, 0.18741608
  %v3159 = vmul.f32 %v3150, %v3158
  %v3160 = vadd.f32 %v3159, 1.1283791
  %v3161 = vmul.f32 %v3063, %v3160
  %v3162 = vmul.f32 %v3150, 3.8918573e-05
  %v3163 = vadd.f32 %v3162, 0.001143296
  %v3164 = vmul.f32 %v3150, %v3163
  %v3165 = vadd.f32 %v3164, 0.014752088
  %v3166 = vmul.f32 %v3150, %v3165
  %v3167 = vadd.f32 %v3166, 0.112945676
  %v3168 = vmul.f32 %v3150, %v3167
  %v3169 = vadd.f32 %v3168, 0.4994258
  %v3170 = vmul.f32 %v3150, %v3169
  %v3171 = vadd.f32 %v3170, 1.0
  %v3172 = vrcp.pop %v3171
  %v3173 = vmul.f32 %v3171, %v3172
  %v3174 = vsub.f32 1.0, %v3173
  %v3175 = vmul.f32 %v3172, %v3174
  %v3176 = vadd.f32 %v3172, %v3175
  %vm3177 = vweird.f32 %v3171
  %vm3178 = vweird.f32 %v3172
  %vm3179 = vmor %vm3177, %vm3178
  %v3180 = vsel %vm3179, %v3172, %v3176
  %v3181 = vand.u32 2147483647, %v3171
  %vm3182 = vcmp.eq.f32.partialorder %v3181, 8.507059e+37
  %v3183 = vand.u32 %v3171, 2147483648
  %v3184 = vor.u32 1.1754944e-38, %v3183
  %v3185 = vsel %vm3182, %v3184, %v3180
  %v3186 = vmul.f32 %v3161, %v3185
  %v3187 = vmin.f32 %v3186, 1.0
  %v3188 = vmax.f32 %v3187, -1.0
  %v3189 = vmul.f32 %v3064, %v3064
  %v3190 = vmin.f32 16.0, %v3189
  %v3191 = vmul.f32 %v3190, 2.1237322e-06
  %v3192 = vadd.f32 %v3191, 0.00028619796
  %v3193 = vmul.f32 %v3190, %v3192
  %v3194 = vadd.f32 %v3193, 0.0036580483
  %v3195 = vmul.f32 %v3190, %v3194
  %v3196 = vadd.f32 %v3195, 0.05243302
  %v3197 = vmul.f32 %v3190, %v3196
  %v3198 = vadd.f32 %v3197, 0.18741608
  %v3199 = vmul.f32 %v3190, %v3198
  %v3200 = vadd.f32 %v3199, 1.1283791
  %v3201 = vmul.f32 %v3064, %v3200
  %v3202 = vmul.f32 %v3190, 3.8918573e-05
  %v3203 = vadd.f32 %v3202, 0.001143296
  %v3204 = vmul.f32 %v3190, %v3203
  %v3205 = vadd.f32 %v3204, 0.014752088
  %v3206 = vmul.f32 %v3190, %v3205
  %v3207 = vadd.f32 %v3206, 0.112945676
  %v3208 = vmul.f32 %v3190, %v3207
  %v3209 = vadd.f32 %v3208, 0.4994258
  %v3210 = vmul.f32 %v3190, %v3209
  %v3211 = vadd.f32 %v3210, 1.0
  %v3212 = vrcp.pop %v3211
  %v3213 = vmul.f32 %v3211, %v3212
  %v3214 = vsub.f32 1.0, %v3213
  %v3215 = vmul.f32 %v3212, %v3214
  %v3216 = vadd.f32 %v3212, %v3215
  %vm3217 = vweird.f32 %v3211
  %vm3218 = vweird.f32 %v3212
  %vm3219 = vmor %vm3217, %vm3218
  %v3220 = vsel %vm3219, %v3212, %v3216
  %v3221 = vand.u32 2147483647, %v3211
  %vm3222 = vcmp.eq.f32.partialorder %v3221, 8.507059e+37
  %v3223 = vand.u32 %v3211, 2147483648
  %v3224 = vor.u32 1.1754944e-38, %v3223
  %v3225 = vsel %vm3222, %v3224, %v3220
  %v3226 = vmul.f32 %v3201, %v3225
  %v3227 = vmin.f32 %v3226, 1.0
  %v3228 = vmax.f32 %v3227, -1.0
  %v3229 = vmul.f32 %v3065, %v3065
  %v3230 = vmin.f32 16.0, %v3229
  %v3231 = vmul.f32 %v3230, 2.1237322e-06
  %v3232 = vadd.f32 %v3231, 0.00028619796
  %v3233 = vmul.f32 %v3230, %v3232
  %v3234 = vadd.f32 %v3233, 0.0036580483
  %v3235 = vmul.f32 %v3230, %v3234
  %v3236 = vadd.f32 %v3235, 0.05243302
  %v3237 = vmul.f32 %v3230, %v3236
  %v3238 = vadd.f32 %v3237, 0.18741608
  %v3239 = vmul.f32 %v3230, %v3238
  %v3240 = vadd.f32 %v3239, 1.1283791
  %v3241 = vmul.f32 %v3065, %v3240
  %v3242 = vmul.f32 %v3230, 3.8918573e-05
  %v3243 = vadd.f32 %v3242, 0.001143296
  %v3244 = vmul.f32 %v3230, %v3243
  %v3245 = vadd.f32 %v3244, 0.014752088
  %v3246 = vmul.f32 %v3230, %v3245
  %v3247 = vadd.f32 %v3246, 0.112945676
  %v3248 = vmul.f32 %v3230, %v3247
  %v3249 = vadd.f32 %v3248, 0.4994258
  %v3250 = vmul.f32 %v3230, %v3249
  %v3251 = vadd.f32 %v3250, 1.0
  %v3252 = vrcp.pop %v3251
  %v3253 = vmul.f32 %v3251, %v3252
  %v3254 = vsub.f32 1.0, %v3253
  %v3255 = vmul.f32 %v3252, %v3254
  %v3256 = vadd.f32 %v3252, %v3255
  %vm3257 = vweird.f32 %v3251
  %vm3258 = vweird.f32 %v3252
  %vm3259 = vmor %vm3257, %vm3258
  %v3260 = vsel %vm3259, %v3252, %v3256
  %v3261 = vand.u32 2147483647, %v3251
  %vm3262 = vcmp.eq.f32.partialorder %v3261, 8.507059e+37
  %v3263 = vand.u32 %v3251, 2147483648
  %v3264 = vor.u32 1.1754944e-38, %v3263
  %v3265 = vsel %vm3262, %v3264, %v3260
  %v3266 = vmul.f32 %v3241, %v3265
  %v3267 = vmin.f32 %v3266, 1.0
  %v3268 = vmax.f32 %v3267, -1.0
  %v3269 = vmul.f32 %v3066, %v3066
  %v3270 = vmin.f32 16.0, %v3269
  %v3271 = vmul.f32 %v3270, 2.1237322e-06
  %v3272 = vadd.f32 %v3271, 0.00028619796
  %v3273 = vmul.f32 %v3270, %v3272
  %v3274 = vadd.f32 %v3273, 0.0036580483
  %v3275 = vmul.f32 %v3270, %v3274
  %v3276 = vadd.f32 %v3275, 0.05243302
  %v3277 = vmul.f32 %v3270, %v3276
  %v3278 = vadd.f32 %v3277, 0.18741608
  %v3279 = vmul.f32 %v3270, %v3278
  %v3280 = vadd.f32 %v3279, 1.1283791
  %v3281 = vmul.f32 %v3066, %v3280
  %v3282 = vmul.f32 %v3270, 3.8918573e-05
  %v3283 = vadd.f32 %v3282, 0.001143296
  %v3284 = vmul.f32 %v3270, %v3283
  %v3285 = vadd.f32 %v3284, 0.014752088
  %v3286 = vmul.f32 %v3270, %v3285
  %v3287 = vadd.f32 %v3286, 0.112945676
  %v3288 = vmul.f32 %v3270, %v3287
  %v3289 = vadd.f32 %v3288, 0.4994258
  %v3290 = vmul.f32 %v3270, %v3289
  %v3291 = vadd.f32 %v3290, 1.0
  %v3292 = vrcp.pop %v3291
  %v3293 = vmul.f32 %v3291, %v3292
  %v3294 = vsub.f32 1.0, %v3293
  %v3295 = vmul.f32 %v3292, %v3294
  %v3296 = vadd.f32 %v3292, %v3295
  %vm3297 = vweird.f32 %v3291
  %vm3298 = vweird.f32 %v3292
  %vm3299 = vmor %vm3297, %vm3298
  %v3300 = vsel %vm3299, %v3292, %v3296
  %v3301 = vand.u32 2147483647, %v3291
  %vm3302 = vcmp.eq.f32.partialorder %v3301, 8.507059e+37
  %v3303 = vand.u32 %v3291, 2147483648
  %v3304 = vor.u32 1.1754944e-38, %v3303
  %v3305 = vsel %vm3302, %v3304, %v3300
  %v3306 = vmul.f32 %v3281, %v3305
  %v3307 = vmin.f32 %v3306, 1.0
  %v3308 = vmax.f32 %v3307, -1.0
  %v3309 = vmul.f32 %v3067, %v3067
  %v3310 = vmin.f32 16.0, %v3309
  %v3311 = vmul.f32 %v3310, 2.1237322e-06
  %v3312 = vadd.f32 %v3311, 0.00028619796
  %v3313 = vmul.f32 %v3310, %v3312
  %v3314 = vadd.f32 %v3313, 0.0036580483
  %v3315 = vmul.f32 %v3310, %v3314
  %v3316 = vadd.f32 %v3315, 0.05243302
  %v3317 = vmul.f32 %v3310, %v3316
  %v3318 = vadd.f32 %v3317, 0.18741608
  %v3319 = vmul.f32 %v3310, %v3318
  %v3320 = vadd.f32 %v3319, 1.1283791
  %v3321 = vmul.f32 %v3067, %v3320
  %v3322 = vmul.f32 %v3310, 3.8918573e-05
  %v3323 = vadd.f32 %v3322, 0.001143296
  %v3324 = vmul.f32 %v3310, %v3323
  %v3325 = vadd.f32 %v3324, 0.014752088
  %v3326 = vmul.f32 %v3310, %v3325
  %v3327 = vadd.f32 %v3326, 0.112945676
  %v3328 = vmul.f32 %v3310, %v3327
  %v3329 = vadd.f32 %v3328, 0.4994258
  %v3330 = vmul.f32 %v3310, %v3329
  %v3331 = vadd.f32 %v3330, 1.0
  %v3332 = vrcp.pop %v3331
  %v3333 = vmul.f32 %v3331, %v3332
  %v3334 = vsub.f32 1.0, %v3333
  %v3335 = vmul.f32 %v3332, %v3334
  %v3336 = vadd.f32 %v3332, %v3335
  %vm3337 = vweird.f32 %v3331
  %vm3338 = vweird.f32 %v3332
  %vm3339 = vmor %vm3337, %vm3338
  %v3340 = vsel %vm3339, %v3332, %v3336
  %v3341 = vand.u32 2147483647, %v3331
  %vm3342 = vcmp.eq.f32.partialorder %v3341, 8.507059e+37
  %v3343 = vand.u32 %v3331, 2147483648
  %v3344 = vor.u32 1.1754944e-38, %v3343
  %v3345 = vsel %vm3342, %v3344, %v3340
  %v3346 = vmul.f32 %v3321, %v3345
  %v3347 = vmin.f32 %v3346, 1.0
  %v3348 = vmax.f32 %v3347, -1.0
  %v3349 = vmul.f32 %v3068, %v3068
  %v3350 = vmin.f32 16.0, %v3349
  %v3351 = vmul.f32 %v3350, 2.1237322e-06
  %v3352 = vadd.f32 %v3351, 0.00028619796
  %v3353 = vmul.f32 %v3350, %v3352
  %v3354 = vadd.f32 %v3353, 0.0036580483
  %v3355 = vmul.f32 %v3350, %v3354
  %v3356 = vadd.f32 %v3355, 0.05243302
  %v3357 = vmul.f32 %v3350, %v3356
  %v3358 = vadd.f32 %v3357, 0.18741608
  %v3359 = vmul.f32 %v3350, %v3358
  %v3360 = vadd.f32 %v3359, 1.1283791
  %v3361 = vmul.f32 %v3068, %v3360
  %v3362 = vmul.f32 %v3350, 3.8918573e-05
  %v3363 = vadd.f32 %v3362, 0.001143296
  %v3364 = vmul.f32 %v3350, %v3363
  %v3365 = vadd.f32 %v3364, 0.014752088
  %v3366 = vmul.f32 %v3350, %v3365
  %v3367 = vadd.f32 %v3366, 0.112945676
  %v3368 = vmul.f32 %v3350, %v3367
  %v3369 = vadd.f32 %v3368, 0.4994258
  %v3370 = vmul.f32 %v3350, %v3369
  %v3371 = vadd.f32 %v3370, 1.0
  %v3372 = vrcp.pop %v3371
  %v3373 = vmul.f32 %v3371, %v3372
  %v3374 = vsub.f32 1.0, %v3373
  %v3375 = vmul.f32 %v3372, %v3374
  %v3376 = vadd.f32 %v3372, %v3375
  %vm3377 = vweird.f32 %v3371
  %vm3378 = vweird.f32 %v3372
  %vm3379 = vmor %vm3377, %vm3378
  %v3380 = vsel %vm3379, %v3372, %v3376
  %v3381 = vand.u32 2147483647, %v3371
  %vm3382 = vcmp.eq.f32.partialorder %v3381, 8.507059e+37
  %v3383 = vand.u32 %v3371, 2147483648
  %v3384 = vor.u32 1.1754944e-38, %v3383
  %v3385 = vsel %vm3382, %v3384, %v3380
  %v3386 = vmul.f32 %v3361, %v3385
  %v3387 = vmin.f32 %v3386, 1.0
  %v3388 = vmax.f32 %v3387, -1.0
  %v3389 = vadd.f32 %v3108, 1.0
  %v3390 = vadd.f32 %v3148, 1.0
  %v3391 = vadd.f32 %v3188, 1.0
  %v3392 = vadd.f32 %v3228, 1.0
  %v3393 = vadd.f32 %v3268, 1.0
  %v3394 = vadd.f32 %v3308, 1.0
  %v3395 = vadd.f32 %v3348, 1.0
  %v3396 = vadd.f32 %v3388, 1.0
  %v3397 = vmul.f32 %v3053, %v3389
  %v3398 = vmul.f32 %v3054, %v3390
  %v3399 = vmul.f32 %v3055, %v3391
  %v3400 = vmul.f32 %v3056, %v3392
  %v3401 = vmul.f32 %v3057, %v3393
  %v3402 = vmul.f32 %v3058, %v3394
  %v3403 = vmul.f32 %v3059, %v3395
  %v3404 = vmul.f32 %v3060, %v3396
  %s3405 = scalar_lea.vmem %s8, 64
  %3406 = vst [vmem:[%s3405] sm:$0xff] %v3397
  %3407 = vst [vmem:[%s3405 + $0x8] sm:$0xff] %v3398
  %3408 = vst [vmem:[%s3405 + $0x10] sm:$0xff] %v3399
  %3409 = vst [vmem:[%s3405 + $0x18] sm:$0xff] %v3400
  %3410 = vst [vmem:[%s3405 + $0x20] sm:$0xff] %v3401
  %3411 = vst [vmem:[%s3405 + $0x28] sm:$0xff] %v3402
  %3412 = vst [vmem:[%s3405 + $0x30] sm:$0xff] %v3403
  %3413 = vst [vmem:[%s3405 + $0x38] sm:$0xff] %v3404
  // Predicated region
  $region34: #{pfm_apply.1} parent=0 // pred_check
    _
  $region35: #{pfm_apply.1} parent=0 // pred_check_branch
    %3415 = sbr.rel (0) target = $region37
  $region36: #{pfm_apply.1} parent=0 // pred_region
    _
  $region37: #{pfm_apply.1} parent=0 // pred_fallthru
    _
  // Predicated region
  $region38: #{pfm_apply.1} parent=0 // pred_check
    _
  $region39: #{pfm_apply.1} parent=0 // pred_check_branch
    %3417 = sbr.rel (0) target = $region41
  $region40: #{pfm_apply.1} parent=0 // pred_region
    _
  $region41: #{pfm_apply.1} parent=0 // pred_fallthru
    _

</llo_original>
